<compile_context>
chip_gen: v7x
topology: tpu7x:2x2x1
jax: 0.10.0
libtpu: 0.0.40
codegen_flags: <defaults>
</compile_context>

<pallas_src>
import jax
import jax.numpy as jnp
from jax import lax
from jax.experimental import pallas as pl
from jax.experimental.pallas import tpu as pltpu


OUT_LANES = 128  # pad the 10-wide logits to a full 128-lane register


# ----------------------------------------------------------------------------
# Fused 3-layer MLP kernel (one M tile per grid step, all weights resident)
# ----------------------------------------------------------------------------
def _mlp_kernel(x_ref, w1_ref, b1_ref, w2_ref, b2_ref, w3_ref, b3_ref, o_ref):
    """o = relu(relu(x@w1+b1)@w2+b2)@w3 + b3  for one [tm, Din] tile."""
    x = x_ref[...].astype(w1_ref.dtype)                            # f32 -> bf16 in-kernel
    h1 = jnp.dot(x, w1_ref[...], preferred_element_type=jnp.float32)
    h1 = jnp.maximum(h1 + b1_ref[...], 0.0)                        # f32 [tm, 512]
    h2 = jnp.dot(h1.astype(w2_ref.dtype), w2_ref[...],
                 preferred_element_type=jnp.float32)
    h2 = jnp.maximum(h2 + b2_ref[...], 0.0)                        # f32 [tm, 512]
    o = jnp.dot(h2.astype(w3_ref.dtype), w3_ref[...],
                preferred_element_type=jnp.float32)
    o_ref[...] = (o + b3_ref[...]).astype(o_ref.dtype)             # bf16 [tm, 128]


def _round_up(v, m):
    return (v + m - 1) // m * m


# ----------------------------------------------------------------------------
# One-time parameter preparation (out of the per-call path)
# ----------------------------------------------------------------------------
def prepare_params(params, *, compute_dtype=jnp.bfloat16, out_lanes=OUT_LANES):
    """Cast weights to bf16, biases to f32 (1,N), pad final layer to 128 lanes."""
    w3, b3 = params["w3"], params["b3"]
    pad = out_lanes - w3.shape[1]
    assert pad >= 0
    return {
        "w1": params["w1"].astype(compute_dtype),
        "b1": params["b1"].reshape(1, -1).astype(jnp.float32),
        "w2": params["w2"].astype(compute_dtype),
        "b2": params["b2"].reshape(1, -1).astype(jnp.float32),
        "w3": jnp.pad(w3, ((0, 0), (0, pad))).astype(compute_dtype),
        "b3": jnp.pad(b3, ((0, pad),)).reshape(1, -1).astype(jnp.float32),
    }


# ----------------------------------------------------------------------------
# Forward pass
# ----------------------------------------------------------------------------
def mcmc_mlp_forward(x, prep, *, d_out=10, tm=None, out_dtype=jnp.bfloat16):
    """Forward pass of mcmcMLP.

    x: f32 array with leading batch dim (e.g. NCHW); flattened row-major like
       torch's x.view(len(x), -1).  prep: output of prepare_params().
    """
    B = x.shape[0]
    x2d = x.reshape(B, -1)                     # free reshape; no cast, no pad
    d_in = x2d.shape[1]

    w1, b1 = prep["w1"], prep["b1"]
    w2, b2 = prep["w2"], prep["b2"]
    w3, b3 = prep["w3"], prep["b3"]
    d_h1, d_h2, n_lanes = w1.shape[1], w2.shape[1], w3.shape[1]
    assert d_in == w1.shape[0]
    assert d_out <= n_lanes

    # M tile: up to 512 rows (amortizes per-grid-step overhead, stays under
    # v5e's 16 MiB default scoped-VMEM limit with f32 x ingest); for large B
    # cap it so grid_m >= 2 and both v7x TensorCores get work.
    if tm is None:
        if B <= 512:
            tm = _round_up(B, 8)
        else:
            tm = min(512, _round_up(pl.cdiv(B, 2), 8))
    tm = _round_up(max(tm, 8), 8)
    grid_m = pl.cdiv(B, tm)                    # ragged last block handled by Pallas

    rep = lambda i: (0, 0)   # weights/biases: same block every step (DMA'd once)

    out = pl.pallas_call(
        _mlp_kernel,
        out_shape=jax.ShapeDtypeStruct((B, n_lanes), out_dtype),
        grid=(grid_m,),
        in_specs=[
            pl.BlockSpec((tm, d_in), lambda i: (i, 0)),    # x tile (f32)
            pl.BlockSpec((d_in, d_h1), rep),               # w1 (bf16)
            pl.BlockSpec((1, d_h1), rep),                  # b1 (f32)
            pl.BlockSpec((d_h1, d_h2), rep),               # w2 (bf16)
            pl.BlockSpec((1, d_h2), rep),                  # b2 (f32)
            pl.BlockSpec((d_h2, n_lanes), rep),            # w3 (bf16, padded)
            pl.BlockSpec((1, n_lanes), rep),               # b3 (f32, padded)
        ],
        out_specs=pl.BlockSpec((tm, n_lanes), lambda i: (i, 0)),
        compiler_params=pltpu.CompilerParams(
            dimension_semantics=("parallel",),             # v7x: shard M over 2 TCs
        ),
    )(x2d, w1, b1, w2, b2, w3, b3)

    return out[:, :d_out]


# ----------------------------------------------------------------------------
# Deterministic parameter init (shapes from mcmcMLP.__init__, in_dims=1)
# Weights stored as [in_features, out_features] (PyTorch weight.T).
# ----------------------------------------------------------------------------
def init_params(key, in_dims=1, out_dims=10):
    d_in = 32 * 32 * in_dims
    ks = jax.random.split(key, 6)

    def rnd(k, shape, fan_in):
        return jax.random.normal(k, shape, jnp.float32) / jnp.sqrt(float(fan_in))

    return {
        "w1": rnd(ks[0], (d_in, 512), d_in),
        "b1": rnd(ks[1], (512,), d_in),
        "w2": rnd(ks[2], (512, 512), 512),
        "b2": rnd(ks[3], (512,), 512),
        "w3": rnd(ks[4], (512, out_dims), 512),
        "b3": rnd(ks[5], (out_dims,), 512),
    }


# ----------------------------------------------------------------------------
# Pure-JAX f32 reference (numerical sanity check)
# ----------------------------------------------------------------------------
def reference_forward(x, params):
    xf = x.reshape(x.shape[0], -1)
    h1 = jax.nn.relu(
        jnp.dot(xf, params["w1"], precision=lax.Precision.HIGHEST) + params["b1"])
    h2 = jax.nn.relu(
        jnp.dot(h1, params["w2"], precision=lax.Precision.HIGHEST) + params["b2"])
    return jnp.dot(h2, params["w3"], precision=lax.Precision.HIGHEST) + params["b3"]


if __name__ == "__main__":
    key = jax.random.PRNGKey(0)
    pkey, xkey = jax.random.split(key)

    params = init_params(pkey, in_dims=1, out_dims=10)
    prep = prepare_params(params)   # one-time bf16 cast + lane padding

    # mcmcMLP expects 32*32*in_dims flattened features -> NCHW input (B,1,32,32).
    # B=24 with tm=16 -> grid=(2,) including a RAGGED last block: exercises the
    # pipelined "parallel" M axis and the pad-free boundary handling.
    x = jax.random.normal(xkey, (24, 1, 32, 32), jnp.float32)

    fwd = jax.jit(lambda xx, pp: mcmc_mlp_forward(xx, pp, tm=16))
    out = jax.block_until_ready(fwd(x, prep))
    assert out.shape == (24, 10) and out.dtype == jnp.bfloat16

    ref = reference_forward(x, params)
    # bf16 weights/activations + f32 MXU accumulation + bf16 logit store vs an
    # f32 HIGHEST reference: ~1e-2 expected (intentional approximation).
    if not jnp.allclose(out.astype(jnp.float32), ref, rtol=5e-2, atol=5e-2):
        raise AssertionError("Pallas output does not match JAX reference")

    # TODO(synk): mcmcArch.log_prior() (MCMC prior term) is not part of forward(); not implemented.
    print("KERNEL_OK")
</pallas_src>

<mosaic_0001>
module attributes {stable_mosaic.version = 11 : i64} {
  func.func @_mlp_kernel(%arg0: i32, %arg1: memref<16x1024xf32, #tpu.memory_space<vmem>>, %arg2: memref<1024x512xbf16, #tpu.memory_space<vmem>>, %arg3: memref<1x512xf32, #tpu.memory_space<vmem>>, %arg4: memref<512x512xbf16, #tpu.memory_space<vmem>>, %arg5: memref<1x512xf32, #tpu.memory_space<vmem>>, %arg6: memref<512x128xbf16, #tpu.memory_space<vmem>>, %arg7: memref<1x128xf32, #tpu.memory_space<vmem>>, %arg8: memref<16x128xbf16, #tpu.memory_space<vmem>>) attributes {dimension_semantics = [#tpu.dimension_semantics<parallel>], iteration_bounds = array<i64: 2>, scalar_prefetch = 0 : i64, scratch_operands = 0 : i64, tpu.core_type = #tpu.core_type<tc>, window_params = [{transform_indices = @transform_0, window_bounds = array<i64: 16, 1024>}, {pipeline_mode = #tpu.pipeline_mode<synchronous>, transform_indices = @transform_1, window_bounds = array<i64: 1024, 512>}, {pipeline_mode = #tpu.pipeline_mode<synchronous>, transform_indices = @transform_2, window_bounds = array<i64: 1, 512>}, {pipeline_mode = #tpu.pipeline_mode<synchronous>, transform_indices = @transform_3, window_bounds = array<i64: 512, 512>}, {pipeline_mode = #tpu.pipeline_mode<synchronous>, transform_indices = @transform_4, window_bounds = array<i64: 1, 512>}, {pipeline_mode = #tpu.pipeline_mode<synchronous>, transform_indices = @transform_5, window_bounds = array<i64: 512, 128>}, {pipeline_mode = #tpu.pipeline_mode<synchronous>, transform_indices = @transform_6, window_bounds = array<i64: 1, 128>}, {transform_indices = @transform_7, window_bounds = array<i64: 16, 128>}]} {
    %c0 = arith.constant 0 : index
    %c0_0 = arith.constant 0 : index
    %0 = vector.load %arg1[%c0, %c0_0] : memref<16x1024xf32, #tpu.memory_space<vmem>>, vector<16x1024xf32>
    %1 = arith.truncf %0 : vector<16x1024xf32> to vector<16x1024xbf16>
    %c0_1 = arith.constant 0 : index
    %c0_2 = arith.constant 0 : index
    %2 = vector.load %arg2[%c0_1, %c0_2] : memref<1024x512xbf16, #tpu.memory_space<vmem>>, vector<1024x512xbf16>
    %cst = arith.constant dense<0.000000e+00> : vector<16x512xf32>
    %3 = tpu.matmul %1, %2, %cst {dimension_numbers = #tpu.dot_dimension_numbers<[1], [0], [0], [1], [0, 0, 1, 1], [], []>} : vector<16x1024xbf16>, vector<1024x512xbf16>, vector<16x512xf32> -> vector<16x512xf32>
    %c0_3 = arith.constant 0 : index
    %c0_4 = arith.constant 0 : index
    %4 = vector.load %arg3[%c0_3, %c0_4] : memref<1x512xf32, #tpu.memory_space<vmem>>, vector<1x512xf32>
    %5 = vector.broadcast %4 : vector<1x512xf32> to vector<16x512xf32>
    %6 = arith.addf %3, %5 : vector<16x512xf32>
    %cst_5 = arith.constant 0.000000e+00 : f32
    %7 = vector.broadcast %cst_5 : f32 to vector<16x512xf32>
    %8 = arith.maximumf %6, %7 : vector<16x512xf32>
    %9 = arith.truncf %8 : vector<16x512xf32> to vector<16x512xbf16>
    %c0_6 = arith.constant 0 : index
    %c0_7 = arith.constant 0 : index
    %10 = vector.load %arg4[%c0_6, %c0_7] : memref<512x512xbf16, #tpu.memory_space<vmem>>, vector<512x512xbf16>
    %cst_8 = arith.constant dense<0.000000e+00> : vector<16x512xf32>
    %11 = tpu.matmul %9, %10, %cst_8 {dimension_numbers = #tpu.dot_dimension_numbers<[1], [0], [0], [1], [0, 0, 1, 1], [], []>} : vector<16x512xbf16>, vector<512x512xbf16>, vector<16x512xf32> -> vector<16x512xf32>
    %c0_9 = arith.constant 0 : index
    %c0_10 = arith.constant 0 : index
    %12 = vector.load %arg5[%c0_9, %c0_10] : memref<1x512xf32, #tpu.memory_space<vmem>>, vector<1x512xf32>
    %13 = vector.broadcast %12 : vector<1x512xf32> to vector<16x512xf32>
    %14 = arith.addf %11, %13 : vector<16x512xf32>
    %cst_11 = arith.constant 0.000000e+00 : f32
    %15 = vector.broadcast %cst_11 : f32 to vector<16x512xf32>
    %16 = arith.maximumf %14, %15 : vector<16x512xf32>
    %17 = arith.truncf %16 : vector<16x512xf32> to vector<16x512xbf16>
    %c0_12 = arith.constant 0 : index
    %c0_13 = arith.constant 0 : index
    %18 = vector.load %arg6[%c0_12, %c0_13] : memref<512x128xbf16, #tpu.memory_space<vmem>>, vector<512x128xbf16>
    %cst_14 = arith.constant dense<0.000000e+00> : vector<16x128xf32>
    %19 = tpu.matmul %17, %18, %cst_14 {dimension_numbers = #tpu.dot_dimension_numbers<[1], [0], [0], [1], [0, 0, 1, 1], [], []>} : vector<16x512xbf16>, vector<512x128xbf16>, vector<16x128xf32> -> vector<16x128xf32>
    %c0_15 = arith.constant 0 : index
    %c0_16 = arith.constant 0 : index
    %20 = vector.load %arg7[%c0_15, %c0_16] : memref<1x128xf32, #tpu.memory_space<vmem>>, vector<1x128xf32>
    %21 = vector.broadcast %20 : vector<1x128xf32> to vector<16x128xf32>
    %22 = arith.addf %19, %21 : vector<16x128xf32>
    %23 = arith.truncf %22 : vector<16x128xf32> to vector<16x128xbf16>
    %c0_17 = arith.constant 0 : index
    %c0_18 = arith.constant 0 : index
    %24 = vector.load %arg8[%c0_17, %c0_18] : memref<16x128xbf16, #tpu.memory_space<vmem>>, vector<16x128xbf16>
    tpu.vector_store %arg8[%c0_17, %c0_18], %23 {strides = array<i32>} : memref<16x128xbf16, #tpu.memory_space<vmem>>, vector<16x128xbf16>,
    return
  }
  func.func @transform_0(%arg0: i32) -> (i32, i32) {
    %c0_i32 = arith.constant 0 : i32
    %c0_i32_0 = arith.constant 0 : i32
    return %arg0, %c0_i32 : i32, i32
  }
  func.func @transform_1(%arg0: i32) -> (i32, i32) {
    %c0_i32 = arith.constant 0 : i32
    %c0_i32_0 = arith.constant 0 : i32
    %c0_i32_1 = arith.constant 0 : i32
    return %c0_i32, %c0_i32_0 : i32, i32
  }
  func.func @transform_2(%arg0: i32) -> (i32, i32) {
    %c0_i32 = arith.constant 0 : i32
    %c0_i32_0 = arith.constant 0 : i32
    %c0_i32_1 = arith.constant 0 : i32
    return %c0_i32, %c0_i32_0 : i32, i32
  }
  func.func @transform_3(%arg0: i32) -> (i32, i32) {
    %c0_i32 = arith.constant 0 : i32
    %c0_i32_0 = arith.constant 0 : i32
    %c0_i32_1 = arith.constant 0 : i32
    return %c0_i32, %c0_i32_0 : i32, i32
  }
  func.func @transform_4(%arg0: i32) -> (i32, i32) {
    %c0_i32 = arith.constant 0 : i32
    %c0_i32_0 = arith.constant 0 : i32
    %c0_i32_1 = arith.constant 0 : i32
    return %c0_i32, %c0_i32_0 : i32, i32
  }
  func.func @transform_5(%arg0: i32) -> (i32, i32) {
    %c0_i32 = arith.constant 0 : i32
    %c0_i32_0 = arith.constant 0 : i32
    %c0_i32_1 = arith.constant 0 : i32
    return %c0_i32, %c0_i32_0 : i32, i32
  }
  func.func @transform_6(%arg0: i32) -> (i32, i32) {
    %c0_i32 = arith.constant 0 : i32
    %c0_i32_0 = arith.constant 0 : i32
    %c0_i32_1 = arith.constant 0 : i32
    return %c0_i32, %c0_i32_0 : i32, i32
  }
  func.func @transform_7(%arg0: i32) -> (i32, i32) {
    %c0_i32 = arith.constant 0 : i32
    %c0_i32_0 = arith.constant 0 : i32
    return %arg0, %c0_i32 : i32, i32
  }
}

</mosaic_0001>

<llo_original>
// kernel: _lambda_.1
$region0: #{_lambda_.1}
  #allocation0 [shape = 'u32[]', space=smem, size = 0x4, offset = 0x4, fixed_abs, tag = 'smem constant byte address 0x4 - core index']
  #allocation1 [shape = 'u32[144,128]{1,0:T(1,128)}', space=vmem, size = 0x12000, scoped, tag = 'internal scratch']
  %s0 = inlined_call_operand.vmem [shape: f32[24,1024], index: 0, kind: input, shape index: {}]
  %s1 = inlined_call_operand.hbm [shape: bf16[1024,512], index: 1, kind: input, shape index: {}]
  %s2 = inlined_call_operand.vmem [shape: f32[1,512], index: 2, kind: input, shape index: {}]
  %s3 = inlined_call_operand.hbm [shape: bf16[512,512], index: 3, kind: input, shape index: {}]
  %s4 = inlined_call_operand.vmem [shape: f32[1,512], index: 4, kind: input, shape index: {}]
  %s5 = inlined_call_operand.vmem [shape: bf16[512,128], index: 5, kind: input, shape index: {}]
  %s6 = inlined_call_operand.vmem [shape: f32[1,128], index: 6, kind: input, shape index: {}]
  %s7 = inlined_call_operand.vmem [shape: bf16[24,128], index: 7, kind: output, shape index: {}]
  %s8 = sld [smem:[#allocation0]]
  $region113: #{_lambda_.1} parent=0
    _
  %s10 = ssub.s32 1, %s8
  %s11 = scalar_select 0, %s10, %s8
  $region1: #{_lambda_.1} parent=0
    #allocation2 [shape = 'u8[1048576]{0}', space=vmem, size = 0x100000, scoped, tag = 'input window, operand 1, single buffered']
    #allocation3 [shape = 's32[2]{0}', space=sflag, size = 0x8, scoped, tag = 'scoped memory for _lambda_.1']
    #allocation4 [shape = 'u8[524288]{0}', space=vmem, size = 0x80000, scoped, tag = 'input window, operand 3, single buffered']
    #allocation5 [shape = 's32[1]{0}', space=sflag, size = 0x4, scoped, tag = 'scoped memory for _lambda_.1']
    #allocation6 [shape = 'u8[8192]{0}', space=vmem, size = 0x2000, scoped, tag = 'output window, operand 0']
    %12 = vsyncpa [#allocation3], 0
    %13 = vsyncpa [#allocation5], 0
    loop: start=0, step=1, limit=4
    $region2: #{_lambda_.1} parent=1 // loop_pre_header
      _
    $region3: #{_lambda_.1} parent=1 // loop_header
      %s15 = sphi 0, %s19
      %p16 = scmp.ge.s32.totalorder %s15, 4
      %s25 = sphi 0, %s27
      %s28 = sphi 0, %s25
      %s29 = sphi 0, %s28
      %s45 = sphi 0, %s29
      %s49 = sphi 0, %s49
      %s51 = sphi 0, %s49
      %s52 = sphi 0, %s51
      %s66 = sphi 0, %s52
      %s70 = sphi 0, %s70
      %s72 = sphi 0, %s70
      %s73 = sphi 0, %s72
      %s87 = sphi 0, %s73
      %s91 = sphi 0, %s91
      %s93 = sphi 0, %s91
      %s94 = sphi 0, %s93
      %s108 = sphi 0, %s94
      %s112 = sphi 0, %s112
      %s114 = sphi 0, %s112
      %s115 = sphi 0, %s114
      %s129 = sphi 0, %s115
      %s133 = sphi 0, %s133
      %s135 = sphi 0, %s133
      %s136 = sphi 0, %s135
      %s150 = sphi 0, %s136
      %s154 = sphi 0, %s154
      %s156 = sphi 0, %s154
      %s157 = sphi 0, %s156
      %s171 = sphi 0, %s157
      %s177 = sphi 0, %s179
      %s180 = sphi 0, %s177
      %s181 = sphi 0, %s180
      %s197 = sphi 0, %s181
    $region4: #{_lambda_.1} parent=1 // loop_header_branch
      %18 = sbr.rel (%p16) target = $region8
    $region5: #{_lambda_.1} parent=1 // loop_body
      %s20 = ssub.s32 %s15, 1
      %s21 = ssub.s32 %s15, 2
      %s22 = sadd.s32 %s15, 1
      %s23 = ssub.s32 %s15, %s22
      %p24 = scmp.eq.s32.totalorder %s23, 0
      %s26 = sadd.s32 %s25, 1
      %s27 = scalar_select %p24, %s25, %s26
      %p30 = pneg %p24
      %p31 = scmp.eq.s32.totalorder %s15, 1
      %p32 = por %p30, %p31
      %p33 = scmp.ne.s32.totalorder %s25, %s28
      %p34 = scmp.eq.s32.totalorder %s15, 0
      %p35 = por %p33, %p34
      %p36 = scmp.ne.s32.totalorder %s25, %s28
      %p37 = scmp.eq.s32.totalorder %s20, 1
      %p38 = por %p36, %p37
      %p39 = scmp.ne.s32.totalorder %s28, %s29
      %p40 = scmp.eq.s32.totalorder %s20, 0
      %p41 = por %p39, %p40
      %p42 = scmp.ne.s32.totalorder %s28, %s29
      %p43 = scmp.eq.s32.totalorder %s21, 1
      %p44 = por %p42, %p43
      %p46 = scmp.ne.s32.totalorder %s29, %s45
      %p47 = scmp.eq.s32.totalorder %s21, 0
      %p48 = por %p46, %p47
      %s50 = sadd.s32 %s49, 1
      %p53 = scmp.eq.s32.totalorder %s15, 1
      %p54 = scmp.ne.s32.totalorder %s49, %s51
      %p55 = scmp.eq.s32.totalorder %s15, 0
      %p56 = por %p54, %p55
      %p57 = scmp.ne.s32.totalorder %s49, %s51
      %p58 = scmp.eq.s32.totalorder %s20, 1
      %p59 = por %p57, %p58
      %p60 = scmp.ne.s32.totalorder %s51, %s52
      %p61 = scmp.eq.s32.totalorder %s20, 0
      %p62 = por %p60, %p61
      %p63 = scmp.ne.s32.totalorder %s51, %s52
      %p64 = scmp.eq.s32.totalorder %s21, 1
      %p65 = por %p63, %p64
      %p67 = scmp.ne.s32.totalorder %s52, %s66
      %p68 = scmp.eq.s32.totalorder %s21, 0
      %p69 = por %p67, %p68
      %s71 = sadd.s32 %s70, 1
      %p74 = scmp.eq.s32.totalorder %s15, 1
      %p75 = scmp.ne.s32.totalorder %s70, %s72
      %p76 = scmp.eq.s32.totalorder %s15, 0
      %p77 = por %p75, %p76
      %p78 = scmp.ne.s32.totalorder %s70, %s72
      %p79 = scmp.eq.s32.totalorder %s20, 1
      %p80 = por %p78, %p79
      %p81 = scmp.ne.s32.totalorder %s72, %s73
      %p82 = scmp.eq.s32.totalorder %s20, 0
      %p83 = por %p81, %p82
      %p84 = scmp.ne.s32.totalorder %s72, %s73
      %p85 = scmp.eq.s32.totalorder %s21, 1
      %p86 = por %p84, %p85
      %p88 = scmp.ne.s32.totalorder %s73, %s87
      %p89 = scmp.eq.s32.totalorder %s21, 0
      %p90 = por %p88, %p89
      %s92 = sadd.s32 %s91, 1
      %p95 = scmp.eq.s32.totalorder %s15, 1
      %p96 = scmp.ne.s32.totalorder %s91, %s93
      %p97 = scmp.eq.s32.totalorder %s15, 0
      %p98 = por %p96, %p97
      %p99 = scmp.ne.s32.totalorder %s91, %s93
      %p100 = scmp.eq.s32.totalorder %s20, 1
      %p101 = por %p99, %p100
      %p102 = scmp.ne.s32.totalorder %s93, %s94
      %p103 = scmp.eq.s32.totalorder %s20, 0
      %p104 = por %p102, %p103
      %p105 = scmp.ne.s32.totalorder %s93, %s94
      %p106 = scmp.eq.s32.totalorder %s21, 1
      %p107 = por %p105, %p106
      %p109 = scmp.ne.s32.totalorder %s94, %s108
      %p110 = scmp.eq.s32.totalorder %s21, 0
      %p111 = por %p109, %p110
      %s113 = sadd.s32 %s112, 1
      %p116 = scmp.eq.s32.totalorder %s15, 1
      %p117 = scmp.ne.s32.totalorder %s112, %s114
      %p118 = scmp.eq.s32.totalorder %s15, 0
      %p119 = por %p117, %p118
      %p120 = scmp.ne.s32.totalorder %s112, %s114
      %p121 = scmp.eq.s32.totalorder %s20, 1
      %p122 = por %p120, %p121
      %p123 = scmp.ne.s32.totalorder %s114, %s115
      %p124 = scmp.eq.s32.totalorder %s20, 0
      %p125 = por %p123, %p124
      %p126 = scmp.ne.s32.totalorder %s114, %s115
      %p127 = scmp.eq.s32.totalorder %s21, 1
      %p128 = por %p126, %p127
      %p130 = scmp.ne.s32.totalorder %s115, %s129
      %p131 = scmp.eq.s32.totalorder %s21, 0
      %p132 = por %p130, %p131
      %s134 = sadd.s32 %s133, 1
      %p137 = scmp.eq.s32.totalorder %s15, 1
      %p138 = scmp.ne.s32.totalorder %s133, %s135
      %p139 = scmp.eq.s32.totalorder %s15, 0
      %p140 = por %p138, %p139
      %p141 = scmp.ne.s32.totalorder %s133, %s135
      %p142 = scmp.eq.s32.totalorder %s20, 1
      %p143 = por %p141, %p142
      %p144 = scmp.ne.s32.totalorder %s135, %s136
      %p145 = scmp.eq.s32.totalorder %s20, 0
      %p146 = por %p144, %p145
      %p147 = scmp.ne.s32.totalorder %s135, %s136
      %p148 = scmp.eq.s32.totalorder %s21, 1
      %p149 = por %p147, %p148
      %p151 = scmp.ne.s32.totalorder %s136, %s150
      %p152 = scmp.eq.s32.totalorder %s21, 0
      %p153 = por %p151, %p152
      %s155 = sadd.s32 %s154, 1
      %p158 = scmp.eq.s32.totalorder %s15, 1
      %p159 = scmp.ne.s32.totalorder %s154, %s156
      %p160 = scmp.eq.s32.totalorder %s15, 0
      %p161 = por %p159, %p160
      %p162 = scmp.ne.s32.totalorder %s154, %s156
      %p163 = scmp.eq.s32.totalorder %s20, 1
      %p164 = por %p162, %p163
      %p165 = scmp.ne.s32.totalorder %s156, %s157
      %p166 = scmp.eq.s32.totalorder %s20, 0
      %p167 = por %p165, %p166
      %p168 = scmp.ne.s32.totalorder %s156, %s157
      %p169 = scmp.eq.s32.totalorder %s21, 1
      %p170 = por %p168, %p169
      %p172 = scmp.ne.s32.totalorder %s157, %s171
      %p173 = scmp.eq.s32.totalorder %s21, 0
      %p174 = por %p172, %p173
      %s175 = ssub.s32 %s15, %s22
      %p176 = scmp.eq.s32.totalorder %s175, 0
      %s178 = sadd.s32 %s177, 1
      %s179 = scalar_select %p176, %s177, %s178
      %p182 = pneg %p176
      %p183 = scmp.eq.s32.totalorder %s15, 1
      %p184 = por %p182, %p183
      %p185 = scmp.ne.s32.totalorder %s177, %s180
      %p186 = scmp.eq.s32.totalorder %s15, 0
      %p187 = por %p185, %p186
      %p188 = scmp.ne.s32.totalorder %s177, %s180
      %p189 = scmp.eq.s32.totalorder %s20, 1
      %p190 = por %p188, %p189
      %p191 = scmp.ne.s32.totalorder %s180, %s181
      %p192 = scmp.eq.s32.totalorder %s20, 0
      %p193 = por %p191, %p192
      %p194 = scmp.ne.s32.totalorder %s180, %s181
      %p195 = scmp.eq.s32.totalorder %s21, 1
      %p196 = por %p194, %p195
      %p198 = scmp.ne.s32.totalorder %s181, %s197
      %p199 = scmp.eq.s32.totalorder %s21, 0
      %p200 = por %p198, %p199
      %p201 = scmp.le.s32.totalorder 1, %s15
      %p202 = scmp.lt.s32.totalorder %s15, 3
      %p203 = pnand %p201, %p202
      %p204 = pneg %p203
      // Predicated region
      $region9: #{_lambda_.1} parent=5 // pred_check
        _
      $region10: #{_lambda_.1} parent=5 // pred_check_branch
        %206 = sbr.rel (%p203) target = $region12
      $region11: #{_lambda_.1} parent=5 // pred_region
        %s207 = ssub.s32 %s15, 1
        // Predicated region
        $region13: #{_lambda_.1} parent=11 // pred_check
          %p208 = pneg %p62
        $region14: #{_lambda_.1} parent=11 // pred_check_branch
          %210 = sbr.rel (%p208) target = $region16
        $region15: #{_lambda_.1} parent=11 // pred_region
          %s212 = ssub.s32 32768, 32768
          %213 = vsyncadd [#allocation3], %s212
          %s214 = sshll.u32 [#allocation2], 4
          %s215 = int_to_ptr.vmem [resolvable:$true] %s214
          %220 = dma.hbm_to_vmem [thread:$0]  %s1, 32768, %s215, [#allocation3], 256, 256, 16
        $region16: #{_lambda_.1} parent=11 // pred_fallthru
          _
        // Predicated region
        $region17: #{_lambda_.1} parent=11 // pred_check
          %p221 = pneg %p83
        $region18: #{_lambda_.1} parent=11 // pred_check_branch
          %223 = sbr.rel (%p221) target = $region20
        $region19: #{_lambda_.1} parent=11 // pred_region
          _
        $region20: #{_lambda_.1} parent=11 // pred_fallthru
          _
        // Predicated region
        $region21: #{_lambda_.1} parent=11 // pred_check
          %p224 = pneg %p104
        $region22: #{_lambda_.1} parent=11 // pred_check_branch
          %226 = sbr.rel (%p224) target = $region24
        $region23: #{_lambda_.1} parent=11 // pred_region
          %s228 = ssub.s32 16384, 16384
          %229 = vsyncadd [#allocation5], %s228
          %s230 = sshll.u32 [#allocation4], 4
          %s231 = int_to_ptr.vmem [resolvable:$true] %s230
          %236 = dma.hbm_to_vmem [thread:$0]  %s3, 16384, %s231, [#allocation5], 256, 256, 16
        $region24: #{_lambda_.1} parent=11 // pred_fallthru
          _
        // Predicated region
        $region25: #{_lambda_.1} parent=11 // pred_check
          %p237 = pneg %p125
        $region26: #{_lambda_.1} parent=11 // pred_check_branch
          %239 = sbr.rel (%p237) target = $region28
        $region27: #{_lambda_.1} parent=11 // pred_region
          _
        $region28: #{_lambda_.1} parent=11 // pred_fallthru
          _
        // Predicated region
        $region29: #{_lambda_.1} parent=11 // pred_check
          %p240 = pneg %p146
        $region30: #{_lambda_.1} parent=11 // pred_check_branch
          %242 = sbr.rel (%p240) target = $region32
        $region31: #{_lambda_.1} parent=11 // pred_region
          _
        $region32: #{_lambda_.1} parent=11 // pred_fallthru
          _
        // Predicated region
        $region33: #{_lambda_.1} parent=11 // pred_check
          %p243 = pneg %p167
        $region34: #{_lambda_.1} parent=11 // pred_check_branch
          %245 = sbr.rel (%p243) target = $region36
        $region35: #{_lambda_.1} parent=11 // pred_region
          _
        $region36: #{_lambda_.1} parent=11 // pred_fallthru
          _
      $region12: #{_lambda_.1} parent=5 // pred_fallthru
        _
      %p246 = scmp.lt.s32.totalorder %s15, 2
      // Predicated region
      $region37: #{_lambda_.1} parent=5 // pred_check
        %p247 = pneg %p246
      $region38: #{_lambda_.1} parent=5 // pred_check_branch
        %249 = sbr.rel (%p247) target = $region40
      $region39: #{_lambda_.1} parent=5 // pred_region
        // Predicated region
        $region41: #{_lambda_.1} parent=39 // pred_check
          %p250 = pneg %p35
        $region42: #{_lambda_.1} parent=39 // pred_check_branch
          %252 = sbr.rel (%p250) target = $region44
        $region43: #{_lambda_.1} parent=39 // pred_region
          %s253 = smul.u32 2, %s15
          %s254 = ssub.s32 3, %s253
          %p255 = scmp.lt.s32.totalorder %s254, 2
          %s256 = scalar_select %p255, %s254, 2
          %s257 = smul.u32 128, %s256
          %s258 = smul.u32 %s257, 8
          %p259 = scmp.lt.s32.totalorder %s253, 2
          %s260 = scalar_select %p259, %s253, 2
          %s261 = smul.addr %s260, 8
          %s262 = smul.addr %s261, 8
          %s263 = scalar_lea.vmem %s0, %s262
          %s264 = smul.u32 2, %s15
          %s265 = ssub.s32 3, %s264
          %p266 = scmp.lt.s32.totalorder %s265, 2
          %s267 = scalar_select %p266, %s265, 2
          %s268 = smul.u32 128, %s267
          %s269 = smul.u32 %s268, 8
        $region44: #{_lambda_.1} parent=39 // pred_fallthru
          _
      $region40: #{_lambda_.1} parent=5 // pred_fallthru
        _
      %p270 = scmp.le.s32.totalorder 1, %s15
      %p271 = scmp.lt.s32.totalorder %s15, 3
      %p272 = pnand %p270, %p271
      %p273 = pneg %p272
      // Predicated region
      $region45: #{_lambda_.1} parent=5 // pred_check
        _
      $region46: #{_lambda_.1} parent=5 // pred_check_branch
        %275 = sbr.rel (%p272) target = $region48
      $region47: #{_lambda_.1} parent=5 // pred_region
        %s276 = ssub.s32 %s15, 1
        // Predicated region
        $region49: #{_lambda_.1} parent=47 // pred_check
          %p277 = pneg %p62
        $region50: #{_lambda_.1} parent=47 // pred_check_branch
          %279 = sbr.rel (%p277) target = $region52
        $region51: #{_lambda_.1} parent=47 // pred_region
          %280 = dma.done [#allocation3], 32768
        $region52: #{_lambda_.1} parent=47 // pred_fallthru
          _
        // Predicated region
        $region53: #{_lambda_.1} parent=47 // pred_check
          %p281 = pneg %p104
        $region54: #{_lambda_.1} parent=47 // pred_check_branch
          %283 = sbr.rel (%p281) target = $region56
        $region55: #{_lambda_.1} parent=47 // pred_region
          %284 = dma.done [#allocation5], 16384
        $region56: #{_lambda_.1} parent=47 // pred_fallthru
          _
        %s285 = smul.u32 2, %s20
        %s286 = ssub.s32 3, %s285
        %p287 = scmp.lt.s32.totalorder %s286, 2
        %s288 = scalar_select %p287, %s286, 2
        %s289 = smul.u32 128, %s288
        %s290 = smul.u32 %s289, 8
        %p291 = scmp.lt.s32.totalorder %s285, 2
        %s292 = scalar_select %p291, %s285, 2
        %s293 = smul.addr %s292, 8
        %s294 = smul.addr %s293, 8
        %s295 = scalar_lea.vmem %s0, %s294
        %p296 = pneg %p41
        %p297 = pneg %p38
        %p298 = pneg %p62
        %p299 = pneg %p59
        %p300 = pneg %p83
        %p301 = pneg %p80
        %p302 = pneg %p104
        %p303 = pneg %p101
        %p304 = pneg %p125
        %p305 = pneg %p122
        %p306 = pneg %p146
        %p307 = pneg %p143
        %p308 = pneg %p167
        %p309 = pneg %p164
        %p310 = pneg %p193
        %p311 = pneg %p190
        %s312 = sand.u32 %s180, 1
        %s313 = sand.u32 %s180, 1
        %s314 = smul.addr %s313, 8
        %s315 = scalar_lea.vmem [#allocation6], %s314
        %s316 = smul.u32 2, %s20
        %s317 = ssub.s32 3, %s316
        %p318 = scmp.lt.s32.totalorder %s317, 2
        %s319 = scalar_select %p318, %s317, 2
        %s320 = smul.u32 128, %s319
        %s321 = smul.u32 %s320, 8
        %p322 = scmp.lt.s32.totalorder %s316, 2
        %s323 = scalar_select %p322, %s316, 2
        %s324 = smul.addr %s323, 8
        %s325 = smul.addr %s324, 8
        %s326 = scalar_lea.vmem %s0, %s325
        %s327 = smul.u32 2, %s20
        %s328 = ssub.s32 3, %s327
        %p329 = scmp.lt.s32.totalorder %s328, 2
        %s330 = scalar_select %p329, %s328, 2
        %s331 = smul.u32 128, %s330
        %s332 = smul.u32 %s331, 8
        %s333 = smul.u32 2, %s20
        %s334 = ssub.s32 3, %s333
        %p335 = scmp.lt.s32.totalorder %s334, 2
        %s336 = scalar_select %p335, %s334, 2
        %s337 = smul.u32 64, %s336
        %v339 = vld [vmem:[%s326] sm:$0xff]
        %v340 = vld [vmem:[%s326 + $0x8] sm:$0xff]
        %v341 = vld [vmem:[%s326 + $0x10] sm:$0xff]
        %v342 = vld [vmem:[%s326 + $0x18] sm:$0xff]
        %v343 = vld [vmem:[%s326 + $0x20] sm:$0xff]
        %v344 = vld [vmem:[%s326 + $0x28] sm:$0xff]
        %v345 = vld [vmem:[%s326 + $0x30] sm:$0xff]
        %v346 = vld [vmem:[%s326 + $0x38] sm:$0xff]
        %v347 = vld [vmem:[%s326 + $0x40] sm:$0xff]
        %v348 = vld [vmem:[%s326 + $0x48] sm:$0xff]
        %v349 = vld [vmem:[%s326 + $0x50] sm:$0xff]
        %v350 = vld [vmem:[%s326 + $0x58] sm:$0xff]
        %v351 = vld [vmem:[%s326 + $0x60] sm:$0xff]
        %v352 = vld [vmem:[%s326 + $0x68] sm:$0xff]
        %v353 = vld [vmem:[%s326 + $0x70] sm:$0xff]
        %v354 = vld [vmem:[%s326 + $0x78] sm:$0xff]
        %v355 = vpack.c.bf16 %v347, %v339
        %v356 = vpack.c.bf16 %v348, %v340
        %v357 = vpack.c.bf16 %v349, %v341
        %v358 = vpack.c.bf16 %v350, %v342
        %v359 = vpack.c.bf16 %v351, %v343
        %v360 = vpack.c.bf16 %v352, %v344
        %v361 = vpack.c.bf16 %v353, %v345
        %v362 = vpack.c.bf16 %v354, %v346
        %v363 = vld [vmem:[#allocation2] sm:$0xff]
        %v364 = vld [vmem:[#allocation2 + $0x8] sm:$0xff]
        %v365 = vld [vmem:[#allocation2 + $0x10] sm:$0xff]
        %v366 = vld [vmem:[#allocation2 + $0x18] sm:$0xff]
        %v367 = vld [vmem:[#allocation2 + $0x20] sm:$0xff]
        %v368 = vld [vmem:[#allocation2 + $0x28] sm:$0xff]
        %v369 = vld [vmem:[#allocation2 + $0x30] sm:$0xff]
        %v370 = vld [vmem:[#allocation2 + $0x38] sm:$0xff]
        %v371 = vld [vmem:[#allocation2 + $0x40] sm:$0xff]
        %v372 = vld [vmem:[#allocation2 + $0x48] sm:$0xff]
        %v373 = vld [vmem:[#allocation2 + $0x50] sm:$0xff]
        %v374 = vld [vmem:[#allocation2 + $0x58] sm:$0xff]
        %v375 = vld [vmem:[#allocation2 + $0x60] sm:$0xff]
        %v376 = vld [vmem:[#allocation2 + $0x68] sm:$0xff]
        %v377 = vld [vmem:[#allocation2 + $0x70] sm:$0xff]
        %v378 = vld [vmem:[#allocation2 + $0x78] sm:$0xff]
        %v379 = vld [vmem:[#allocation2 + $0x80] sm:$0xff]
        %v380 = vld [vmem:[#allocation2 + $0x88] sm:$0xff]
        %v381 = vld [vmem:[#allocation2 + $0x90] sm:$0xff]
        %v382 = vld [vmem:[#allocation2 + $0x98] sm:$0xff]
        %v383 = vld [vmem:[#allocation2 + $0xa0] sm:$0xff]
        %v384 = vld [vmem:[#allocation2 + $0xa8] sm:$0xff]
        %v385 = vld [vmem:[#allocation2 + $0xb0] sm:$0xff]
        %v386 = vld [vmem:[#allocation2 + $0xb8] sm:$0xff]
        %v387 = vld [vmem:[#allocation2 + $0xc0] sm:$0xff]
        %v388 = vld [vmem:[#allocation2 + $0xc8] sm:$0xff]
        %v389 = vld [vmem:[#allocation2 + $0xd0] sm:$0xff]
        %v390 = vld [vmem:[#allocation2 + $0xd8] sm:$0xff]
        %v391 = vld [vmem:[#allocation2 + $0xe0] sm:$0xff]
        %v392 = vld [vmem:[#allocation2 + $0xe8] sm:$0xff]
        %v393 = vld [vmem:[#allocation2 + $0xf0] sm:$0xff]
        %v394 = vld [vmem:[#allocation2 + $0xf8] sm:$0xff]
        %v395 = vld [vmem:[#allocation2 + $0x100] sm:$0xff]
        %v396 = vld [vmem:[#allocation2 + $0x108] sm:$0xff]
        %v397 = vld [vmem:[#allocation2 + $0x110] sm:$0xff]
        %v398 = vld [vmem:[#allocation2 + $0x118] sm:$0xff]
        %v399 = vld [vmem:[#allocation2 + $0x120] sm:$0xff]
        %v400 = vld [vmem:[#allocation2 + $0x128] sm:$0xff]
        %v401 = vld [vmem:[#allocation2 + $0x130] sm:$0xff]
        %v402 = vld [vmem:[#allocation2 + $0x138] sm:$0xff]
        %v403 = vld [vmem:[#allocation2 + $0x140] sm:$0xff]
        %v404 = vld [vmem:[#allocation2 + $0x148] sm:$0xff]
        %v405 = vld [vmem:[#allocation2 + $0x150] sm:$0xff]
        %v406 = vld [vmem:[#allocation2 + $0x158] sm:$0xff]
        %v407 = vld [vmem:[#allocation2 + $0x160] sm:$0xff]
        %v408 = vld [vmem:[#allocation2 + $0x168] sm:$0xff]
        %v409 = vld [vmem:[#allocation2 + $0x170] sm:$0xff]
        %v410 = vld [vmem:[#allocation2 + $0x178] sm:$0xff]
        %v411 = vld [vmem:[#allocation2 + $0x180] sm:$0xff]
        %v412 = vld [vmem:[#allocation2 + $0x188] sm:$0xff]
        %v413 = vld [vmem:[#allocation2 + $0x190] sm:$0xff]
        %v414 = vld [vmem:[#allocation2 + $0x198] sm:$0xff]
        %v415 = vld [vmem:[#allocation2 + $0x1a0] sm:$0xff]
        %v416 = vld [vmem:[#allocation2 + $0x1a8] sm:$0xff]
        %v417 = vld [vmem:[#allocation2 + $0x1b0] sm:$0xff]
        %v418 = vld [vmem:[#allocation2 + $0x1b8] sm:$0xff]
        %v419 = vld [vmem:[#allocation2 + $0x1c0] sm:$0xff]
        %v420 = vld [vmem:[#allocation2 + $0x1c8] sm:$0xff]
        %v421 = vld [vmem:[#allocation2 + $0x1d0] sm:$0xff]
        %v422 = vld [vmem:[#allocation2 + $0x1d8] sm:$0xff]
        %v423 = vld [vmem:[#allocation2 + $0x1e0] sm:$0xff]
        %v424 = vld [vmem:[#allocation2 + $0x1e8] sm:$0xff]
        %v425 = vld [vmem:[#allocation2 + $0x1f0] sm:$0xff]
        %v426 = vld [vmem:[#allocation2 + $0x1f8] sm:$0xff]
        %v427 = vld [vmem:[#allocation2 + $0x200] sm:$0xff]
        %v428 = vld [vmem:[#allocation2 + $0x208] sm:$0xff]
        %v429 = vld [vmem:[#allocation2 + $0x210] sm:$0xff]
        %v430 = vld [vmem:[#allocation2 + $0x218] sm:$0xff]
        %v431 = vld [vmem:[#allocation2 + $0x220] sm:$0xff]
        %v432 = vld [vmem:[#allocation2 + $0x228] sm:$0xff]
        %v433 = vld [vmem:[#allocation2 + $0x230] sm:$0xff]
        %v434 = vld [vmem:[#allocation2 + $0x238] sm:$0xff]
        %v435 = vld [vmem:[#allocation2 + $0x240] sm:$0xff]
        %v436 = vld [vmem:[#allocation2 + $0x248] sm:$0xff]
        %v437 = vld [vmem:[#allocation2 + $0x250] sm:$0xff]
        %v438 = vld [vmem:[#allocation2 + $0x258] sm:$0xff]
        %v439 = vld [vmem:[#allocation2 + $0x260] sm:$0xff]
        %v440 = vld [vmem:[#allocation2 + $0x268] sm:$0xff]
        %v441 = vld [vmem:[#allocation2 + $0x270] sm:$0xff]
        %v442 = vld [vmem:[#allocation2 + $0x278] sm:$0xff]
        %v443 = vld [vmem:[#allocation2 + $0x280] sm:$0xff]
        %v444 = vld [vmem:[#allocation2 + $0x288] sm:$0xff]
        %v445 = vld [vmem:[#allocation2 + $0x290] sm:$0xff]
        %v446 = vld [vmem:[#allocation2 + $0x298] sm:$0xff]
        %v447 = vld [vmem:[#allocation2 + $0x2a0] sm:$0xff]
        %v448 = vld [vmem:[#allocation2 + $0x2a8] sm:$0xff]
        %v449 = vld [vmem:[#allocation2 + $0x2b0] sm:$0xff]
        %v450 = vld [vmem:[#allocation2 + $0x2b8] sm:$0xff]
        %v451 = vld [vmem:[#allocation2 + $0x2c0] sm:$0xff]
        %v452 = vld [vmem:[#allocation2 + $0x2c8] sm:$0xff]
        %v453 = vld [vmem:[#allocation2 + $0x2d0] sm:$0xff]
        %v454 = vld [vmem:[#allocation2 + $0x2d8] sm:$0xff]
        %v455 = vld [vmem:[#allocation2 + $0x2e0] sm:$0xff]
        %v456 = vld [vmem:[#allocation2 + $0x2e8] sm:$0xff]
        %v457 = vld [vmem:[#allocation2 + $0x2f0] sm:$0xff]
        %v458 = vld [vmem:[#allocation2 + $0x2f8] sm:$0xff]
        %v459 = vld [vmem:[#allocation2 + $0x300] sm:$0xff]
        %v460 = vld [vmem:[#allocation2 + $0x308] sm:$0xff]
        %v461 = vld [vmem:[#allocation2 + $0x310] sm:$0xff]
        %v462 = vld [vmem:[#allocation2 + $0x318] sm:$0xff]
        %v463 = vld [vmem:[#allocation2 + $0x320] sm:$0xff]
        %v464 = vld [vmem:[#allocation2 + $0x328] sm:$0xff]
        %v465 = vld [vmem:[#allocation2 + $0x330] sm:$0xff]
        %v466 = vld [vmem:[#allocation2 + $0x338] sm:$0xff]
        %v467 = vld [vmem:[#allocation2 + $0x340] sm:$0xff]
        %v468 = vld [vmem:[#allocation2 + $0x348] sm:$0xff]
        %v469 = vld [vmem:[#allocation2 + $0x350] sm:$0xff]
        %v470 = vld [vmem:[#allocation2 + $0x358] sm:$0xff]
        %v471 = vld [vmem:[#allocation2 + $0x360] sm:$0xff]
        %v472 = vld [vmem:[#allocation2 + $0x368] sm:$0xff]
        %v473 = vld [vmem:[#allocation2 + $0x370] sm:$0xff]
        %v474 = vld [vmem:[#allocation2 + $0x378] sm:$0xff]
        %v475 = vld [vmem:[#allocation2 + $0x380] sm:$0xff]
        %v476 = vld [vmem:[#allocation2 + $0x388] sm:$0xff]
        %v477 = vld [vmem:[#allocation2 + $0x390] sm:$0xff]
        %v478 = vld [vmem:[#allocation2 + $0x398] sm:$0xff]
        %v479 = vld [vmem:[#allocation2 + $0x3a0] sm:$0xff]
        %v480 = vld [vmem:[#allocation2 + $0x3a8] sm:$0xff]
        %v481 = vld [vmem:[#allocation2 + $0x3b0] sm:$0xff]
        %v482 = vld [vmem:[#allocation2 + $0x3b8] sm:$0xff]
        %v483 = vld [vmem:[#allocation2 + $0x3c0] sm:$0xff]
        %v484 = vld [vmem:[#allocation2 + $0x3c8] sm:$0xff]
        %v485 = vld [vmem:[#allocation2 + $0x3d0] sm:$0xff]
        %v486 = vld [vmem:[#allocation2 + $0x3d8] sm:$0xff]
        %v487 = vld [vmem:[#allocation2 + $0x3e0] sm:$0xff]
        %v488 = vld [vmem:[#allocation2 + $0x3e8] sm:$0xff]
        %v489 = vld [vmem:[#allocation2 + $0x3f0] sm:$0xff]
        %v490 = vld [vmem:[#allocation2 + $0x3f8] sm:$0xff]
        %v491 = vld [vmem:[#allocation2 + $0x400] sm:$0xff]
        %v492 = vld [vmem:[#allocation2 + $0x408] sm:$0xff]
        %v493 = vld [vmem:[#allocation2 + $0x410] sm:$0xff]
        %v494 = vld [vmem:[#allocation2 + $0x418] sm:$0xff]
        %v495 = vld [vmem:[#allocation2 + $0x420] sm:$0xff]
        %v496 = vld [vmem:[#allocation2 + $0x428] sm:$0xff]
        %v497 = vld [vmem:[#allocation2 + $0x430] sm:$0xff]
        %v498 = vld [vmem:[#allocation2 + $0x438] sm:$0xff]
        %v499 = vld [vmem:[#allocation2 + $0x440] sm:$0xff]
        %v500 = vld [vmem:[#allocation2 + $0x448] sm:$0xff]
        %v501 = vld [vmem:[#allocation2 + $0x450] sm:$0xff]
        %v502 = vld [vmem:[#allocation2 + $0x458] sm:$0xff]
        %v503 = vld [vmem:[#allocation2 + $0x460] sm:$0xff]
        %v504 = vld [vmem:[#allocation2 + $0x468] sm:$0xff]
        %v505 = vld [vmem:[#allocation2 + $0x470] sm:$0xff]
        %v506 = vld [vmem:[#allocation2 + $0x478] sm:$0xff]
        %v507 = vld [vmem:[#allocation2 + $0x480] sm:$0xff]
        %v508 = vld [vmem:[#allocation2 + $0x488] sm:$0xff]
        %v509 = vld [vmem:[#allocation2 + $0x490] sm:$0xff]
        %v510 = vld [vmem:[#allocation2 + $0x498] sm:$0xff]
        %v511 = vld [vmem:[#allocation2 + $0x4a0] sm:$0xff]
        %v512 = vld [vmem:[#allocation2 + $0x4a8] sm:$0xff]
        %v513 = vld [vmem:[#allocation2 + $0x4b0] sm:$0xff]
        %v514 = vld [vmem:[#allocation2 + $0x4b8] sm:$0xff]
        %v515 = vld [vmem:[#allocation2 + $0x4c0] sm:$0xff]
        %v516 = vld [vmem:[#allocation2 + $0x4c8] sm:$0xff]
        %v517 = vld [vmem:[#allocation2 + $0x4d0] sm:$0xff]
        %v518 = vld [vmem:[#allocation2 + $0x4d8] sm:$0xff]
        %v519 = vld [vmem:[#allocation2 + $0x4e0] sm:$0xff]
        %v520 = vld [vmem:[#allocation2 + $0x4e8] sm:$0xff]
        %v521 = vld [vmem:[#allocation2 + $0x4f0] sm:$0xff]
        %v522 = vld [vmem:[#allocation2 + $0x4f8] sm:$0xff]
        %v523 = vld [vmem:[#allocation2 + $0x500] sm:$0xff]
        %v524 = vld [vmem:[#allocation2 + $0x508] sm:$0xff]
        %v525 = vld [vmem:[#allocation2 + $0x510] sm:$0xff]
        %v526 = vld [vmem:[#allocation2 + $0x518] sm:$0xff]
        %v527 = vld [vmem:[#allocation2 + $0x520] sm:$0xff]
        %v528 = vld [vmem:[#allocation2 + $0x528] sm:$0xff]
        %v529 = vld [vmem:[#allocation2 + $0x530] sm:$0xff]
        %v530 = vld [vmem:[#allocation2 + $0x538] sm:$0xff]
        %v531 = vld [vmem:[#allocation2 + $0x540] sm:$0xff]
        %v532 = vld [vmem:[#allocation2 + $0x548] sm:$0xff]
        %v533 = vld [vmem:[#allocation2 + $0x550] sm:$0xff]
        %v534 = vld [vmem:[#allocation2 + $0x558] sm:$0xff]
        %v535 = vld [vmem:[#allocation2 + $0x560] sm:$0xff]
        %v536 = vld [vmem:[#allocation2 + $0x568] sm:$0xff]
        %v537 = vld [vmem:[#allocation2 + $0x570] sm:$0xff]
        %v538 = vld [vmem:[#allocation2 + $0x578] sm:$0xff]
        %v539 = vld [vmem:[#allocation2 + $0x580] sm:$0xff]
        %v540 = vld [vmem:[#allocation2 + $0x588] sm:$0xff]
        %v541 = vld [vmem:[#allocation2 + $0x590] sm:$0xff]
        %v542 = vld [vmem:[#allocation2 + $0x598] sm:$0xff]
        %v543 = vld [vmem:[#allocation2 + $0x5a0] sm:$0xff]
        %v544 = vld [vmem:[#allocation2 + $0x5a8] sm:$0xff]
        %v545 = vld [vmem:[#allocation2 + $0x5b0] sm:$0xff]
        %v546 = vld [vmem:[#allocation2 + $0x5b8] sm:$0xff]
        %v547 = vld [vmem:[#allocation2 + $0x5c0] sm:$0xff]
        %v548 = vld [vmem:[#allocation2 + $0x5c8] sm:$0xff]
        %v549 = vld [vmem:[#allocation2 + $0x5d0] sm:$0xff]
        %v550 = vld [vmem:[#allocation2 + $0x5d8] sm:$0xff]
        %v551 = vld [vmem:[#allocation2 + $0x5e0] sm:$0xff]
        %v552 = vld [vmem:[#allocation2 + $0x5e8] sm:$0xff]
        %v553 = vld [vmem:[#allocation2 + $0x5f0] sm:$0xff]
        %v554 = vld [vmem:[#allocation2 + $0x5f8] sm:$0xff]
        %v555 = vld [vmem:[#allocation2 + $0x600] sm:$0xff]
        %v556 = vld [vmem:[#allocation2 + $0x608] sm:$0xff]
        %v557 = vld [vmem:[#allocation2 + $0x610] sm:$0xff]
        %v558 = vld [vmem:[#allocation2 + $0x618] sm:$0xff]
        %v559 = vld [vmem:[#allocation2 + $0x620] sm:$0xff]
        %v560 = vld [vmem:[#allocation2 + $0x628] sm:$0xff]
        %v561 = vld [vmem:[#allocation2 + $0x630] sm:$0xff]
        %v562 = vld [vmem:[#allocation2 + $0x638] sm:$0xff]
        %v563 = vld [vmem:[#allocation2 + $0x640] sm:$0xff]
        %v564 = vld [vmem:[#allocation2 + $0x648] sm:$0xff]
        %v565 = vld [vmem:[#allocation2 + $0x650] sm:$0xff]
        %v566 = vld [vmem:[#allocation2 + $0x658] sm:$0xff]
        %v567 = vld [vmem:[#allocation2 + $0x660] sm:$0xff]
        %v568 = vld [vmem:[#allocation2 + $0x668] sm:$0xff]
        %v569 = vld [vmem:[#allocation2 + $0x670] sm:$0xff]
        %v570 = vld [vmem:[#allocation2 + $0x678] sm:$0xff]
        %v571 = vld [vmem:[#allocation2 + $0x680] sm:$0xff]
        %v572 = vld [vmem:[#allocation2 + $0x688] sm:$0xff]
        %v573 = vld [vmem:[#allocation2 + $0x690] sm:$0xff]
        %v574 = vld [vmem:[#allocation2 + $0x698] sm:$0xff]
        %v575 = vld [vmem:[#allocation2 + $0x6a0] sm:$0xff]
        %v576 = vld [vmem:[#allocation2 + $0x6a8] sm:$0xff]
        %v577 = vld [vmem:[#allocation2 + $0x6b0] sm:$0xff]
        %v578 = vld [vmem:[#allocation2 + $0x6b8] sm:$0xff]
        %v579 = vld [vmem:[#allocation2 + $0x6c0] sm:$0xff]
        %v580 = vld [vmem:[#allocation2 + $0x6c8] sm:$0xff]
        %v581 = vld [vmem:[#allocation2 + $0x6d0] sm:$0xff]
        %v582 = vld [vmem:[#allocation2 + $0x6d8] sm:$0xff]
        %v583 = vld [vmem:[#allocation2 + $0x6e0] sm:$0xff]
        %v584 = vld [vmem:[#allocation2 + $0x6e8] sm:$0xff]
        %v585 = vld [vmem:[#allocation2 + $0x6f0] sm:$0xff]
        %v586 = vld [vmem:[#allocation2 + $0x6f8] sm:$0xff]
        %v587 = vld [vmem:[#allocation2 + $0x700] sm:$0xff]
        %v588 = vld [vmem:[#allocation2 + $0x708] sm:$0xff]
        %v589 = vld [vmem:[#allocation2 + $0x710] sm:$0xff]
        %v590 = vld [vmem:[#allocation2 + $0x718] sm:$0xff]
        %v591 = vld [vmem:[#allocation2 + $0x720] sm:$0xff]
        %v592 = vld [vmem:[#allocation2 + $0x728] sm:$0xff]
        %v593 = vld [vmem:[#allocation2 + $0x730] sm:$0xff]
        %v594 = vld [vmem:[#allocation2 + $0x738] sm:$0xff]
        %v595 = vld [vmem:[#allocation2 + $0x740] sm:$0xff]
        %v596 = vld [vmem:[#allocation2 + $0x748] sm:$0xff]
        %v597 = vld [vmem:[#allocation2 + $0x750] sm:$0xff]
        %v598 = vld [vmem:[#allocation2 + $0x758] sm:$0xff]
        %v599 = vld [vmem:[#allocation2 + $0x760] sm:$0xff]
        %v600 = vld [vmem:[#allocation2 + $0x768] sm:$0xff]
        %v601 = vld [vmem:[#allocation2 + $0x770] sm:$0xff]
        %v602 = vld [vmem:[#allocation2 + $0x778] sm:$0xff]
        %v603 = vld [vmem:[#allocation2 + $0x780] sm:$0xff]
        %v604 = vld [vmem:[#allocation2 + $0x788] sm:$0xff]
        %v605 = vld [vmem:[#allocation2 + $0x790] sm:$0xff]
        %v606 = vld [vmem:[#allocation2 + $0x798] sm:$0xff]
        %v607 = vld [vmem:[#allocation2 + $0x7a0] sm:$0xff]
        %v608 = vld [vmem:[#allocation2 + $0x7a8] sm:$0xff]
        %v609 = vld [vmem:[#allocation2 + $0x7b0] sm:$0xff]
        %v610 = vld [vmem:[#allocation2 + $0x7b8] sm:$0xff]
        %v611 = vld [vmem:[#allocation2 + $0x7c0] sm:$0xff]
        %v612 = vld [vmem:[#allocation2 + $0x7c8] sm:$0xff]
        %v613 = vld [vmem:[#allocation2 + $0x7d0] sm:$0xff]
        %v614 = vld [vmem:[#allocation2 + $0x7d8] sm:$0xff]
        %v615 = vld [vmem:[#allocation2 + $0x7e0] sm:$0xff]
        %v616 = vld [vmem:[#allocation2 + $0x7e8] sm:$0xff]
        %v617 = vld [vmem:[#allocation2 + $0x7f0] sm:$0xff]
        %v618 = vld [vmem:[#allocation2 + $0x7f8] sm:$0xff]
        %v619 = vld [vmem:[%s2] sm:$0xf]
        %v621 = vlaneseq
        %v622 = vshrl.u32 %v621, 7
        %v623 = vsub.s32 0, %v622
        %v624 = vrot.slane %v619, %v623
        %v625 = vlaneseq
        %v626 = vshrl.u32 %v625, 7
        %v627 = vsub.s32 1, %v626
        %v628 = vrot.slane %v619, %v627
        %v629 = vlaneseq
        %v630 = vshrl.u32 %v629, 7
        %v631 = vsub.s32 2, %v630
        %v632 = vrot.slane %v619, %v631
        %v633 = vlaneseq
        %v634 = vshrl.u32 %v633, 7
        %v635 = vsub.s32 3, %v634
        %v636 = vrot.slane %v619, %v635
        %v897 = vunpack.c.l.b16 %v363
        %v898 = vunpack.c.h.b16 %v363
        %v899 = vunpack.c.l.b16 %v364
        %v900 = vunpack.c.h.b16 %v364
        %v901 = vunpack.c.l.b16 %v365
        %v902 = vunpack.c.h.b16 %v365
        %v903 = vunpack.c.l.b16 %v366
        %v904 = vunpack.c.h.b16 %v366
        %v905 = vunpack.c.l.b16 %v367
        %v906 = vunpack.c.h.b16 %v367
        %v907 = vunpack.c.l.b16 %v368
        %v908 = vunpack.c.h.b16 %v368
        %v909 = vunpack.c.l.b16 %v369
        %v910 = vunpack.c.h.b16 %v369
        %v911 = vunpack.c.l.b16 %v370
        %v912 = vunpack.c.h.b16 %v370
        %v913 = vunpack.c.l.b16 %v371
        %v914 = vunpack.c.h.b16 %v371
        %v915 = vunpack.c.l.b16 %v372
        %v916 = vunpack.c.h.b16 %v372
        %v917 = vunpack.c.l.b16 %v373
        %v918 = vunpack.c.h.b16 %v373
        %v919 = vunpack.c.l.b16 %v374
        %v920 = vunpack.c.h.b16 %v374
        %v921 = vunpack.c.l.b16 %v375
        %v922 = vunpack.c.h.b16 %v375
        %v923 = vunpack.c.l.b16 %v376
        %v924 = vunpack.c.h.b16 %v376
        %v925 = vunpack.c.l.b16 %v377
        %v926 = vunpack.c.h.b16 %v377
        %v927 = vunpack.c.l.b16 %v378
        %v928 = vunpack.c.h.b16 %v378
        %v929 = vunpack.c.l.b16 %v379
        %v930 = vunpack.c.h.b16 %v379
        %v931 = vunpack.c.l.b16 %v380
        %v932 = vunpack.c.h.b16 %v380
        %v933 = vunpack.c.l.b16 %v381
        %v934 = vunpack.c.h.b16 %v381
        %v935 = vunpack.c.l.b16 %v382
        %v936 = vunpack.c.h.b16 %v382
        %v937 = vunpack.c.l.b16 %v383
        %v938 = vunpack.c.h.b16 %v383
        %v939 = vunpack.c.l.b16 %v384
        %v940 = vunpack.c.h.b16 %v384
        %v941 = vunpack.c.l.b16 %v385
        %v942 = vunpack.c.h.b16 %v385
        %v943 = vunpack.c.l.b16 %v386
        %v944 = vunpack.c.h.b16 %v386
        %v945 = vunpack.c.l.b16 %v387
        %v946 = vunpack.c.h.b16 %v387
        %v947 = vunpack.c.l.b16 %v388
        %v948 = vunpack.c.h.b16 %v388
        %v949 = vunpack.c.l.b16 %v389
        %v950 = vunpack.c.h.b16 %v389
        %v951 = vunpack.c.l.b16 %v390
        %v952 = vunpack.c.h.b16 %v390
        %v953 = vunpack.c.l.b16 %v391
        %v954 = vunpack.c.h.b16 %v391
        %v955 = vunpack.c.l.b16 %v392
        %v956 = vunpack.c.h.b16 %v392
        %v957 = vunpack.c.l.b16 %v393
        %v958 = vunpack.c.h.b16 %v393
        %v959 = vunpack.c.l.b16 %v394
        %v960 = vunpack.c.h.b16 %v394
        %v961 = vunpack.c.l.b16 %v395
        %v962 = vunpack.c.h.b16 %v395
        %v963 = vunpack.c.l.b16 %v396
        %v964 = vunpack.c.h.b16 %v396
        %v965 = vunpack.c.l.b16 %v397
        %v966 = vunpack.c.h.b16 %v397
        %v967 = vunpack.c.l.b16 %v398
        %v968 = vunpack.c.h.b16 %v398
        %v969 = vunpack.c.l.b16 %v399
        %v970 = vunpack.c.h.b16 %v399
        %v971 = vunpack.c.l.b16 %v400
        %v972 = vunpack.c.h.b16 %v400
        %v973 = vunpack.c.l.b16 %v401
        %v974 = vunpack.c.h.b16 %v401
        %v975 = vunpack.c.l.b16 %v402
        %v976 = vunpack.c.h.b16 %v402
        %v977 = vunpack.c.l.b16 %v403
        %v978 = vunpack.c.h.b16 %v403
        %v979 = vunpack.c.l.b16 %v404
        %v980 = vunpack.c.h.b16 %v404
        %v981 = vunpack.c.l.b16 %v405
        %v982 = vunpack.c.h.b16 %v405
        %v983 = vunpack.c.l.b16 %v406
        %v984 = vunpack.c.h.b16 %v406
        %v985 = vunpack.c.l.b16 %v407
        %v986 = vunpack.c.h.b16 %v407
        %v987 = vunpack.c.l.b16 %v408
        %v988 = vunpack.c.h.b16 %v408
        %v989 = vunpack.c.l.b16 %v409
        %v990 = vunpack.c.h.b16 %v409
        %v991 = vunpack.c.l.b16 %v410
        %v992 = vunpack.c.h.b16 %v410
        %v993 = vunpack.c.l.b16 %v411
        %v994 = vunpack.c.h.b16 %v411
        %v995 = vunpack.c.l.b16 %v412
        %v996 = vunpack.c.h.b16 %v412
        %v997 = vunpack.c.l.b16 %v413
        %v998 = vunpack.c.h.b16 %v413
        %v999 = vunpack.c.l.b16 %v414
        %v1000 = vunpack.c.h.b16 %v414
        %v1001 = vunpack.c.l.b16 %v415
        %v1002 = vunpack.c.h.b16 %v415
        %v1003 = vunpack.c.l.b16 %v416
        %v1004 = vunpack.c.h.b16 %v416
        %v1005 = vunpack.c.l.b16 %v417
        %v1006 = vunpack.c.h.b16 %v417
        %v1007 = vunpack.c.l.b16 %v418
        %v1008 = vunpack.c.h.b16 %v418
        %v1009 = vunpack.c.l.b16 %v419
        %v1010 = vunpack.c.h.b16 %v419
        %v1011 = vunpack.c.l.b16 %v420
        %v1012 = vunpack.c.h.b16 %v420
        %v1013 = vunpack.c.l.b16 %v421
        %v1014 = vunpack.c.h.b16 %v421
        %v1015 = vunpack.c.l.b16 %v422
        %v1016 = vunpack.c.h.b16 %v422
        %v1017 = vunpack.c.l.b16 %v423
        %v1018 = vunpack.c.h.b16 %v423
        %v1019 = vunpack.c.l.b16 %v424
        %v1020 = vunpack.c.h.b16 %v424
        %v1021 = vunpack.c.l.b16 %v425
        %v1022 = vunpack.c.h.b16 %v425
        %v1023 = vunpack.c.l.b16 %v426
        %v1024 = vunpack.c.h.b16 %v426
        %v1025 = vunpack.c.l.b16 %v427
        %v1026 = vunpack.c.h.b16 %v427
        %v1027 = vunpack.c.l.b16 %v428
        %v1028 = vunpack.c.h.b16 %v428
        %v1029 = vunpack.c.l.b16 %v429
        %v1030 = vunpack.c.h.b16 %v429
        %v1031 = vunpack.c.l.b16 %v430
        %v1032 = vunpack.c.h.b16 %v430
        %v1033 = vunpack.c.l.b16 %v431
        %v1034 = vunpack.c.h.b16 %v431
        %v1035 = vunpack.c.l.b16 %v432
        %v1036 = vunpack.c.h.b16 %v432
        %v1037 = vunpack.c.l.b16 %v433
        %v1038 = vunpack.c.h.b16 %v433
        %v1039 = vunpack.c.l.b16 %v434
        %v1040 = vunpack.c.h.b16 %v434
        %v1041 = vunpack.c.l.b16 %v435
        %v1042 = vunpack.c.h.b16 %v435
        %v1043 = vunpack.c.l.b16 %v436
        %v1044 = vunpack.c.h.b16 %v436
        %v1045 = vunpack.c.l.b16 %v437
        %v1046 = vunpack.c.h.b16 %v437
        %v1047 = vunpack.c.l.b16 %v438
        %v1048 = vunpack.c.h.b16 %v438
        %v1049 = vunpack.c.l.b16 %v439
        %v1050 = vunpack.c.h.b16 %v439
        %v1051 = vunpack.c.l.b16 %v440
        %v1052 = vunpack.c.h.b16 %v440
        %v1053 = vunpack.c.l.b16 %v441
        %v1054 = vunpack.c.h.b16 %v441
        %v1055 = vunpack.c.l.b16 %v442
        %v1056 = vunpack.c.h.b16 %v442
        %v1057 = vunpack.c.l.b16 %v443
        %v1058 = vunpack.c.h.b16 %v443
        %v1059 = vunpack.c.l.b16 %v444
        %v1060 = vunpack.c.h.b16 %v444
        %v1061 = vunpack.c.l.b16 %v445
        %v1062 = vunpack.c.h.b16 %v445
        %v1063 = vunpack.c.l.b16 %v446
        %v1064 = vunpack.c.h.b16 %v446
        %v1065 = vunpack.c.l.b16 %v447
        %v1066 = vunpack.c.h.b16 %v447
        %v1067 = vunpack.c.l.b16 %v448
        %v1068 = vunpack.c.h.b16 %v448
        %v1069 = vunpack.c.l.b16 %v449
        %v1070 = vunpack.c.h.b16 %v449
        %v1071 = vunpack.c.l.b16 %v450
        %v1072 = vunpack.c.h.b16 %v450
        %v1073 = vunpack.c.l.b16 %v451
        %v1074 = vunpack.c.h.b16 %v451
        %v1075 = vunpack.c.l.b16 %v452
        %v1076 = vunpack.c.h.b16 %v452
        %v1077 = vunpack.c.l.b16 %v453
        %v1078 = vunpack.c.h.b16 %v453
        %v1079 = vunpack.c.l.b16 %v454
        %v1080 = vunpack.c.h.b16 %v454
        %v1081 = vunpack.c.l.b16 %v455
        %v1082 = vunpack.c.h.b16 %v455
        %v1083 = vunpack.c.l.b16 %v456
        %v1084 = vunpack.c.h.b16 %v456
        %v1085 = vunpack.c.l.b16 %v457
        %v1086 = vunpack.c.h.b16 %v457
        %v1087 = vunpack.c.l.b16 %v458
        %v1088 = vunpack.c.h.b16 %v458
        %v1089 = vunpack.c.l.b16 %v459
        %v1090 = vunpack.c.h.b16 %v459
        %v1091 = vunpack.c.l.b16 %v460
        %v1092 = vunpack.c.h.b16 %v460
        %v1093 = vunpack.c.l.b16 %v461
        %v1094 = vunpack.c.h.b16 %v461
        %v1095 = vunpack.c.l.b16 %v462
        %v1096 = vunpack.c.h.b16 %v462
        %v1097 = vunpack.c.l.b16 %v463
        %v1098 = vunpack.c.h.b16 %v463
        %v1099 = vunpack.c.l.b16 %v464
        %v1100 = vunpack.c.h.b16 %v464
        %v1101 = vunpack.c.l.b16 %v465
        %v1102 = vunpack.c.h.b16 %v465
        %v1103 = vunpack.c.l.b16 %v466
        %v1104 = vunpack.c.h.b16 %v466
        %v1105 = vunpack.c.l.b16 %v467
        %v1106 = vunpack.c.h.b16 %v467
        %v1107 = vunpack.c.l.b16 %v468
        %v1108 = vunpack.c.h.b16 %v468
        %v1109 = vunpack.c.l.b16 %v469
        %v1110 = vunpack.c.h.b16 %v469
        %v1111 = vunpack.c.l.b16 %v470
        %v1112 = vunpack.c.h.b16 %v470
        %v1113 = vunpack.c.l.b16 %v471
        %v1114 = vunpack.c.h.b16 %v471
        %v1115 = vunpack.c.l.b16 %v472
        %v1116 = vunpack.c.h.b16 %v472
        %v1117 = vunpack.c.l.b16 %v473
        %v1118 = vunpack.c.h.b16 %v473
        %v1119 = vunpack.c.l.b16 %v474
        %v1120 = vunpack.c.h.b16 %v474
        %v1121 = vunpack.c.l.b16 %v475
        %v1122 = vunpack.c.h.b16 %v475
        %v1123 = vunpack.c.l.b16 %v476
        %v1124 = vunpack.c.h.b16 %v476
        %v1125 = vunpack.c.l.b16 %v477
        %v1126 = vunpack.c.h.b16 %v477
        %v1127 = vunpack.c.l.b16 %v478
        %v1128 = vunpack.c.h.b16 %v478
        %v1129 = vunpack.c.l.b16 %v479
        %v1130 = vunpack.c.h.b16 %v479
        %v1131 = vunpack.c.l.b16 %v480
        %v1132 = vunpack.c.h.b16 %v480
        %v1133 = vunpack.c.l.b16 %v481
        %v1134 = vunpack.c.h.b16 %v481
        %v1135 = vunpack.c.l.b16 %v482
        %v1136 = vunpack.c.h.b16 %v482
        %v1137 = vunpack.c.l.b16 %v483
        %v1138 = vunpack.c.h.b16 %v483
        %v1139 = vunpack.c.l.b16 %v484
        %v1140 = vunpack.c.h.b16 %v484
        %v1141 = vunpack.c.l.b16 %v485
        %v1142 = vunpack.c.h.b16 %v485
        %v1143 = vunpack.c.l.b16 %v486
        %v1144 = vunpack.c.h.b16 %v486
        %v1145 = vunpack.c.l.b16 %v487
        %v1146 = vunpack.c.h.b16 %v487
        %v1147 = vunpack.c.l.b16 %v488
        %v1148 = vunpack.c.h.b16 %v488
        %v1149 = vunpack.c.l.b16 %v489
        %v1150 = vunpack.c.h.b16 %v489
        %v1151 = vunpack.c.l.b16 %v490
        %v1152 = vunpack.c.h.b16 %v490
        %v1153 = vunpack.c.l.b16 %v491
        %v1154 = vunpack.c.h.b16 %v491
        %v1155 = vunpack.c.l.b16 %v492
        %v1156 = vunpack.c.h.b16 %v492
        %v1157 = vunpack.c.l.b16 %v493
        %v1158 = vunpack.c.h.b16 %v493
        %v1159 = vunpack.c.l.b16 %v494
        %v1160 = vunpack.c.h.b16 %v494
        %v1161 = vunpack.c.l.b16 %v495
        %v1162 = vunpack.c.h.b16 %v495
        %v1163 = vunpack.c.l.b16 %v496
        %v1164 = vunpack.c.h.b16 %v496
        %v1165 = vunpack.c.l.b16 %v497
        %v1166 = vunpack.c.h.b16 %v497
        %v1167 = vunpack.c.l.b16 %v498
        %v1168 = vunpack.c.h.b16 %v498
        %v1169 = vunpack.c.l.b16 %v499
        %v1170 = vunpack.c.h.b16 %v499
        %v1171 = vunpack.c.l.b16 %v500
        %v1172 = vunpack.c.h.b16 %v500
        %v1173 = vunpack.c.l.b16 %v501
        %v1174 = vunpack.c.h.b16 %v501
        %v1175 = vunpack.c.l.b16 %v502
        %v1176 = vunpack.c.h.b16 %v502
        %v1177 = vunpack.c.l.b16 %v503
        %v1178 = vunpack.c.h.b16 %v503
        %v1179 = vunpack.c.l.b16 %v504
        %v1180 = vunpack.c.h.b16 %v504
        %v1181 = vunpack.c.l.b16 %v505
        %v1182 = vunpack.c.h.b16 %v505
        %v1183 = vunpack.c.l.b16 %v506
        %v1184 = vunpack.c.h.b16 %v506
        %v1185 = vunpack.c.l.b16 %v507
        %v1186 = vunpack.c.h.b16 %v507
        %v1187 = vunpack.c.l.b16 %v508
        %v1188 = vunpack.c.h.b16 %v508
        %v1189 = vunpack.c.l.b16 %v509
        %v1190 = vunpack.c.h.b16 %v509
        %v1191 = vunpack.c.l.b16 %v510
        %v1192 = vunpack.c.h.b16 %v510
        %v1193 = vunpack.c.l.b16 %v511
        %v1194 = vunpack.c.h.b16 %v511
        %v1195 = vunpack.c.l.b16 %v512
        %v1196 = vunpack.c.h.b16 %v512
        %v1197 = vunpack.c.l.b16 %v513
        %v1198 = vunpack.c.h.b16 %v513
        %v1199 = vunpack.c.l.b16 %v514
        %v1200 = vunpack.c.h.b16 %v514
        %v1201 = vunpack.c.l.b16 %v515
        %v1202 = vunpack.c.h.b16 %v515
        %v1203 = vunpack.c.l.b16 %v516
        %v1204 = vunpack.c.h.b16 %v516
        %v1205 = vunpack.c.l.b16 %v517
        %v1206 = vunpack.c.h.b16 %v517
        %v1207 = vunpack.c.l.b16 %v518
        %v1208 = vunpack.c.h.b16 %v518
        %v1209 = vunpack.c.l.b16 %v519
        %v1210 = vunpack.c.h.b16 %v519
        %v1211 = vunpack.c.l.b16 %v520
        %v1212 = vunpack.c.h.b16 %v520
        %v1213 = vunpack.c.l.b16 %v521
        %v1214 = vunpack.c.h.b16 %v521
        %v1215 = vunpack.c.l.b16 %v522
        %v1216 = vunpack.c.h.b16 %v522
        %v1217 = vunpack.c.l.b16 %v523
        %v1218 = vunpack.c.h.b16 %v523
        %v1219 = vunpack.c.l.b16 %v524
        %v1220 = vunpack.c.h.b16 %v524
        %v1221 = vunpack.c.l.b16 %v525
        %v1222 = vunpack.c.h.b16 %v525
        %v1223 = vunpack.c.l.b16 %v526
        %v1224 = vunpack.c.h.b16 %v526
        %v1225 = vunpack.c.l.b16 %v527
        %v1226 = vunpack.c.h.b16 %v527
        %v1227 = vunpack.c.l.b16 %v528
        %v1228 = vunpack.c.h.b16 %v528
        %v1229 = vunpack.c.l.b16 %v529
        %v1230 = vunpack.c.h.b16 %v529
        %v1231 = vunpack.c.l.b16 %v530
        %v1232 = vunpack.c.h.b16 %v530
        %v1233 = vunpack.c.l.b16 %v531
        %v1234 = vunpack.c.h.b16 %v531
        %v1235 = vunpack.c.l.b16 %v532
        %v1236 = vunpack.c.h.b16 %v532
        %v1237 = vunpack.c.l.b16 %v533
        %v1238 = vunpack.c.h.b16 %v533
        %v1239 = vunpack.c.l.b16 %v534
        %v1240 = vunpack.c.h.b16 %v534
        %v1241 = vunpack.c.l.b16 %v535
        %v1242 = vunpack.c.h.b16 %v535
        %v1243 = vunpack.c.l.b16 %v536
        %v1244 = vunpack.c.h.b16 %v536
        %v1245 = vunpack.c.l.b16 %v537
        %v1246 = vunpack.c.h.b16 %v537
        %v1247 = vunpack.c.l.b16 %v538
        %v1248 = vunpack.c.h.b16 %v538
        %v1249 = vunpack.c.l.b16 %v539
        %v1250 = vunpack.c.h.b16 %v539
        %v1251 = vunpack.c.l.b16 %v540
        %v1252 = vunpack.c.h.b16 %v540
        %v1253 = vunpack.c.l.b16 %v541
        %v1254 = vunpack.c.h.b16 %v541
        %v1255 = vunpack.c.l.b16 %v542
        %v1256 = vunpack.c.h.b16 %v542
        %v1257 = vunpack.c.l.b16 %v543
        %v1258 = vunpack.c.h.b16 %v543
        %v1259 = vunpack.c.l.b16 %v544
        %v1260 = vunpack.c.h.b16 %v544
        %v1261 = vunpack.c.l.b16 %v545
        %v1262 = vunpack.c.h.b16 %v545
        %v1263 = vunpack.c.l.b16 %v546
        %v1264 = vunpack.c.h.b16 %v546
        %v1265 = vunpack.c.l.b16 %v547
        %v1266 = vunpack.c.h.b16 %v547
        %v1267 = vunpack.c.l.b16 %v548
        %v1268 = vunpack.c.h.b16 %v548
        %v1269 = vunpack.c.l.b16 %v549
        %v1270 = vunpack.c.h.b16 %v549
        %v1271 = vunpack.c.l.b16 %v550
        %v1272 = vunpack.c.h.b16 %v550
        %v1273 = vunpack.c.l.b16 %v551
        %v1274 = vunpack.c.h.b16 %v551
        %v1275 = vunpack.c.l.b16 %v552
        %v1276 = vunpack.c.h.b16 %v552
        %v1277 = vunpack.c.l.b16 %v553
        %v1278 = vunpack.c.h.b16 %v553
        %v1279 = vunpack.c.l.b16 %v554
        %v1280 = vunpack.c.h.b16 %v554
        %v1281 = vunpack.c.l.b16 %v555
        %v1282 = vunpack.c.h.b16 %v555
        %v1283 = vunpack.c.l.b16 %v556
        %v1284 = vunpack.c.h.b16 %v556
        %v1285 = vunpack.c.l.b16 %v557
        %v1286 = vunpack.c.h.b16 %v557
        %v1287 = vunpack.c.l.b16 %v558
        %v1288 = vunpack.c.h.b16 %v558
        %v1289 = vunpack.c.l.b16 %v559
        %v1290 = vunpack.c.h.b16 %v559
        %v1291 = vunpack.c.l.b16 %v560
        %v1292 = vunpack.c.h.b16 %v560
        %v1293 = vunpack.c.l.b16 %v561
        %v1294 = vunpack.c.h.b16 %v561
        %v1295 = vunpack.c.l.b16 %v562
        %v1296 = vunpack.c.h.b16 %v562
        %v1297 = vunpack.c.l.b16 %v563
        %v1298 = vunpack.c.h.b16 %v563
        %v1299 = vunpack.c.l.b16 %v564
        %v1300 = vunpack.c.h.b16 %v564
        %v1301 = vunpack.c.l.b16 %v565
        %v1302 = vunpack.c.h.b16 %v565
        %v1303 = vunpack.c.l.b16 %v566
        %v1304 = vunpack.c.h.b16 %v566
        %v1305 = vunpack.c.l.b16 %v567
        %v1306 = vunpack.c.h.b16 %v567
        %v1307 = vunpack.c.l.b16 %v568
        %v1308 = vunpack.c.h.b16 %v568
        %v1309 = vunpack.c.l.b16 %v569
        %v1310 = vunpack.c.h.b16 %v569
        %v1311 = vunpack.c.l.b16 %v570
        %v1312 = vunpack.c.h.b16 %v570
        %v1313 = vunpack.c.l.b16 %v571
        %v1314 = vunpack.c.h.b16 %v571
        %v1315 = vunpack.c.l.b16 %v572
        %v1316 = vunpack.c.h.b16 %v572
        %v1317 = vunpack.c.l.b16 %v573
        %v1318 = vunpack.c.h.b16 %v573
        %v1319 = vunpack.c.l.b16 %v574
        %v1320 = vunpack.c.h.b16 %v574
        %v1321 = vunpack.c.l.b16 %v575
        %v1322 = vunpack.c.h.b16 %v575
        %v1323 = vunpack.c.l.b16 %v576
        %v1324 = vunpack.c.h.b16 %v576
        %v1325 = vunpack.c.l.b16 %v577
        %v1326 = vunpack.c.h.b16 %v577
        %v1327 = vunpack.c.l.b16 %v578
        %v1328 = vunpack.c.h.b16 %v578
        %v1329 = vunpack.c.l.b16 %v579
        %v1330 = vunpack.c.h.b16 %v579
        %v1331 = vunpack.c.l.b16 %v580
        %v1332 = vunpack.c.h.b16 %v580
        %v1333 = vunpack.c.l.b16 %v581
        %v1334 = vunpack.c.h.b16 %v581
        %v1335 = vunpack.c.l.b16 %v582
        %v1336 = vunpack.c.h.b16 %v582
        %v1337 = vunpack.c.l.b16 %v583
        %v1338 = vunpack.c.h.b16 %v583
        %v1339 = vunpack.c.l.b16 %v584
        %v1340 = vunpack.c.h.b16 %v584
        %v1341 = vunpack.c.l.b16 %v585
        %v1342 = vunpack.c.h.b16 %v585
        %v1343 = vunpack.c.l.b16 %v586
        %v1344 = vunpack.c.h.b16 %v586
        %v1345 = vunpack.c.l.b16 %v587
        %v1346 = vunpack.c.h.b16 %v587
        %v1347 = vunpack.c.l.b16 %v588
        %v1348 = vunpack.c.h.b16 %v588
        %v1349 = vunpack.c.l.b16 %v589
        %v1350 = vunpack.c.h.b16 %v589
        %v1351 = vunpack.c.l.b16 %v590
        %v1352 = vunpack.c.h.b16 %v590
        %v1353 = vunpack.c.l.b16 %v591
        %v1354 = vunpack.c.h.b16 %v591
        %v1355 = vunpack.c.l.b16 %v592
        %v1356 = vunpack.c.h.b16 %v592
        %v1357 = vunpack.c.l.b16 %v593
        %v1358 = vunpack.c.h.b16 %v593
        %v1359 = vunpack.c.l.b16 %v594
        %v1360 = vunpack.c.h.b16 %v594
        %v1361 = vunpack.c.l.b16 %v595
        %v1362 = vunpack.c.h.b16 %v595
        %v1363 = vunpack.c.l.b16 %v596
        %v1364 = vunpack.c.h.b16 %v596
        %v1365 = vunpack.c.l.b16 %v597
        %v1366 = vunpack.c.h.b16 %v597
        %v1367 = vunpack.c.l.b16 %v598
        %v1368 = vunpack.c.h.b16 %v598
        %v1369 = vunpack.c.l.b16 %v599
        %v1370 = vunpack.c.h.b16 %v599
        %v1371 = vunpack.c.l.b16 %v600
        %v1372 = vunpack.c.h.b16 %v600
        %v1373 = vunpack.c.l.b16 %v601
        %v1374 = vunpack.c.h.b16 %v601
        %v1375 = vunpack.c.l.b16 %v602
        %v1376 = vunpack.c.h.b16 %v602
        %v1377 = vunpack.c.l.b16 %v603
        %v1378 = vunpack.c.h.b16 %v603
        %v1379 = vunpack.c.l.b16 %v604
        %v1380 = vunpack.c.h.b16 %v604
        %v1381 = vunpack.c.l.b16 %v605
        %v1382 = vunpack.c.h.b16 %v605
        %v1383 = vunpack.c.l.b16 %v606
        %v1384 = vunpack.c.h.b16 %v606
        %v1385 = vunpack.c.l.b16 %v607
        %v1386 = vunpack.c.h.b16 %v607
        %v1387 = vunpack.c.l.b16 %v608
        %v1388 = vunpack.c.h.b16 %v608
        %v1389 = vunpack.c.l.b16 %v609
        %v1390 = vunpack.c.h.b16 %v609
        %v1391 = vunpack.c.l.b16 %v610
        %v1392 = vunpack.c.h.b16 %v610
        %v1393 = vunpack.c.l.b16 %v611
        %v1394 = vunpack.c.h.b16 %v611
        %v1395 = vunpack.c.l.b16 %v612
        %v1396 = vunpack.c.h.b16 %v612
        %v1397 = vunpack.c.l.b16 %v613
        %v1398 = vunpack.c.h.b16 %v613
        %v1399 = vunpack.c.l.b16 %v614
        %v1400 = vunpack.c.h.b16 %v614
        %v1401 = vunpack.c.l.b16 %v615
        %v1402 = vunpack.c.h.b16 %v615
        %v1403 = vunpack.c.l.b16 %v616
        %v1404 = vunpack.c.h.b16 %v616
        %v1405 = vunpack.c.l.b16 %v617
        %v1406 = vunpack.c.h.b16 %v617
        %v1407 = vunpack.c.l.b16 %v618
        %v1408 = vunpack.c.h.b16 %v618
        %v1409 = vpack.c.b16 %v901, %v897
        %v1410 = vpack.c.b16 %v902, %v898
        %v1411 = vpack.c.b16 %v903, %v899
        %v1412 = vpack.c.b16 %v904, %v900
        %v1413 = vpack.c.b16 %v909, %v905
        %v1414 = vpack.c.b16 %v910, %v906
        %v1415 = vpack.c.b16 %v911, %v907
        %v1416 = vpack.c.b16 %v912, %v908
        %v1417 = vpack.c.b16 %v917, %v913
        %v1418 = vpack.c.b16 %v918, %v914
        %v1419 = vpack.c.b16 %v919, %v915
        %v1420 = vpack.c.b16 %v920, %v916
        %v1421 = vpack.c.b16 %v925, %v921
        %v1422 = vpack.c.b16 %v926, %v922
        %v1423 = vpack.c.b16 %v927, %v923
        %v1424 = vpack.c.b16 %v928, %v924
        %v1425 = vpack.c.b16 %v933, %v929
        %v1426 = vpack.c.b16 %v934, %v930
        %v1427 = vpack.c.b16 %v935, %v931
        %v1428 = vpack.c.b16 %v936, %v932
        %v1429 = vpack.c.b16 %v941, %v937
        %v1430 = vpack.c.b16 %v942, %v938
        %v1431 = vpack.c.b16 %v943, %v939
        %v1432 = vpack.c.b16 %v944, %v940
        %v1433 = vpack.c.b16 %v949, %v945
        %v1434 = vpack.c.b16 %v950, %v946
        %v1435 = vpack.c.b16 %v951, %v947
        %v1436 = vpack.c.b16 %v952, %v948
        %v1437 = vpack.c.b16 %v957, %v953
        %v1438 = vpack.c.b16 %v958, %v954
        %v1439 = vpack.c.b16 %v959, %v955
        %v1440 = vpack.c.b16 %v960, %v956
        %v1441 = vpack.c.b16 %v965, %v961
        %v1442 = vpack.c.b16 %v966, %v962
        %v1443 = vpack.c.b16 %v967, %v963
        %v1444 = vpack.c.b16 %v968, %v964
        %v1445 = vpack.c.b16 %v973, %v969
        %v1446 = vpack.c.b16 %v974, %v970
        %v1447 = vpack.c.b16 %v975, %v971
        %v1448 = vpack.c.b16 %v976, %v972
        %v1449 = vpack.c.b16 %v981, %v977
        %v1450 = vpack.c.b16 %v982, %v978
        %v1451 = vpack.c.b16 %v983, %v979
        %v1452 = vpack.c.b16 %v984, %v980
        %v1453 = vpack.c.b16 %v989, %v985
        %v1454 = vpack.c.b16 %v990, %v986
        %v1455 = vpack.c.b16 %v991, %v987
        %v1456 = vpack.c.b16 %v992, %v988
        %v1457 = vpack.c.b16 %v997, %v993
        %v1458 = vpack.c.b16 %v998, %v994
        %v1459 = vpack.c.b16 %v999, %v995
        %v1460 = vpack.c.b16 %v1000, %v996
        %v1461 = vpack.c.b16 %v1005, %v1001
        %v1462 = vpack.c.b16 %v1006, %v1002
        %v1463 = vpack.c.b16 %v1007, %v1003
        %v1464 = vpack.c.b16 %v1008, %v1004
        %v1465 = vpack.c.b16 %v1013, %v1009
        %v1466 = vpack.c.b16 %v1014, %v1010
        %v1467 = vpack.c.b16 %v1015, %v1011
        %v1468 = vpack.c.b16 %v1016, %v1012
        %v1469 = vpack.c.b16 %v1021, %v1017
        %v1470 = vpack.c.b16 %v1022, %v1018
        %v1471 = vpack.c.b16 %v1023, %v1019
        %v1472 = vpack.c.b16 %v1024, %v1020
        %v1473 = vpack.c.b16 %v1029, %v1025
        %v1474 = vpack.c.b16 %v1030, %v1026
        %v1475 = vpack.c.b16 %v1031, %v1027
        %v1476 = vpack.c.b16 %v1032, %v1028
        %v1477 = vpack.c.b16 %v1037, %v1033
        %v1478 = vpack.c.b16 %v1038, %v1034
        %v1479 = vpack.c.b16 %v1039, %v1035
        %v1480 = vpack.c.b16 %v1040, %v1036
        %v1481 = vpack.c.b16 %v1045, %v1041
        %v1482 = vpack.c.b16 %v1046, %v1042
        %v1483 = vpack.c.b16 %v1047, %v1043
        %v1484 = vpack.c.b16 %v1048, %v1044
        %v1485 = vpack.c.b16 %v1053, %v1049
        %v1486 = vpack.c.b16 %v1054, %v1050
        %v1487 = vpack.c.b16 %v1055, %v1051
        %v1488 = vpack.c.b16 %v1056, %v1052
        %v1489 = vpack.c.b16 %v1061, %v1057
        %v1490 = vpack.c.b16 %v1062, %v1058
        %v1491 = vpack.c.b16 %v1063, %v1059
        %v1492 = vpack.c.b16 %v1064, %v1060
        %v1493 = vpack.c.b16 %v1069, %v1065
        %v1494 = vpack.c.b16 %v1070, %v1066
        %v1495 = vpack.c.b16 %v1071, %v1067
        %v1496 = vpack.c.b16 %v1072, %v1068
        %v1497 = vpack.c.b16 %v1077, %v1073
        %v1498 = vpack.c.b16 %v1078, %v1074
        %v1499 = vpack.c.b16 %v1079, %v1075
        %v1500 = vpack.c.b16 %v1080, %v1076
        %v1501 = vpack.c.b16 %v1085, %v1081
        %v1502 = vpack.c.b16 %v1086, %v1082
        %v1503 = vpack.c.b16 %v1087, %v1083
        %v1504 = vpack.c.b16 %v1088, %v1084
        %v1505 = vpack.c.b16 %v1093, %v1089
        %v1506 = vpack.c.b16 %v1094, %v1090
        %v1507 = vpack.c.b16 %v1095, %v1091
        %v1508 = vpack.c.b16 %v1096, %v1092
        %v1509 = vpack.c.b16 %v1101, %v1097
        %v1510 = vpack.c.b16 %v1102, %v1098
        %v1511 = vpack.c.b16 %v1103, %v1099
        %v1512 = vpack.c.b16 %v1104, %v1100
        %v1513 = vpack.c.b16 %v1109, %v1105
        %v1514 = vpack.c.b16 %v1110, %v1106
        %v1515 = vpack.c.b16 %v1111, %v1107
        %v1516 = vpack.c.b16 %v1112, %v1108
        %v1517 = vpack.c.b16 %v1117, %v1113
        %v1518 = vpack.c.b16 %v1118, %v1114
        %v1519 = vpack.c.b16 %v1119, %v1115
        %v1520 = vpack.c.b16 %v1120, %v1116
        %v1521 = vpack.c.b16 %v1125, %v1121
        %v1522 = vpack.c.b16 %v1126, %v1122
        %v1523 = vpack.c.b16 %v1127, %v1123
        %v1524 = vpack.c.b16 %v1128, %v1124
        %v1525 = vpack.c.b16 %v1133, %v1129
        %v1526 = vpack.c.b16 %v1134, %v1130
        %v1527 = vpack.c.b16 %v1135, %v1131
        %v1528 = vpack.c.b16 %v1136, %v1132
        %v1529 = vpack.c.b16 %v1141, %v1137
        %v1530 = vpack.c.b16 %v1142, %v1138
        %v1531 = vpack.c.b16 %v1143, %v1139
        %v1532 = vpack.c.b16 %v1144, %v1140
        %v1533 = vpack.c.b16 %v1149, %v1145
        %v1534 = vpack.c.b16 %v1150, %v1146
        %v1535 = vpack.c.b16 %v1151, %v1147
        %v1536 = vpack.c.b16 %v1152, %v1148
        %v1537 = vpack.c.b16 %v1157, %v1153
        %v1538 = vpack.c.b16 %v1158, %v1154
        %v1539 = vpack.c.b16 %v1159, %v1155
        %v1540 = vpack.c.b16 %v1160, %v1156
        %v1541 = vpack.c.b16 %v1165, %v1161
        %v1542 = vpack.c.b16 %v1166, %v1162
        %v1543 = vpack.c.b16 %v1167, %v1163
        %v1544 = vpack.c.b16 %v1168, %v1164
        %v1545 = vpack.c.b16 %v1173, %v1169
        %v1546 = vpack.c.b16 %v1174, %v1170
        %v1547 = vpack.c.b16 %v1175, %v1171
        %v1548 = vpack.c.b16 %v1176, %v1172
        %v1549 = vpack.c.b16 %v1181, %v1177
        %v1550 = vpack.c.b16 %v1182, %v1178
        %v1551 = vpack.c.b16 %v1183, %v1179
        %v1552 = vpack.c.b16 %v1184, %v1180
        %v1553 = vpack.c.b16 %v1189, %v1185
        %v1554 = vpack.c.b16 %v1190, %v1186
        %v1555 = vpack.c.b16 %v1191, %v1187
        %v1556 = vpack.c.b16 %v1192, %v1188
        %v1557 = vpack.c.b16 %v1197, %v1193
        %v1558 = vpack.c.b16 %v1198, %v1194
        %v1559 = vpack.c.b16 %v1199, %v1195
        %v1560 = vpack.c.b16 %v1200, %v1196
        %v1561 = vpack.c.b16 %v1205, %v1201
        %v1562 = vpack.c.b16 %v1206, %v1202
        %v1563 = vpack.c.b16 %v1207, %v1203
        %v1564 = vpack.c.b16 %v1208, %v1204
        %v1565 = vpack.c.b16 %v1213, %v1209
        %v1566 = vpack.c.b16 %v1214, %v1210
        %v1567 = vpack.c.b16 %v1215, %v1211
        %v1568 = vpack.c.b16 %v1216, %v1212
        %v1569 = vpack.c.b16 %v1221, %v1217
        %v1570 = vpack.c.b16 %v1222, %v1218
        %v1571 = vpack.c.b16 %v1223, %v1219
        %v1572 = vpack.c.b16 %v1224, %v1220
        %v1573 = vpack.c.b16 %v1229, %v1225
        %v1574 = vpack.c.b16 %v1230, %v1226
        %v1575 = vpack.c.b16 %v1231, %v1227
        %v1576 = vpack.c.b16 %v1232, %v1228
        %v1577 = vpack.c.b16 %v1237, %v1233
        %v1578 = vpack.c.b16 %v1238, %v1234
        %v1579 = vpack.c.b16 %v1239, %v1235
        %v1580 = vpack.c.b16 %v1240, %v1236
        %v1581 = vpack.c.b16 %v1245, %v1241
        %v1582 = vpack.c.b16 %v1246, %v1242
        %v1583 = vpack.c.b16 %v1247, %v1243
        %v1584 = vpack.c.b16 %v1248, %v1244
        %v1585 = vpack.c.b16 %v1253, %v1249
        %v1586 = vpack.c.b16 %v1254, %v1250
        %v1587 = vpack.c.b16 %v1255, %v1251
        %v1588 = vpack.c.b16 %v1256, %v1252
        %v1589 = vpack.c.b16 %v1261, %v1257
        %v1590 = vpack.c.b16 %v1262, %v1258
        %v1591 = vpack.c.b16 %v1263, %v1259
        %v1592 = vpack.c.b16 %v1264, %v1260
        %v1593 = vpack.c.b16 %v1269, %v1265
        %v1594 = vpack.c.b16 %v1270, %v1266
        %v1595 = vpack.c.b16 %v1271, %v1267
        %v1596 = vpack.c.b16 %v1272, %v1268
        %v1597 = vpack.c.b16 %v1277, %v1273
        %v1598 = vpack.c.b16 %v1278, %v1274
        %v1599 = vpack.c.b16 %v1279, %v1275
        %v1600 = vpack.c.b16 %v1280, %v1276
        %v1601 = vpack.c.b16 %v1285, %v1281
        %v1602 = vpack.c.b16 %v1286, %v1282
        %v1603 = vpack.c.b16 %v1287, %v1283
        %v1604 = vpack.c.b16 %v1288, %v1284
        %v1605 = vpack.c.b16 %v1293, %v1289
        %v1606 = vpack.c.b16 %v1294, %v1290
        %v1607 = vpack.c.b16 %v1295, %v1291
        %v1608 = vpack.c.b16 %v1296, %v1292
        %v1609 = vpack.c.b16 %v1301, %v1297
        %v1610 = vpack.c.b16 %v1302, %v1298
        %v1611 = vpack.c.b16 %v1303, %v1299
        %v1612 = vpack.c.b16 %v1304, %v1300
        %v1613 = vpack.c.b16 %v1309, %v1305
        %v1614 = vpack.c.b16 %v1310, %v1306
        %v1615 = vpack.c.b16 %v1311, %v1307
        %v1616 = vpack.c.b16 %v1312, %v1308
        %v1617 = vpack.c.b16 %v1317, %v1313
        %v1618 = vpack.c.b16 %v1318, %v1314
        %v1619 = vpack.c.b16 %v1319, %v1315
        %v1620 = vpack.c.b16 %v1320, %v1316
        %v1621 = vpack.c.b16 %v1325, %v1321
        %v1622 = vpack.c.b16 %v1326, %v1322
        %v1623 = vpack.c.b16 %v1327, %v1323
        %v1624 = vpack.c.b16 %v1328, %v1324
        %v1625 = vpack.c.b16 %v1333, %v1329
        %v1626 = vpack.c.b16 %v1334, %v1330
        %v1627 = vpack.c.b16 %v1335, %v1331
        %v1628 = vpack.c.b16 %v1336, %v1332
        %v1629 = vpack.c.b16 %v1341, %v1337
        %v1630 = vpack.c.b16 %v1342, %v1338
        %v1631 = vpack.c.b16 %v1343, %v1339
        %v1632 = vpack.c.b16 %v1344, %v1340
        %v1633 = vpack.c.b16 %v1349, %v1345
        %v1634 = vpack.c.b16 %v1350, %v1346
        %v1635 = vpack.c.b16 %v1351, %v1347
        %v1636 = vpack.c.b16 %v1352, %v1348
        %v1637 = vpack.c.b16 %v1357, %v1353
        %v1638 = vpack.c.b16 %v1358, %v1354
        %v1639 = vpack.c.b16 %v1359, %v1355
        %v1640 = vpack.c.b16 %v1360, %v1356
        %v1641 = vpack.c.b16 %v1365, %v1361
        %v1642 = vpack.c.b16 %v1366, %v1362
        %v1643 = vpack.c.b16 %v1367, %v1363
        %v1644 = vpack.c.b16 %v1368, %v1364
        %v1645 = vpack.c.b16 %v1373, %v1369
        %v1646 = vpack.c.b16 %v1374, %v1370
        %v1647 = vpack.c.b16 %v1375, %v1371
        %v1648 = vpack.c.b16 %v1376, %v1372
        %v1649 = vpack.c.b16 %v1381, %v1377
        %v1650 = vpack.c.b16 %v1382, %v1378
        %v1651 = vpack.c.b16 %v1383, %v1379
        %v1652 = vpack.c.b16 %v1384, %v1380
        %v1653 = vpack.c.b16 %v1389, %v1385
        %v1654 = vpack.c.b16 %v1390, %v1386
        %v1655 = vpack.c.b16 %v1391, %v1387
        %v1656 = vpack.c.b16 %v1392, %v1388
        %v1657 = vpack.c.b16 %v1397, %v1393
        %v1658 = vpack.c.b16 %v1398, %v1394
        %v1659 = vpack.c.b16 %v1399, %v1395
        %v1660 = vpack.c.b16 %v1400, %v1396
        %v1661 = vpack.c.b16 %v1405, %v1401
        %v1662 = vpack.c.b16 %v1406, %v1402
        %v1663 = vpack.c.b16 %v1407, %v1403
        %v1664 = vpack.c.b16 %v1408, %v1404
        %1921 = vmatprep.subr.bf16.mxu0 %v1410
        %1922 = vmatpush1.bf16.msra.mxu0 %v1409
        %1923 = vmatprep.subr.bf16.mxu0 %v1414
        %1924 = vmatpush1.bf16.msra.mxu0 %v1413
        %1925 = vmatprep.subr.bf16.mxu0 %v1418
        %1926 = vmatpush1.bf16.msra.mxu0 %v1417
        %1927 = vmatprep.subr.bf16.mxu0 %v1422
        %1928 = vmatpush1.bf16.msra.mxu0 %v1421
        %1929 = vmatprep.subr.bf16.mxu0 %v1426
        %1930 = vmatpush1.bf16.msra.mxu0 %v1425
        %1931 = vmatprep.subr.bf16.mxu0 %v1430
        %1932 = vmatpush1.bf16.msra.mxu0 %v1429
        %1933 = vmatprep.subr.bf16.mxu0 %v1434
        %1934 = vmatpush1.bf16.msra.mxu0 %v1433
        %1935 = vmatprep.subr.bf16.mxu0 %v1438
        %1936 = vmatpush1.bf16.msra.mxu0 %v1437
        %1937 = vmatprep.subr.bf16.mxu0 %v1442
        %1938 = vmatpush1.bf16.msra.mxu0 %v1441
        %1939 = vmatprep.subr.bf16.mxu0 %v1446
        %1940 = vmatpush1.bf16.msra.mxu0 %v1445
        %1941 = vmatprep.subr.bf16.mxu0 %v1450
        %1942 = vmatpush1.bf16.msra.mxu0 %v1449
        %1943 = vmatprep.subr.bf16.mxu0 %v1454
        %1944 = vmatpush1.bf16.msra.mxu0 %v1453
        %1945 = vmatprep.subr.bf16.mxu0 %v1458
        %1946 = vmatpush1.bf16.msra.mxu0 %v1457
        %1947 = vmatprep.subr.bf16.mxu0 %v1462
        %1948 = vmatpush1.bf16.msra.mxu0 %v1461
        %1949 = vmatprep.subr.bf16.mxu0 %v1466
        %1950 = vmatpush1.bf16.msra.mxu0 %v1465
        %1951 = vmatprep.subr.bf16.mxu0 %v1470
        %1952 = vmatpush1.bf16.msra.mxu0 %v1469
        %1953 = vmatprep.mubr.bf16.mxu0 %v356
        %1954 = vmatmul.mubr.bf16.gmra.mrb[0].mxu0 %v355
        %v1955 = vpop.f32.mrb[0].mxu0
        %v1956 = vadd.f32 %v624, %v1955
        %v1957 = vpop.f32.mrb[0].mxu0
        %v1958 = vadd.f32 %v628, %v1957
        %v1959 = vpop.f32.mrb[0].mxu0
        %v1960 = vadd.f32 %v624, %v1959
        %v1961 = vpop.f32.mrb[0].mxu0
        %v1962 = vadd.f32 %v628, %v1961
        %1963 = vdwg.mxu0
        %1964 = vmatprep.subr.bf16.mxu0 %v1474
        %1965 = vmatpush1.bf16.msra.mxu0 %v1473
        %1966 = vmatprep.subr.bf16.mxu0 %v1478
        %1967 = vmatpush1.bf16.msra.mxu0 %v1477
        %1968 = vmatprep.subr.bf16.mxu0 %v1482
        %1969 = vmatpush1.bf16.msra.mxu0 %v1481
        %1970 = vmatprep.subr.bf16.mxu0 %v1486
        %1971 = vmatpush1.bf16.msra.mxu0 %v1485
        %1972 = vmatprep.subr.bf16.mxu0 %v1490
        %1973 = vmatpush1.bf16.msra.mxu0 %v1489
        %1974 = vmatprep.subr.bf16.mxu0 %v1494
        %1975 = vmatpush1.bf16.msra.mxu0 %v1493
        %1976 = vmatprep.subr.bf16.mxu0 %v1498
        %1977 = vmatpush1.bf16.msra.mxu0 %v1497
        %1978 = vmatprep.subr.bf16.mxu0 %v1502
        %1979 = vmatpush1.bf16.msra.mxu0 %v1501
        %1980 = vmatprep.subr.bf16.mxu0 %v1506
        %1981 = vmatpush1.bf16.msra.mxu0 %v1505
        %1982 = vmatprep.subr.bf16.mxu0 %v1510
        %1983 = vmatpush1.bf16.msra.mxu0 %v1509
        %1984 = vmatprep.subr.bf16.mxu0 %v1514
        %1985 = vmatpush1.bf16.msra.mxu0 %v1513
        %1986 = vmatprep.subr.bf16.mxu0 %v1518
        %1987 = vmatpush1.bf16.msra.mxu0 %v1517
        %1988 = vmatprep.subr.bf16.mxu0 %v1522
        %1989 = vmatpush1.bf16.msra.mxu0 %v1521
        %1990 = vmatprep.subr.bf16.mxu0 %v1526
        %1991 = vmatpush1.bf16.msra.mxu0 %v1525
        %1992 = vmatprep.subr.bf16.mxu0 %v1530
        %1993 = vmatpush1.bf16.msra.mxu0 %v1529
        %1994 = vmatprep.subr.bf16.mxu0 %v1534
        %1995 = vmatpush1.bf16.msra.mxu0 %v1533
        %1996 = vmatprep.mubr.bf16.mxu0 %v358
        %1997 = vmatmul.mubr.bf16.gmra.mrb[0].mxu0 %v357
        %v1998 = vpop.f32.mrb[0].mxu0
        %v1999 = vadd.f32 %v1956, %v1998
        %v2000 = vpop.f32.mrb[0].mxu0
        %v2001 = vadd.f32 %v1958, %v2000
        %v2002 = vpop.f32.mrb[0].mxu0
        %v2003 = vadd.f32 %v1960, %v2002
        %v2004 = vpop.f32.mrb[0].mxu0
        %v2005 = vadd.f32 %v1962, %v2004
        %2006 = vdwg.mxu0
        %2007 = vmatprep.subr.bf16.mxu0 %v1538
        %2008 = vmatpush1.bf16.msra.mxu0 %v1537
        %2009 = vmatprep.subr.bf16.mxu0 %v1542
        %2010 = vmatpush1.bf16.msra.mxu0 %v1541
        %2011 = vmatprep.subr.bf16.mxu0 %v1546
        %2012 = vmatpush1.bf16.msra.mxu0 %v1545
        %2013 = vmatprep.subr.bf16.mxu0 %v1550
        %2014 = vmatpush1.bf16.msra.mxu0 %v1549
        %2015 = vmatprep.subr.bf16.mxu0 %v1554
        %2016 = vmatpush1.bf16.msra.mxu0 %v1553
        %2017 = vmatprep.subr.bf16.mxu0 %v1558
        %2018 = vmatpush1.bf16.msra.mxu0 %v1557
        %2019 = vmatprep.subr.bf16.mxu0 %v1562
        %2020 = vmatpush1.bf16.msra.mxu0 %v1561
        %2021 = vmatprep.subr.bf16.mxu0 %v1566
        %2022 = vmatpush1.bf16.msra.mxu0 %v1565
        %2023 = vmatprep.subr.bf16.mxu0 %v1570
        %2024 = vmatpush1.bf16.msra.mxu0 %v1569
        %2025 = vmatprep.subr.bf16.mxu0 %v1574
        %2026 = vmatpush1.bf16.msra.mxu0 %v1573
        %2027 = vmatprep.subr.bf16.mxu0 %v1578
        %2028 = vmatpush1.bf16.msra.mxu0 %v1577
        %2029 = vmatprep.subr.bf16.mxu0 %v1582
        %2030 = vmatpush1.bf16.msra.mxu0 %v1581
        %2031 = vmatprep.subr.bf16.mxu0 %v1586
        %2032 = vmatpush1.bf16.msra.mxu0 %v1585
        %2033 = vmatprep.subr.bf16.mxu0 %v1590
        %2034 = vmatpush1.bf16.msra.mxu0 %v1589
        %2035 = vmatprep.subr.bf16.mxu0 %v1594
        %2036 = vmatpush1.bf16.msra.mxu0 %v1593
        %2037 = vmatprep.subr.bf16.mxu0 %v1598
        %2038 = vmatpush1.bf16.msra.mxu0 %v1597
        %2039 = vmatprep.mubr.bf16.mxu0 %v360
        %2040 = vmatmul.mubr.bf16.gmra.mrb[0].mxu0 %v359
        %v2041 = vpop.f32.mrb[0].mxu0
        %v2042 = vadd.f32 %v1999, %v2041
        %v2043 = vpop.f32.mrb[0].mxu0
        %v2044 = vadd.f32 %v2001, %v2043
        %v2045 = vpop.f32.mrb[0].mxu0
        %v2046 = vadd.f32 %v2003, %v2045
        %v2047 = vpop.f32.mrb[0].mxu0
        %v2048 = vadd.f32 %v2005, %v2047
        %2049 = vdwg.mxu0
        %2050 = vmatprep.subr.bf16.mxu0 %v1602
        %2051 = vmatpush1.bf16.msra.mxu0 %v1601
        %2052 = vmatprep.subr.bf16.mxu0 %v1606
        %2053 = vmatpush1.bf16.msra.mxu0 %v1605
        %2054 = vmatprep.subr.bf16.mxu0 %v1610
        %2055 = vmatpush1.bf16.msra.mxu0 %v1609
        %2056 = vmatprep.subr.bf16.mxu0 %v1614
        %2057 = vmatpush1.bf16.msra.mxu0 %v1613
        %2058 = vmatprep.subr.bf16.mxu0 %v1618
        %2059 = vmatpush1.bf16.msra.mxu0 %v1617
        %2060 = vmatprep.subr.bf16.mxu0 %v1622
        %2061 = vmatpush1.bf16.msra.mxu0 %v1621
        %2062 = vmatprep.subr.bf16.mxu0 %v1626
        %2063 = vmatpush1.bf16.msra.mxu0 %v1625
        %2064 = vmatprep.subr.bf16.mxu0 %v1630
        %2065 = vmatpush1.bf16.msra.mxu0 %v1629
        %2066 = vmatprep.subr.bf16.mxu0 %v1634
        %2067 = vmatpush1.bf16.msra.mxu0 %v1633
        %2068 = vmatprep.subr.bf16.mxu0 %v1638
        %2069 = vmatpush1.bf16.msra.mxu0 %v1637
        %2070 = vmatprep.subr.bf16.mxu0 %v1642
        %2071 = vmatpush1.bf16.msra.mxu0 %v1641
        %2072 = vmatprep.subr.bf16.mxu0 %v1646
        %2073 = vmatpush1.bf16.msra.mxu0 %v1645
        %2074 = vmatprep.subr.bf16.mxu0 %v1650
        %2075 = vmatpush1.bf16.msra.mxu0 %v1649
        %2076 = vmatprep.subr.bf16.mxu0 %v1654
        %2077 = vmatpush1.bf16.msra.mxu0 %v1653
        %2078 = vmatprep.subr.bf16.mxu0 %v1658
        %2079 = vmatpush1.bf16.msra.mxu0 %v1657
        %2080 = vmatprep.subr.bf16.mxu0 %v1662
        %2081 = vmatpush1.bf16.msra.mxu0 %v1661
        %2082 = vmatprep.mubr.bf16.mxu0 %v362
        %2083 = vmatmul.mubr.bf16.gmra.mrb[0].mxu0 %v361
        %v2084 = vpop.f32.mrb[0].mxu0
        %v2085 = vadd.f32 %v2042, %v2084
        %v2086 = vpop.f32.mrb[0].mxu0
        %v2087 = vadd.f32 %v2044, %v2086
        %v2088 = vpop.f32.mrb[0].mxu0
        %v2089 = vadd.f32 %v2046, %v2088
        %v2090 = vpop.f32.mrb[0].mxu0
        %v2091 = vadd.f32 %v2048, %v2090
        %2092 = vdwg.mxu0
        %2093 = vmatprep.subr.bf16.mxu0 %v1412
        %2094 = vmatpush1.bf16.msra.mxu0 %v1411
        %2095 = vmatprep.subr.bf16.mxu0 %v1416
        %2096 = vmatpush1.bf16.msra.mxu0 %v1415
        %2097 = vmatprep.subr.bf16.mxu0 %v1420
        %2098 = vmatpush1.bf16.msra.mxu0 %v1419
        %2099 = vmatprep.subr.bf16.mxu0 %v1424
        %2100 = vmatpush1.bf16.msra.mxu0 %v1423
        %2101 = vmatprep.subr.bf16.mxu0 %v1428
        %2102 = vmatpush1.bf16.msra.mxu0 %v1427
        %2103 = vmatprep.subr.bf16.mxu0 %v1432
        %2104 = vmatpush1.bf16.msra.mxu0 %v1431
        %2105 = vmatprep.subr.bf16.mxu0 %v1436
        %2106 = vmatpush1.bf16.msra.mxu0 %v1435
        %2107 = vmatprep.subr.bf16.mxu0 %v1440
        %2108 = vmatpush1.bf16.msra.mxu0 %v1439
        %2109 = vmatprep.subr.bf16.mxu0 %v1444
        %2110 = vmatpush1.bf16.msra.mxu0 %v1443
        %2111 = vmatprep.subr.bf16.mxu0 %v1448
        %2112 = vmatpush1.bf16.msra.mxu0 %v1447
        %2113 = vmatprep.subr.bf16.mxu0 %v1452
        %2114 = vmatpush1.bf16.msra.mxu0 %v1451
        %2115 = vmatprep.subr.bf16.mxu0 %v1456
        %2116 = vmatpush1.bf16.msra.mxu0 %v1455
        %2117 = vmatprep.subr.bf16.mxu0 %v1460
        %2118 = vmatpush1.bf16.msra.mxu0 %v1459
        %2119 = vmatprep.subr.bf16.mxu0 %v1464
        %2120 = vmatpush1.bf16.msra.mxu0 %v1463
        %2121 = vmatprep.subr.bf16.mxu0 %v1468
        %2122 = vmatpush1.bf16.msra.mxu0 %v1467
        %2123 = vmatprep.subr.bf16.mxu0 %v1472
        %2124 = vmatpush1.bf16.msra.mxu0 %v1471
        %2125 = vmatprep.mubr.bf16.mxu0 %v356
        %2126 = vmatmul.mubr.bf16.gmra.mrb[0].mxu0 %v355
        %v2127 = vpop.f32.mrb[0].mxu0
        %v2128 = vadd.f32 %v632, %v2127
        %v2129 = vpop.f32.mrb[0].mxu0
        %v2130 = vadd.f32 %v636, %v2129
        %v2131 = vpop.f32.mrb[0].mxu0
        %v2132 = vadd.f32 %v632, %v2131
        %v2133 = vpop.f32.mrb[0].mxu0
        %v2134 = vadd.f32 %v636, %v2133
        %2135 = vdwg.mxu0
        %2136 = vmatprep.subr.bf16.mxu0 %v1476
        %2137 = vmatpush1.bf16.msra.mxu0 %v1475
        %2138 = vmatprep.subr.bf16.mxu0 %v1480
        %2139 = vmatpush1.bf16.msra.mxu0 %v1479
        %2140 = vmatprep.subr.bf16.mxu0 %v1484
        %2141 = vmatpush1.bf16.msra.mxu0 %v1483
        %2142 = vmatprep.subr.bf16.mxu0 %v1488
        %2143 = vmatpush1.bf16.msra.mxu0 %v1487
        %2144 = vmatprep.subr.bf16.mxu0 %v1492
        %2145 = vmatpush1.bf16.msra.mxu0 %v1491
        %2146 = vmatprep.subr.bf16.mxu0 %v1496
        %2147 = vmatpush1.bf16.msra.mxu0 %v1495
        %2148 = vmatprep.subr.bf16.mxu0 %v1500
        %2149 = vmatpush1.bf16.msra.mxu0 %v1499
        %2150 = vmatprep.subr.bf16.mxu0 %v1504
        %2151 = vmatpush1.bf16.msra.mxu0 %v1503
        %2152 = vmatprep.subr.bf16.mxu0 %v1508
        %2153 = vmatpush1.bf16.msra.mxu0 %v1507
        %2154 = vmatprep.subr.bf16.mxu0 %v1512
        %2155 = vmatpush1.bf16.msra.mxu0 %v1511
        %2156 = vmatprep.subr.bf16.mxu0 %v1516
        %2157 = vmatpush1.bf16.msra.mxu0 %v1515
        %2158 = vmatprep.subr.bf16.mxu0 %v1520
        %2159 = vmatpush1.bf16.msra.mxu0 %v1519
        %2160 = vmatprep.subr.bf16.mxu0 %v1524
        %2161 = vmatpush1.bf16.msra.mxu0 %v1523
        %2162 = vmatprep.subr.bf16.mxu0 %v1528
        %2163 = vmatpush1.bf16.msra.mxu0 %v1527
        %2164 = vmatprep.subr.bf16.mxu0 %v1532
        %2165 = vmatpush1.bf16.msra.mxu0 %v1531
        %2166 = vmatprep.subr.bf16.mxu0 %v1536
        %2167 = vmatpush1.bf16.msra.mxu0 %v1535
        %2168 = vmatprep.mubr.bf16.mxu0 %v358
        %2169 = vmatmul.mubr.bf16.gmra.mrb[0].mxu0 %v357
        %v2170 = vpop.f32.mrb[0].mxu0
        %v2171 = vadd.f32 %v2128, %v2170
        %v2172 = vpop.f32.mrb[0].mxu0
        %v2173 = vadd.f32 %v2130, %v2172
        %v2174 = vpop.f32.mrb[0].mxu0
        %v2175 = vadd.f32 %v2132, %v2174
        %v2176 = vpop.f32.mrb[0].mxu0
        %v2177 = vadd.f32 %v2134, %v2176
        %2178 = vdwg.mxu0
        %2179 = vmatprep.subr.bf16.mxu0 %v1540
        %2180 = vmatpush1.bf16.msra.mxu0 %v1539
        %2181 = vmatprep.subr.bf16.mxu0 %v1544
        %2182 = vmatpush1.bf16.msra.mxu0 %v1543
        %2183 = vmatprep.subr.bf16.mxu0 %v1548
        %2184 = vmatpush1.bf16.msra.mxu0 %v1547
        %2185 = vmatprep.subr.bf16.mxu0 %v1552
        %2186 = vmatpush1.bf16.msra.mxu0 %v1551
        %2187 = vmatprep.subr.bf16.mxu0 %v1556
        %2188 = vmatpush1.bf16.msra.mxu0 %v1555
        %2189 = vmatprep.subr.bf16.mxu0 %v1560
        %2190 = vmatpush1.bf16.msra.mxu0 %v1559
        %2191 = vmatprep.subr.bf16.mxu0 %v1564
        %2192 = vmatpush1.bf16.msra.mxu0 %v1563
        %2193 = vmatprep.subr.bf16.mxu0 %v1568
        %2194 = vmatpush1.bf16.msra.mxu0 %v1567
        %2195 = vmatprep.subr.bf16.mxu0 %v1572
        %2196 = vmatpush1.bf16.msra.mxu0 %v1571
        %2197 = vmatprep.subr.bf16.mxu0 %v1576
        %2198 = vmatpush1.bf16.msra.mxu0 %v1575
        %2199 = vmatprep.subr.bf16.mxu0 %v1580
        %2200 = vmatpush1.bf16.msra.mxu0 %v1579
        %2201 = vmatprep.subr.bf16.mxu0 %v1584
        %2202 = vmatpush1.bf16.msra.mxu0 %v1583
        %2203 = vmatprep.subr.bf16.mxu0 %v1588
        %2204 = vmatpush1.bf16.msra.mxu0 %v1587
        %2205 = vmatprep.subr.bf16.mxu0 %v1592
        %2206 = vmatpush1.bf16.msra.mxu0 %v1591
        %2207 = vmatprep.subr.bf16.mxu0 %v1596
        %2208 = vmatpush1.bf16.msra.mxu0 %v1595
        %2209 = vmatprep.subr.bf16.mxu0 %v1600
        %2210 = vmatpush1.bf16.msra.mxu0 %v1599
        %2211 = vmatprep.mubr.bf16.mxu0 %v360
        %2212 = vmatmul.mubr.bf16.gmra.mrb[0].mxu0 %v359
        %v2213 = vpop.f32.mrb[0].mxu0
        %v2214 = vadd.f32 %v2171, %v2213
        %v2215 = vpop.f32.mrb[0].mxu0
        %v2216 = vadd.f32 %v2173, %v2215
        %v2217 = vpop.f32.mrb[0].mxu0
        %v2218 = vadd.f32 %v2175, %v2217
        %v2219 = vpop.f32.mrb[0].mxu0
        %v2220 = vadd.f32 %v2177, %v2219
        %2221 = vdwg.mxu0
        %2222 = vmatprep.subr.bf16.mxu0 %v1604
        %2223 = vmatpush1.bf16.msra.mxu0 %v1603
        %2224 = vmatprep.subr.bf16.mxu0 %v1608
        %2225 = vmatpush1.bf16.msra.mxu0 %v1607
        %2226 = vmatprep.subr.bf16.mxu0 %v1612
        %2227 = vmatpush1.bf16.msra.mxu0 %v1611
        %2228 = vmatprep.subr.bf16.mxu0 %v1616
        %2229 = vmatpush1.bf16.msra.mxu0 %v1615
        %2230 = vmatprep.subr.bf16.mxu0 %v1620
        %2231 = vmatpush1.bf16.msra.mxu0 %v1619
        %2232 = vmatprep.subr.bf16.mxu0 %v1624
        %2233 = vmatpush1.bf16.msra.mxu0 %v1623
        %2234 = vmatprep.subr.bf16.mxu0 %v1628
        %2235 = vmatpush1.bf16.msra.mxu0 %v1627
        %2236 = vmatprep.subr.bf16.mxu0 %v1632
        %2237 = vmatpush1.bf16.msra.mxu0 %v1631
        %2238 = vmatprep.subr.bf16.mxu0 %v1636
        %2239 = vmatpush1.bf16.msra.mxu0 %v1635
        %2240 = vmatprep.subr.bf16.mxu0 %v1640
        %2241 = vmatpush1.bf16.msra.mxu0 %v1639
        %2242 = vmatprep.subr.bf16.mxu0 %v1644
        %2243 = vmatpush1.bf16.msra.mxu0 %v1643
        %2244 = vmatprep.subr.bf16.mxu0 %v1648
        %2245 = vmatpush1.bf16.msra.mxu0 %v1647
        %2246 = vmatprep.subr.bf16.mxu0 %v1652
        %2247 = vmatpush1.bf16.msra.mxu0 %v1651
        %2248 = vmatprep.subr.bf16.mxu0 %v1656
        %2249 = vmatpush1.bf16.msra.mxu0 %v1655
        %2250 = vmatprep.subr.bf16.mxu0 %v1660
        %2251 = vmatpush1.bf16.msra.mxu0 %v1659
        %2252 = vmatprep.subr.bf16.mxu0 %v1664
        %2253 = vmatpush1.bf16.msra.mxu0 %v1663
        %2254 = vmatprep.mubr.bf16.mxu0 %v362
        %2255 = vmatmul.mubr.bf16.gmra.mrb[0].mxu0 %v361
        %v2256 = vpop.f32.mrb[0].mxu0
        %v2257 = vadd.f32 %v2214, %v2256
        %v2258 = vpop.f32.mrb[0].mxu0
        %v2259 = vadd.f32 %v2216, %v2258
        %v2260 = vpop.f32.mrb[0].mxu0
        %v2261 = vadd.f32 %v2218, %v2260
        %v2262 = vpop.f32.mrb[0].mxu0
        %v2263 = vadd.f32 %v2220, %v2262
        %2264 = vdwg.mxu0
        %v2265 = vmax.f32 %v2085, 0.0
        %v2266 = vmax.f32 %v2087, 0.0
        %v2267 = vmax.f32 %v2257, 0.0
        %v2268 = vmax.f32 %v2259, 0.0
        %v2269 = vmax.f32 %v2089, 0.0
        %v2270 = vmax.f32 %v2091, 0.0
        %v2271 = vmax.f32 %v2261, 0.0
        %v2272 = vmax.f32 %v2263, 0.0
        %v2273 = vpack.c.bf16 %v2269, %v2265
        %v2274 = vpack.c.bf16 %v2270, %v2266
        %v2275 = vpack.c.bf16 %v2271, %v2267
        %v2276 = vpack.c.bf16 %v2272, %v2268
        %v2277 = vld [vmem:[#allocation4] sm:$0xff]
        %v2278 = vld [vmem:[#allocation4 + $0x8] sm:$0xff]
        %v2279 = vld [vmem:[#allocation4 + $0x10] sm:$0xff]
        %v2280 = vld [vmem:[#allocation4 + $0x18] sm:$0xff]
        %v2281 = vld [vmem:[#allocation4 + $0x20] sm:$0xff]
        %v2282 = vld [vmem:[#allocation4 + $0x28] sm:$0xff]
        %v2283 = vld [vmem:[#allocation4 + $0x30] sm:$0xff]
        %v2284 = vld [vmem:[#allocation4 + $0x38] sm:$0xff]
        %v2285 = vld [vmem:[#allocation4 + $0x40] sm:$0xff]
        %v2286 = vld [vmem:[#allocation4 + $0x48] sm:$0xff]
        %v2287 = vld [vmem:[#allocation4 + $0x50] sm:$0xff]
        %v2288 = vld [vmem:[#allocation4 + $0x58] sm:$0xff]
        %v2289 = vld [vmem:[#allocation4 + $0x60] sm:$0xff]
        %v2290 = vld [vmem:[#allocation4 + $0x68] sm:$0xff]
        %v2291 = vld [vmem:[#allocation4 + $0x70] sm:$0xff]
        %v2292 = vld [vmem:[#allocation4 + $0x78] sm:$0xff]
        %v2293 = vld [vmem:[#allocation4 + $0x80] sm:$0xff]
        %v2294 = vld [vmem:[#allocation4 + $0x88] sm:$0xff]
        %v2295 = vld [vmem:[#allocation4 + $0x90] sm:$0xff]
        %v2296 = vld [vmem:[#allocation4 + $0x98] sm:$0xff]
        %v2297 = vld [vmem:[#allocation4 + $0xa0] sm:$0xff]
        %v2298 = vld [vmem:[#allocation4 + $0xa8] sm:$0xff]
        %v2299 = vld [vmem:[#allocation4 + $0xb0] sm:$0xff]
        %v2300 = vld [vmem:[#allocation4 + $0xb8] sm:$0xff]
        %v2301 = vld [vmem:[#allocation4 + $0xc0] sm:$0xff]
        %v2302 = vld [vmem:[#allocation4 + $0xc8] sm:$0xff]
        %v2303 = vld [vmem:[#allocation4 + $0xd0] sm:$0xff]
        %v2304 = vld [vmem:[#allocation4 + $0xd8] sm:$0xff]
        %v2305 = vld [vmem:[#allocation4 + $0xe0] sm:$0xff]
        %v2306 = vld [vmem:[#allocation4 + $0xe8] sm:$0xff]
        %v2307 = vld [vmem:[#allocation4 + $0xf0] sm:$0xff]
        %v2308 = vld [vmem:[#allocation4 + $0xf8] sm:$0xff]
        %v2309 = vld [vmem:[#allocation4 + $0x100] sm:$0xff]
        %v2310 = vld [vmem:[#allocation4 + $0x108] sm:$0xff]
        %v2311 = vld [vmem:[#allocation4 + $0x110] sm:$0xff]
        %v2312 = vld [vmem:[#allocation4 + $0x118] sm:$0xff]
        %v2313 = vld [vmem:[#allocation4 + $0x120] sm:$0xff]
        %v2314 = vld [vmem:[#allocation4 + $0x128] sm:$0xff]
        %v2315 = vld [vmem:[#allocation4 + $0x130] sm:$0xff]
        %v2316 = vld [vmem:[#allocation4 + $0x138] sm:$0xff]
        %v2317 = vld [vmem:[#allocation4 + $0x140] sm:$0xff]
        %v2318 = vld [vmem:[#allocation4 + $0x148] sm:$0xff]
        %v2319 = vld [vmem:[#allocation4 + $0x150] sm:$0xff]
        %v2320 = vld [vmem:[#allocation4 + $0x158] sm:$0xff]
        %v2321 = vld [vmem:[#allocation4 + $0x160] sm:$0xff]
        %v2322 = vld [vmem:[#allocation4 + $0x168] sm:$0xff]
        %v2323 = vld [vmem:[#allocation4 + $0x170] sm:$0xff]
        %v2324 = vld [vmem:[#allocation4 + $0x178] sm:$0xff]
        %v2325 = vld [vmem:[#allocation4 + $0x180] sm:$0xff]
        %v2326 = vld [vmem:[#allocation4 + $0x188] sm:$0xff]
        %v2327 = vld [vmem:[#allocation4 + $0x190] sm:$0xff]
        %v2328 = vld [vmem:[#allocation4 + $0x198] sm:$0xff]
        %v2329 = vld [vmem:[#allocation4 + $0x1a0] sm:$0xff]
        %v2330 = vld [vmem:[#allocation4 + $0x1a8] sm:$0xff]
        %v2331 = vld [vmem:[#allocation4 + $0x1b0] sm:$0xff]
        %v2332 = vld [vmem:[#allocation4 + $0x1b8] sm:$0xff]
        %v2333 = vld [vmem:[#allocation4 + $0x1c0] sm:$0xff]
        %v2334 = vld [vmem:[#allocation4 + $0x1c8] sm:$0xff]
        %v2335 = vld [vmem:[#allocation4 + $0x1d0] sm:$0xff]
        %v2336 = vld [vmem:[#allocation4 + $0x1d8] sm:$0xff]
        %v2337 = vld [vmem:[#allocation4 + $0x1e0] sm:$0xff]
        %v2338 = vld [vmem:[#allocation4 + $0x1e8] sm:$0xff]
        %v2339 = vld [vmem:[#allocation4 + $0x1f0] sm:$0xff]
        %v2340 = vld [vmem:[#allocation4 + $0x1f8] sm:$0xff]
        %v2341 = vld [vmem:[#allocation4 + $0x200] sm:$0xff]
        %v2342 = vld [vmem:[#allocation4 + $0x208] sm:$0xff]
        %v2343 = vld [vmem:[#allocation4 + $0x210] sm:$0xff]
        %v2344 = vld [vmem:[#allocation4 + $0x218] sm:$0xff]
        %v2345 = vld [vmem:[#allocation4 + $0x220] sm:$0xff]
        %v2346 = vld [vmem:[#allocation4 + $0x228] sm:$0xff]
        %v2347 = vld [vmem:[#allocation4 + $0x230] sm:$0xff]
        %v2348 = vld [vmem:[#allocation4 + $0x238] sm:$0xff]
        %v2349 = vld [vmem:[#allocation4 + $0x240] sm:$0xff]
        %v2350 = vld [vmem:[#allocation4 + $0x248] sm:$0xff]
        %v2351 = vld [vmem:[#allocation4 + $0x250] sm:$0xff]
        %v2352 = vld [vmem:[#allocation4 + $0x258] sm:$0xff]
        %v2353 = vld [vmem:[#allocation4 + $0x260] sm:$0xff]
        %v2354 = vld [vmem:[#allocation4 + $0x268] sm:$0xff]
        %v2355 = vld [vmem:[#allocation4 + $0x270] sm:$0xff]
        %v2356 = vld [vmem:[#allocation4 + $0x278] sm:$0xff]
        %v2357 = vld [vmem:[#allocation4 + $0x280] sm:$0xff]
        %v2358 = vld [vmem:[#allocation4 + $0x288] sm:$0xff]
        %v2359 = vld [vmem:[#allocation4 + $0x290] sm:$0xff]
        %v2360 = vld [vmem:[#allocation4 + $0x298] sm:$0xff]
        %v2361 = vld [vmem:[#allocation4 + $0x2a0] sm:$0xff]
        %v2362 = vld [vmem:[#allocation4 + $0x2a8] sm:$0xff]
        %v2363 = vld [vmem:[#allocation4 + $0x2b0] sm:$0xff]
        %v2364 = vld [vmem:[#allocation4 + $0x2b8] sm:$0xff]
        %v2365 = vld [vmem:[#allocation4 + $0x2c0] sm:$0xff]
        %v2366 = vld [vmem:[#allocation4 + $0x2c8] sm:$0xff]
        %v2367 = vld [vmem:[#allocation4 + $0x2d0] sm:$0xff]
        %v2368 = vld [vmem:[#allocation4 + $0x2d8] sm:$0xff]
        %v2369 = vld [vmem:[#allocation4 + $0x2e0] sm:$0xff]
        %v2370 = vld [vmem:[#allocation4 + $0x2e8] sm:$0xff]
        %v2371 = vld [vmem:[#allocation4 + $0x2f0] sm:$0xff]
        %v2372 = vld [vmem:[#allocation4 + $0x2f8] sm:$0xff]
        %v2373 = vld [vmem:[#allocation4 + $0x300] sm:$0xff]
        %v2374 = vld [vmem:[#allocation4 + $0x308] sm:$0xff]
        %v2375 = vld [vmem:[#allocation4 + $0x310] sm:$0xff]
        %v2376 = vld [vmem:[#allocation4 + $0x318] sm:$0xff]
        %v2377 = vld [vmem:[#allocation4 + $0x320] sm:$0xff]
        %v2378 = vld [vmem:[#allocation4 + $0x328] sm:$0xff]
        %v2379 = vld [vmem:[#allocation4 + $0x330] sm:$0xff]
        %v2380 = vld [vmem:[#allocation4 + $0x338] sm:$0xff]
        %v2381 = vld [vmem:[#allocation4 + $0x340] sm:$0xff]
        %v2382 = vld [vmem:[#allocation4 + $0x348] sm:$0xff]
        %v2383 = vld [vmem:[#allocation4 + $0x350] sm:$0xff]
        %v2384 = vld [vmem:[#allocation4 + $0x358] sm:$0xff]
        %v2385 = vld [vmem:[#allocation4 + $0x360] sm:$0xff]
        %v2386 = vld [vmem:[#allocation4 + $0x368] sm:$0xff]
        %v2387 = vld [vmem:[#allocation4 + $0x370] sm:$0xff]
        %v2388 = vld [vmem:[#allocation4 + $0x378] sm:$0xff]
        %v2389 = vld [vmem:[#allocation4 + $0x380] sm:$0xff]
        %v2390 = vld [vmem:[#allocation4 + $0x388] sm:$0xff]
        %v2391 = vld [vmem:[#allocation4 + $0x390] sm:$0xff]
        %v2392 = vld [vmem:[#allocation4 + $0x398] sm:$0xff]
        %v2393 = vld [vmem:[#allocation4 + $0x3a0] sm:$0xff]
        %v2394 = vld [vmem:[#allocation4 + $0x3a8] sm:$0xff]
        %v2395 = vld [vmem:[#allocation4 + $0x3b0] sm:$0xff]
        %v2396 = vld [vmem:[#allocation4 + $0x3b8] sm:$0xff]
        %v2397 = vld [vmem:[#allocation4 + $0x3c0] sm:$0xff]
        %v2398 = vld [vmem:[#allocation4 + $0x3c8] sm:$0xff]
        %v2399 = vld [vmem:[#allocation4 + $0x3d0] sm:$0xff]
        %v2400 = vld [vmem:[#allocation4 + $0x3d8] sm:$0xff]
        %v2401 = vld [vmem:[#allocation4 + $0x3e0] sm:$0xff]
        %v2402 = vld [vmem:[#allocation4 + $0x3e8] sm:$0xff]
        %v2403 = vld [vmem:[#allocation4 + $0x3f0] sm:$0xff]
        %v2404 = vld [vmem:[#allocation4 + $0x3f8] sm:$0xff]
        %v2405 = vld [vmem:[%s4] sm:$0xf]
        %v2407 = vlaneseq
        %v2408 = vshrl.u32 %v2407, 7
        %v2409 = vsub.s32 0, %v2408
        %v2410 = vrot.slane %v2405, %v2409
        %v2411 = vlaneseq
        %v2412 = vshrl.u32 %v2411, 7
        %v2413 = vsub.s32 1, %v2412
        %v2414 = vrot.slane %v2405, %v2413
        %v2415 = vlaneseq
        %v2416 = vshrl.u32 %v2415, 7
        %v2417 = vsub.s32 2, %v2416
        %v2418 = vrot.slane %v2405, %v2417
        %v2419 = vlaneseq
        %v2420 = vshrl.u32 %v2419, 7
        %v2421 = vsub.s32 3, %v2420
        %v2422 = vrot.slane %v2405, %v2421
        %v2555 = vunpack.c.l.b16 %v2277
        %v2556 = vunpack.c.h.b16 %v2277
        %v2557 = vunpack.c.l.b16 %v2278
        %v2558 = vunpack.c.h.b16 %v2278
        %v2559 = vunpack.c.l.b16 %v2279
        %v2560 = vunpack.c.h.b16 %v2279
        %v2561 = vunpack.c.l.b16 %v2280
        %v2562 = vunpack.c.h.b16 %v2280
        %v2563 = vunpack.c.l.b16 %v2281
        %v2564 = vunpack.c.h.b16 %v2281
        %v2565 = vunpack.c.l.b16 %v2282
        %v2566 = vunpack.c.h.b16 %v2282
        %v2567 = vunpack.c.l.b16 %v2283
        %v2568 = vunpack.c.h.b16 %v2283
        %v2569 = vunpack.c.l.b16 %v2284
        %v2570 = vunpack.c.h.b16 %v2284
        %v2571 = vunpack.c.l.b16 %v2285
        %v2572 = vunpack.c.h.b16 %v2285
        %v2573 = vunpack.c.l.b16 %v2286
        %v2574 = vunpack.c.h.b16 %v2286
        %v2575 = vunpack.c.l.b16 %v2287
        %v2576 = vunpack.c.h.b16 %v2287
        %v2577 = vunpack.c.l.b16 %v2288
        %v2578 = vunpack.c.h.b16 %v2288
        %v2579 = vunpack.c.l.b16 %v2289
        %v2580 = vunpack.c.h.b16 %v2289
        %v2581 = vunpack.c.l.b16 %v2290
        %v2582 = vunpack.c.h.b16 %v2290
        %v2583 = vunpack.c.l.b16 %v2291
        %v2584 = vunpack.c.h.b16 %v2291
        %v2585 = vunpack.c.l.b16 %v2292
        %v2586 = vunpack.c.h.b16 %v2292
        %v2587 = vunpack.c.l.b16 %v2293
        %v2588 = vunpack.c.h.b16 %v2293
        %v2589 = vunpack.c.l.b16 %v2294
        %v2590 = vunpack.c.h.b16 %v2294
        %v2591 = vunpack.c.l.b16 %v2295
        %v2592 = vunpack.c.h.b16 %v2295
        %v2593 = vunpack.c.l.b16 %v2296
        %v2594 = vunpack.c.h.b16 %v2296
        %v2595 = vunpack.c.l.b16 %v2297
        %v2596 = vunpack.c.h.b16 %v2297
        %v2597 = vunpack.c.l.b16 %v2298
        %v2598 = vunpack.c.h.b16 %v2298
        %v2599 = vunpack.c.l.b16 %v2299
        %v2600 = vunpack.c.h.b16 %v2299
        %v2601 = vunpack.c.l.b16 %v2300
        %v2602 = vunpack.c.h.b16 %v2300
        %v2603 = vunpack.c.l.b16 %v2301
        %v2604 = vunpack.c.h.b16 %v2301
        %v2605 = vunpack.c.l.b16 %v2302
        %v2606 = vunpack.c.h.b16 %v2302
        %v2607 = vunpack.c.l.b16 %v2303
        %v2608 = vunpack.c.h.b16 %v2303
        %v2609 = vunpack.c.l.b16 %v2304
        %v2610 = vunpack.c.h.b16 %v2304
        %v2611 = vunpack.c.l.b16 %v2305
        %v2612 = vunpack.c.h.b16 %v2305
        %v2613 = vunpack.c.l.b16 %v2306
        %v2614 = vunpack.c.h.b16 %v2306
        %v2615 = vunpack.c.l.b16 %v2307
        %v2616 = vunpack.c.h.b16 %v2307
        %v2617 = vunpack.c.l.b16 %v2308
        %v2618 = vunpack.c.h.b16 %v2308
        %v2619 = vunpack.c.l.b16 %v2309
        %v2620 = vunpack.c.h.b16 %v2309
        %v2621 = vunpack.c.l.b16 %v2310
        %v2622 = vunpack.c.h.b16 %v2310
        %v2623 = vunpack.c.l.b16 %v2311
        %v2624 = vunpack.c.h.b16 %v2311
        %v2625 = vunpack.c.l.b16 %v2312
        %v2626 = vunpack.c.h.b16 %v2312
        %v2627 = vunpack.c.l.b16 %v2313
        %v2628 = vunpack.c.h.b16 %v2313
        %v2629 = vunpack.c.l.b16 %v2314
        %v2630 = vunpack.c.h.b16 %v2314
        %v2631 = vunpack.c.l.b16 %v2315
        %v2632 = vunpack.c.h.b16 %v2315
        %v2633 = vunpack.c.l.b16 %v2316
        %v2634 = vunpack.c.h.b16 %v2316
        %v2635 = vunpack.c.l.b16 %v2317
        %v2636 = vunpack.c.h.b16 %v2317
        %v2637 = vunpack.c.l.b16 %v2318
        %v2638 = vunpack.c.h.b16 %v2318
        %v2639 = vunpack.c.l.b16 %v2319
        %v2640 = vunpack.c.h.b16 %v2319
        %v2641 = vunpack.c.l.b16 %v2320
        %v2642 = vunpack.c.h.b16 %v2320
        %v2643 = vunpack.c.l.b16 %v2321
        %v2644 = vunpack.c.h.b16 %v2321
        %v2645 = vunpack.c.l.b16 %v2322
        %v2646 = vunpack.c.h.b16 %v2322
        %v2647 = vunpack.c.l.b16 %v2323
        %v2648 = vunpack.c.h.b16 %v2323
        %v2649 = vunpack.c.l.b16 %v2324
        %v2650 = vunpack.c.h.b16 %v2324
        %v2651 = vunpack.c.l.b16 %v2325
        %v2652 = vunpack.c.h.b16 %v2325
        %v2653 = vunpack.c.l.b16 %v2326
        %v2654 = vunpack.c.h.b16 %v2326
        %v2655 = vunpack.c.l.b16 %v2327
        %v2656 = vunpack.c.h.b16 %v2327
        %v2657 = vunpack.c.l.b16 %v2328
        %v2658 = vunpack.c.h.b16 %v2328
        %v2659 = vunpack.c.l.b16 %v2329
        %v2660 = vunpack.c.h.b16 %v2329
        %v2661 = vunpack.c.l.b16 %v2330
        %v2662 = vunpack.c.h.b16 %v2330
        %v2663 = vunpack.c.l.b16 %v2331
        %v2664 = vunpack.c.h.b16 %v2331
        %v2665 = vunpack.c.l.b16 %v2332
        %v2666 = vunpack.c.h.b16 %v2332
        %v2667 = vunpack.c.l.b16 %v2333
        %v2668 = vunpack.c.h.b16 %v2333
        %v2669 = vunpack.c.l.b16 %v2334
        %v2670 = vunpack.c.h.b16 %v2334
        %v2671 = vunpack.c.l.b16 %v2335
        %v2672 = vunpack.c.h.b16 %v2335
        %v2673 = vunpack.c.l.b16 %v2336
        %v2674 = vunpack.c.h.b16 %v2336
        %v2675 = vunpack.c.l.b16 %v2337
        %v2676 = vunpack.c.h.b16 %v2337
        %v2677 = vunpack.c.l.b16 %v2338
        %v2678 = vunpack.c.h.b16 %v2338
        %v2679 = vunpack.c.l.b16 %v2339
        %v2680 = vunpack.c.h.b16 %v2339
        %v2681 = vunpack.c.l.b16 %v2340
        %v2682 = vunpack.c.h.b16 %v2340
        %v2683 = vunpack.c.l.b16 %v2341
        %v2684 = vunpack.c.h.b16 %v2341
        %v2685 = vunpack.c.l.b16 %v2342
        %v2686 = vunpack.c.h.b16 %v2342
        %v2687 = vunpack.c.l.b16 %v2343
        %v2688 = vunpack.c.h.b16 %v2343
        %v2689 = vunpack.c.l.b16 %v2344
        %v2690 = vunpack.c.h.b16 %v2344
        %v2691 = vunpack.c.l.b16 %v2345
        %v2692 = vunpack.c.h.b16 %v2345
        %v2693 = vunpack.c.l.b16 %v2346
        %v2694 = vunpack.c.h.b16 %v2346
        %v2695 = vunpack.c.l.b16 %v2347
        %v2696 = vunpack.c.h.b16 %v2347
        %v2697 = vunpack.c.l.b16 %v2348
        %v2698 = vunpack.c.h.b16 %v2348
        %v2699 = vunpack.c.l.b16 %v2349
        %v2700 = vunpack.c.h.b16 %v2349
        %v2701 = vunpack.c.l.b16 %v2350
        %v2702 = vunpack.c.h.b16 %v2350
        %v2703 = vunpack.c.l.b16 %v2351
        %v2704 = vunpack.c.h.b16 %v2351
        %v2705 = vunpack.c.l.b16 %v2352
        %v2706 = vunpack.c.h.b16 %v2352
        %v2707 = vunpack.c.l.b16 %v2353
        %v2708 = vunpack.c.h.b16 %v2353
        %v2709 = vunpack.c.l.b16 %v2354
        %v2710 = vunpack.c.h.b16 %v2354
        %v2711 = vunpack.c.l.b16 %v2355
        %v2712 = vunpack.c.h.b16 %v2355
        %v2713 = vunpack.c.l.b16 %v2356
        %v2714 = vunpack.c.h.b16 %v2356
        %v2715 = vunpack.c.l.b16 %v2357
        %v2716 = vunpack.c.h.b16 %v2357
        %v2717 = vunpack.c.l.b16 %v2358
        %v2718 = vunpack.c.h.b16 %v2358
        %v2719 = vunpack.c.l.b16 %v2359
        %v2720 = vunpack.c.h.b16 %v2359
        %v2721 = vunpack.c.l.b16 %v2360
        %v2722 = vunpack.c.h.b16 %v2360
        %v2723 = vunpack.c.l.b16 %v2361
        %v2724 = vunpack.c.h.b16 %v2361
        %v2725 = vunpack.c.l.b16 %v2362
        %v2726 = vunpack.c.h.b16 %v2362
        %v2727 = vunpack.c.l.b16 %v2363
        %v2728 = vunpack.c.h.b16 %v2363
        %v2729 = vunpack.c.l.b16 %v2364
        %v2730 = vunpack.c.h.b16 %v2364
        %v2731 = vunpack.c.l.b16 %v2365
        %v2732 = vunpack.c.h.b16 %v2365
        %v2733 = vunpack.c.l.b16 %v2366
        %v2734 = vunpack.c.h.b16 %v2366
        %v2735 = vunpack.c.l.b16 %v2367
        %v2736 = vunpack.c.h.b16 %v2367
        %v2737 = vunpack.c.l.b16 %v2368
        %v2738 = vunpack.c.h.b16 %v2368
        %v2739 = vunpack.c.l.b16 %v2369
        %v2740 = vunpack.c.h.b16 %v2369
        %v2741 = vunpack.c.l.b16 %v2370
        %v2742 = vunpack.c.h.b16 %v2370
        %v2743 = vunpack.c.l.b16 %v2371
        %v2744 = vunpack.c.h.b16 %v2371
        %v2745 = vunpack.c.l.b16 %v2372
        %v2746 = vunpack.c.h.b16 %v2372
        %v2747 = vunpack.c.l.b16 %v2373
        %v2748 = vunpack.c.h.b16 %v2373
        %v2749 = vunpack.c.l.b16 %v2374
        %v2750 = vunpack.c.h.b16 %v2374
        %v2751 = vunpack.c.l.b16 %v2375
        %v2752 = vunpack.c.h.b16 %v2375
        %v2753 = vunpack.c.l.b16 %v2376
        %v2754 = vunpack.c.h.b16 %v2376
        %v2755 = vunpack.c.l.b16 %v2377
        %v2756 = vunpack.c.h.b16 %v2377
        %v2757 = vunpack.c.l.b16 %v2378
        %v2758 = vunpack.c.h.b16 %v2378
        %v2759 = vunpack.c.l.b16 %v2379
        %v2760 = vunpack.c.h.b16 %v2379
        %v2761 = vunpack.c.l.b16 %v2380
        %v2762 = vunpack.c.h.b16 %v2380
        %v2763 = vunpack.c.l.b16 %v2381
        %v2764 = vunpack.c.h.b16 %v2381
        %v2765 = vunpack.c.l.b16 %v2382
        %v2766 = vunpack.c.h.b16 %v2382
        %v2767 = vunpack.c.l.b16 %v2383
        %v2768 = vunpack.c.h.b16 %v2383
        %v2769 = vunpack.c.l.b16 %v2384
        %v2770 = vunpack.c.h.b16 %v2384
        %v2771 = vunpack.c.l.b16 %v2385
        %v2772 = vunpack.c.h.b16 %v2385
        %v2773 = vunpack.c.l.b16 %v2386
        %v2774 = vunpack.c.h.b16 %v2386
        %v2775 = vunpack.c.l.b16 %v2387
        %v2776 = vunpack.c.h.b16 %v2387
        %v2777 = vunpack.c.l.b16 %v2388
        %v2778 = vunpack.c.h.b16 %v2388
        %v2779 = vunpack.c.l.b16 %v2389
        %v2780 = vunpack.c.h.b16 %v2389
        %v2781 = vunpack.c.l.b16 %v2390
        %v2782 = vunpack.c.h.b16 %v2390
        %v2783 = vunpack.c.l.b16 %v2391
        %v2784 = vunpack.c.h.b16 %v2391
        %v2785 = vunpack.c.l.b16 %v2392
        %v2786 = vunpack.c.h.b16 %v2392
        %v2787 = vunpack.c.l.b16 %v2393
        %v2788 = vunpack.c.h.b16 %v2393
        %v2789 = vunpack.c.l.b16 %v2394
        %v2790 = vunpack.c.h.b16 %v2394
        %v2791 = vunpack.c.l.b16 %v2395
        %v2792 = vunpack.c.h.b16 %v2395
        %v2793 = vunpack.c.l.b16 %v2396
        %v2794 = vunpack.c.h.b16 %v2396
        %v2795 = vunpack.c.l.b16 %v2397
        %v2796 = vunpack.c.h.b16 %v2397
        %v2797 = vunpack.c.l.b16 %v2398
        %v2798 = vunpack.c.h.b16 %v2398
        %v2799 = vunpack.c.l.b16 %v2399
        %v2800 = vunpack.c.h.b16 %v2399
        %v2801 = vunpack.c.l.b16 %v2400
        %v2802 = vunpack.c.h.b16 %v2400
        %v2803 = vunpack.c.l.b16 %v2401
        %v2804 = vunpack.c.h.b16 %v2401
        %v2805 = vunpack.c.l.b16 %v2402
        %v2806 = vunpack.c.h.b16 %v2402
        %v2807 = vunpack.c.l.b16 %v2403
        %v2808 = vunpack.c.h.b16 %v2403
        %v2809 = vunpack.c.l.b16 %v2404
        %v2810 = vunpack.c.h.b16 %v2404
        %v2811 = vpack.c.b16 %v2559, %v2555
        %v2812 = vpack.c.b16 %v2560, %v2556
        %v2813 = vpack.c.b16 %v2561, %v2557
        %v2814 = vpack.c.b16 %v2562, %v2558
        %v2815 = vpack.c.b16 %v2567, %v2563
        %v2816 = vpack.c.b16 %v2568, %v2564
        %v2817 = vpack.c.b16 %v2569, %v2565
        %v2818 = vpack.c.b16 %v2570, %v2566
        %v2819 = vpack.c.b16 %v2575, %v2571
        %v2820 = vpack.c.b16 %v2576, %v2572
        %v2821 = vpack.c.b16 %v2577, %v2573
        %v2822 = vpack.c.b16 %v2578, %v2574
        %v2823 = vpack.c.b16 %v2583, %v2579
        %v2824 = vpack.c.b16 %v2584, %v2580
        %v2825 = vpack.c.b16 %v2585, %v2581
        %v2826 = vpack.c.b16 %v2586, %v2582
        %v2827 = vpack.c.b16 %v2591, %v2587
        %v2828 = vpack.c.b16 %v2592, %v2588
        %v2829 = vpack.c.b16 %v2593, %v2589
        %v2830 = vpack.c.b16 %v2594, %v2590
        %v2831 = vpack.c.b16 %v2599, %v2595
        %v2832 = vpack.c.b16 %v2600, %v2596
        %v2833 = vpack.c.b16 %v2601, %v2597
        %v2834 = vpack.c.b16 %v2602, %v2598
        %v2835 = vpack.c.b16 %v2607, %v2603
        %v2836 = vpack.c.b16 %v2608, %v2604
        %v2837 = vpack.c.b16 %v2609, %v2605
        %v2838 = vpack.c.b16 %v2610, %v2606
        %v2839 = vpack.c.b16 %v2615, %v2611
        %v2840 = vpack.c.b16 %v2616, %v2612
        %v2841 = vpack.c.b16 %v2617, %v2613
        %v2842 = vpack.c.b16 %v2618, %v2614
        %v2843 = vpack.c.b16 %v2623, %v2619
        %v2844 = vpack.c.b16 %v2624, %v2620
        %v2845 = vpack.c.b16 %v2625, %v2621
        %v2846 = vpack.c.b16 %v2626, %v2622
        %v2847 = vpack.c.b16 %v2631, %v2627
        %v2848 = vpack.c.b16 %v2632, %v2628
        %v2849 = vpack.c.b16 %v2633, %v2629
        %v2850 = vpack.c.b16 %v2634, %v2630
        %v2851 = vpack.c.b16 %v2639, %v2635
        %v2852 = vpack.c.b16 %v2640, %v2636
        %v2853 = vpack.c.b16 %v2641, %v2637
        %v2854 = vpack.c.b16 %v2642, %v2638
        %v2855 = vpack.c.b16 %v2647, %v2643
        %v2856 = vpack.c.b16 %v2648, %v2644
        %v2857 = vpack.c.b16 %v2649, %v2645
        %v2858 = vpack.c.b16 %v2650, %v2646
        %v2859 = vpack.c.b16 %v2655, %v2651
        %v2860 = vpack.c.b16 %v2656, %v2652
        %v2861 = vpack.c.b16 %v2657, %v2653
        %v2862 = vpack.c.b16 %v2658, %v2654
        %v2863 = vpack.c.b16 %v2663, %v2659
        %v2864 = vpack.c.b16 %v2664, %v2660
        %v2865 = vpack.c.b16 %v2665, %v2661
        %v2866 = vpack.c.b16 %v2666, %v2662
        %v2867 = vpack.c.b16 %v2671, %v2667
        %v2868 = vpack.c.b16 %v2672, %v2668
        %v2869 = vpack.c.b16 %v2673, %v2669
        %v2870 = vpack.c.b16 %v2674, %v2670
        %v2871 = vpack.c.b16 %v2679, %v2675
        %v2872 = vpack.c.b16 %v2680, %v2676
        %v2873 = vpack.c.b16 %v2681, %v2677
        %v2874 = vpack.c.b16 %v2682, %v2678
        %v2875 = vpack.c.b16 %v2687, %v2683
        %v2876 = vpack.c.b16 %v2688, %v2684
        %v2877 = vpack.c.b16 %v2689, %v2685
        %v2878 = vpack.c.b16 %v2690, %v2686
        %v2879 = vpack.c.b16 %v2695, %v2691
        %v2880 = vpack.c.b16 %v2696, %v2692
        %v2881 = vpack.c.b16 %v2697, %v2693
        %v2882 = vpack.c.b16 %v2698, %v2694
        %v2883 = vpack.c.b16 %v2703, %v2699
        %v2884 = vpack.c.b16 %v2704, %v2700
        %v2885 = vpack.c.b16 %v2705, %v2701
        %v2886 = vpack.c.b16 %v2706, %v2702
        %v2887 = vpack.c.b16 %v2711, %v2707
        %v2888 = vpack.c.b16 %v2712, %v2708
        %v2889 = vpack.c.b16 %v2713, %v2709
        %v2890 = vpack.c.b16 %v2714, %v2710
        %v2891 = vpack.c.b16 %v2719, %v2715
        %v2892 = vpack.c.b16 %v2720, %v2716
        %v2893 = vpack.c.b16 %v2721, %v2717
        %v2894 = vpack.c.b16 %v2722, %v2718
        %v2895 = vpack.c.b16 %v2727, %v2723
        %v2896 = vpack.c.b16 %v2728, %v2724
        %v2897 = vpack.c.b16 %v2729, %v2725
        %v2898 = vpack.c.b16 %v2730, %v2726
        %v2899 = vpack.c.b16 %v2735, %v2731
        %v2900 = vpack.c.b16 %v2736, %v2732
        %v2901 = vpack.c.b16 %v2737, %v2733
        %v2902 = vpack.c.b16 %v2738, %v2734
        %v2903 = vpack.c.b16 %v2743, %v2739
        %v2904 = vpack.c.b16 %v2744, %v2740
        %v2905 = vpack.c.b16 %v2745, %v2741
        %v2906 = vpack.c.b16 %v2746, %v2742
        %v2907 = vpack.c.b16 %v2751, %v2747
        %v2908 = vpack.c.b16 %v2752, %v2748
        %v2909 = vpack.c.b16 %v2753, %v2749
        %v2910 = vpack.c.b16 %v2754, %v2750
        %v2911 = vpack.c.b16 %v2759, %v2755
        %v2912 = vpack.c.b16 %v2760, %v2756
        %v2913 = vpack.c.b16 %v2761, %v2757
        %v2914 = vpack.c.b16 %v2762, %v2758
        %v2915 = vpack.c.b16 %v2767, %v2763
        %v2916 = vpack.c.b16 %v2768, %v2764
        %v2917 = vpack.c.b16 %v2769, %v2765
        %v2918 = vpack.c.b16 %v2770, %v2766
        %v2919 = vpack.c.b16 %v2775, %v2771
        %v2920 = vpack.c.b16 %v2776, %v2772
        %v2921 = vpack.c.b16 %v2777, %v2773
        %v2922 = vpack.c.b16 %v2778, %v2774
        %v2923 = vpack.c.b16 %v2783, %v2779
        %v2924 = vpack.c.b16 %v2784, %v2780
        %v2925 = vpack.c.b16 %v2785, %v2781
        %v2926 = vpack.c.b16 %v2786, %v2782
        %v2927 = vpack.c.b16 %v2791, %v2787
        %v2928 = vpack.c.b16 %v2792, %v2788
        %v2929 = vpack.c.b16 %v2793, %v2789
        %v2930 = vpack.c.b16 %v2794, %v2790
        %v2931 = vpack.c.b16 %v2799, %v2795
        %v2932 = vpack.c.b16 %v2800, %v2796
        %v2933 = vpack.c.b16 %v2801, %v2797
        %v2934 = vpack.c.b16 %v2802, %v2798
        %v2935 = vpack.c.b16 %v2807, %v2803
        %v2936 = vpack.c.b16 %v2808, %v2804
        %v2937 = vpack.c.b16 %v2809, %v2805
        %v2938 = vpack.c.b16 %v2810, %v2806
        %3067 = vmatprep.subr.bf16.mxu0 %v2812
        %3068 = vmatpush1.bf16.msra.mxu0 %v2811
        %3069 = vmatprep.subr.bf16.mxu0 %v2816
        %3070 = vmatpush1.bf16.msra.mxu0 %v2815
        %3071 = vmatprep.subr.bf16.mxu0 %v2820
        %3072 = vmatpush1.bf16.msra.mxu0 %v2819
        %3073 = vmatprep.subr.bf16.mxu0 %v2824
        %3074 = vmatpush1.bf16.msra.mxu0 %v2823
        %3075 = vmatprep.subr.bf16.mxu0 %v2828
        %3076 = vmatpush1.bf16.msra.mxu0 %v2827
        %3077 = vmatprep.subr.bf16.mxu0 %v2832
        %3078 = vmatpush1.bf16.msra.mxu0 %v2831
        %3079 = vmatprep.subr.bf16.mxu0 %v2836
        %3080 = vmatpush1.bf16.msra.mxu0 %v2835
        %3081 = vmatprep.subr.bf16.mxu0 %v2840
        %3082 = vmatpush1.bf16.msra.mxu0 %v2839
        %3083 = vmatprep.subr.bf16.mxu0 %v2844
        %3084 = vmatpush1.bf16.msra.mxu0 %v2843
        %3085 = vmatprep.subr.bf16.mxu0 %v2848
        %3086 = vmatpush1.bf16.msra.mxu0 %v2847
        %3087 = vmatprep.subr.bf16.mxu0 %v2852
        %3088 = vmatpush1.bf16.msra.mxu0 %v2851
        %3089 = vmatprep.subr.bf16.mxu0 %v2856
        %3090 = vmatpush1.bf16.msra.mxu0 %v2855
        %3091 = vmatprep.subr.bf16.mxu0 %v2860
        %3092 = vmatpush1.bf16.msra.mxu0 %v2859
        %3093 = vmatprep.subr.bf16.mxu0 %v2864
        %3094 = vmatpush1.bf16.msra.mxu0 %v2863
        %3095 = vmatprep.subr.bf16.mxu0 %v2868
        %3096 = vmatpush1.bf16.msra.mxu0 %v2867
        %3097 = vmatprep.subr.bf16.mxu0 %v2872
        %3098 = vmatpush1.bf16.msra.mxu0 %v2871
        %3099 = vmatprep.mubr.bf16.mxu0 %v2274
        %3100 = vmatmul.mubr.bf16.gmra.mrb[0].mxu0 %v2273
        %v3101 = vpop.f32.mrb[0].mxu0
        %v3102 = vadd.f32 %v2410, %v3101
        %v3103 = vpop.f32.mrb[0].mxu0
        %v3104 = vadd.f32 %v2414, %v3103
        %v3105 = vpop.f32.mrb[0].mxu0
        %v3106 = vadd.f32 %v2410, %v3105
        %v3107 = vpop.f32.mrb[0].mxu0
        %v3108 = vadd.f32 %v2414, %v3107
        %3109 = vdwg.mxu0
        %3110 = vmatprep.subr.bf16.mxu0 %v2876
        %3111 = vmatpush1.bf16.msra.mxu0 %v2875
        %3112 = vmatprep.subr.bf16.mxu0 %v2880
        %3113 = vmatpush1.bf16.msra.mxu0 %v2879
        %3114 = vmatprep.subr.bf16.mxu0 %v2884
        %3115 = vmatpush1.bf16.msra.mxu0 %v2883
        %3116 = vmatprep.subr.bf16.mxu0 %v2888
        %3117 = vmatpush1.bf16.msra.mxu0 %v2887
        %3118 = vmatprep.subr.bf16.mxu0 %v2892
        %3119 = vmatpush1.bf16.msra.mxu0 %v2891
        %3120 = vmatprep.subr.bf16.mxu0 %v2896
        %3121 = vmatpush1.bf16.msra.mxu0 %v2895
        %3122 = vmatprep.subr.bf16.mxu0 %v2900
        %3123 = vmatpush1.bf16.msra.mxu0 %v2899
        %3124 = vmatprep.subr.bf16.mxu0 %v2904
        %3125 = vmatpush1.bf16.msra.mxu0 %v2903
        %3126 = vmatprep.subr.bf16.mxu0 %v2908
        %3127 = vmatpush1.bf16.msra.mxu0 %v2907
        %3128 = vmatprep.subr.bf16.mxu0 %v2912
        %3129 = vmatpush1.bf16.msra.mxu0 %v2911
        %3130 = vmatprep.subr.bf16.mxu0 %v2916
        %3131 = vmatpush1.bf16.msra.mxu0 %v2915
        %3132 = vmatprep.subr.bf16.mxu0 %v2920
        %3133 = vmatpush1.bf16.msra.mxu0 %v2919
        %3134 = vmatprep.subr.bf16.mxu0 %v2924
        %3135 = vmatpush1.bf16.msra.mxu0 %v2923
        %3136 = vmatprep.subr.bf16.mxu0 %v2928
        %3137 = vmatpush1.bf16.msra.mxu0 %v2927
        %3138 = vmatprep.subr.bf16.mxu0 %v2932
        %3139 = vmatpush1.bf16.msra.mxu0 %v2931
        %3140 = vmatprep.subr.bf16.mxu0 %v2936
        %3141 = vmatpush1.bf16.msra.mxu0 %v2935
        %3142 = vmatprep.mubr.bf16.mxu0 %v2276
        %3143 = vmatmul.mubr.bf16.gmra.mrb[0].mxu0 %v2275
        %v3144 = vpop.f32.mrb[0].mxu0
        %v3145 = vadd.f32 %v3102, %v3144
        %v3146 = vpop.f32.mrb[0].mxu0
        %v3147 = vadd.f32 %v3104, %v3146
        %v3148 = vpop.f32.mrb[0].mxu0
        %v3149 = vadd.f32 %v3106, %v3148
        %v3150 = vpop.f32.mrb[0].mxu0
        %v3151 = vadd.f32 %v3108, %v3150
        %3152 = vdwg.mxu0
        %3153 = vmatprep.subr.bf16.mxu0 %v2814
        %3154 = vmatpush1.bf16.msra.mxu0 %v2813
        %3155 = vmatprep.subr.bf16.mxu0 %v2818
        %3156 = vmatpush1.bf16.msra.mxu0 %v2817
        %3157 = vmatprep.subr.bf16.mxu0 %v2822
        %3158 = vmatpush1.bf16.msra.mxu0 %v2821
        %3159 = vmatprep.subr.bf16.mxu0 %v2826
        %3160 = vmatpush1.bf16.msra.mxu0 %v2825
        %3161 = vmatprep.subr.bf16.mxu0 %v2830
        %3162 = vmatpush1.bf16.msra.mxu0 %v2829
        %3163 = vmatprep.subr.bf16.mxu0 %v2834
        %3164 = vmatpush1.bf16.msra.mxu0 %v2833
        %3165 = vmatprep.subr.bf16.mxu0 %v2838
        %3166 = vmatpush1.bf16.msra.mxu0 %v2837
        %3167 = vmatprep.subr.bf16.mxu0 %v2842
        %3168 = vmatpush1.bf16.msra.mxu0 %v2841
        %3169 = vmatprep.subr.bf16.mxu0 %v2846
        %3170 = vmatpush1.bf16.msra.mxu0 %v2845
        %3171 = vmatprep.subr.bf16.mxu0 %v2850
        %3172 = vmatpush1.bf16.msra.mxu0 %v2849
        %3173 = vmatprep.subr.bf16.mxu0 %v2854
        %3174 = vmatpush1.bf16.msra.mxu0 %v2853
        %3175 = vmatprep.subr.bf16.mxu0 %v2858
        %3176 = vmatpush1.bf16.msra.mxu0 %v2857
        %3177 = vmatprep.subr.bf16.mxu0 %v2862
        %3178 = vmatpush1.bf16.msra.mxu0 %v2861
        %3179 = vmatprep.subr.bf16.mxu0 %v2866
        %3180 = vmatpush1.bf16.msra.mxu0 %v2865
        %3181 = vmatprep.subr.bf16.mxu0 %v2870
        %3182 = vmatpush1.bf16.msra.mxu0 %v2869
        %3183 = vmatprep.subr.bf16.mxu0 %v2874
        %3184 = vmatpush1.bf16.msra.mxu0 %v2873
        %3185 = vmatprep.mubr.bf16.mxu0 %v2274
        %3186 = vmatmul.mubr.bf16.gmra.mrb[0].mxu0 %v2273
        %v3187 = vpop.f32.mrb[0].mxu0
        %v3188 = vadd.f32 %v2418, %v3187
        %v3189 = vpop.f32.mrb[0].mxu0
        %v3190 = vadd.f32 %v2422, %v3189
        %v3191 = vpop.f32.mrb[0].mxu0
        %v3192 = vadd.f32 %v2418, %v3191
        %v3193 = vpop.f32.mrb[0].mxu0
        %v3194 = vadd.f32 %v2422, %v3193
        %3195 = vdwg.mxu0
        %3196 = vmatprep.subr.bf16.mxu0 %v2878
        %3197 = vmatpush1.bf16.msra.mxu0 %v2877
        %3198 = vmatprep.subr.bf16.mxu0 %v2882
        %3199 = vmatpush1.bf16.msra.mxu0 %v2881
        %3200 = vmatprep.subr.bf16.mxu0 %v2886
        %3201 = vmatpush1.bf16.msra.mxu0 %v2885
        %3202 = vmatprep.subr.bf16.mxu0 %v2890
        %3203 = vmatpush1.bf16.msra.mxu0 %v2889
        %3204 = vmatprep.subr.bf16.mxu0 %v2894
        %3205 = vmatpush1.bf16.msra.mxu0 %v2893
        %3206 = vmatprep.subr.bf16.mxu0 %v2898
        %3207 = vmatpush1.bf16.msra.mxu0 %v2897
        %3208 = vmatprep.subr.bf16.mxu0 %v2902
        %3209 = vmatpush1.bf16.msra.mxu0 %v2901
        %3210 = vmatprep.subr.bf16.mxu0 %v2906
        %3211 = vmatpush1.bf16.msra.mxu0 %v2905
        %3212 = vmatprep.subr.bf16.mxu0 %v2910
        %3213 = vmatpush1.bf16.msra.mxu0 %v2909
        %3214 = vmatprep.subr.bf16.mxu0 %v2914
        %3215 = vmatpush1.bf16.msra.mxu0 %v2913
        %3216 = vmatprep.subr.bf16.mxu0 %v2918
        %3217 = vmatpush1.bf16.msra.mxu0 %v2917
        %3218 = vmatprep.subr.bf16.mxu0 %v2922
        %3219 = vmatpush1.bf16.msra.mxu0 %v2921
        %3220 = vmatprep.subr.bf16.mxu0 %v2926
        %3221 = vmatpush1.bf16.msra.mxu0 %v2925
        %3222 = vmatprep.subr.bf16.mxu0 %v2930
        %3223 = vmatpush1.bf16.msra.mxu0 %v2929
        %3224 = vmatprep.subr.bf16.mxu0 %v2934
        %3225 = vmatpush1.bf16.msra.mxu0 %v2933
        %3226 = vmatprep.subr.bf16.mxu0 %v2938
        %3227 = vmatpush1.bf16.msra.mxu0 %v2937
        %3228 = vmatprep.mubr.bf16.mxu0 %v2276
        %3229 = vmatmul.mubr.bf16.gmra.mrb[0].mxu0 %v2275
        %v3230 = vpop.f32.mrb[0].mxu0
        %v3231 = vadd.f32 %v3188, %v3230
        %v3232 = vpop.f32.mrb[0].mxu0
        %v3233 = vadd.f32 %v3190, %v3232
        %v3234 = vpop.f32.mrb[0].mxu0
        %v3235 = vadd.f32 %v3192, %v3234
        %v3236 = vpop.f32.mrb[0].mxu0
        %v3237 = vadd.f32 %v3194, %v3236
        %3238 = vdwg.mxu0
        %v3239 = vmax.f32 %v3145, 0.0
        %v3240 = vmax.f32 %v3147, 0.0
        %v3241 = vmax.f32 %v3231, 0.0
        %v3242 = vmax.f32 %v3233, 0.0
        %v3243 = vmax.f32 %v3149, 0.0
        %v3244 = vmax.f32 %v3151, 0.0
        %v3245 = vmax.f32 %v3235, 0.0
        %v3246 = vmax.f32 %v3237, 0.0
        %v3247 = vpack.c.bf16 %v3243, %v3239
        %v3248 = vpack.c.bf16 %v3244, %v3240
        %v3249 = vpack.c.bf16 %v3245, %v3241
        %v3250 = vpack.c.bf16 %v3246, %v3242
        %v3251 = vld [vmem:[%s5] sm:$0xf]
        %v3252 = vld [vmem:[%s5 + $0x4] sm:$0xf]
        %v3253 = vld [vmem:[%s5 + $0x8] sm:$0xf]
        %v3254 = vld [vmem:[%s5 + $0xc] sm:$0xf]
        %v3255 = vld [vmem:[%s5 + $0x10] sm:$0xf]
        %v3256 = vld [vmem:[%s5 + $0x14] sm:$0xf]
        %v3257 = vld [vmem:[%s5 + $0x18] sm:$0xf]
        %v3258 = vld [vmem:[%s5 + $0x1c] sm:$0xf]
        %v3259 = vld [vmem:[%s5 + $0x20] sm:$0xf]
        %v3260 = vld [vmem:[%s5 + $0x24] sm:$0xf]
        %v3261 = vld [vmem:[%s5 + $0x28] sm:$0xf]
        %v3262 = vld [vmem:[%s5 + $0x2c] sm:$0xf]
        %v3263 = vld [vmem:[%s5 + $0x30] sm:$0xf]
        %v3264 = vld [vmem:[%s5 + $0x34] sm:$0xf]
        %v3265 = vld [vmem:[%s5 + $0x38] sm:$0xf]
        %v3266 = vld [vmem:[%s5 + $0x3c] sm:$0xf]
        %v3267 = vld [vmem:[%s5 + $0x40] sm:$0xf]
        %v3268 = vld [vmem:[%s5 + $0x44] sm:$0xf]
        %v3269 = vld [vmem:[%s5 + $0x48] sm:$0xf]
        %v3270 = vld [vmem:[%s5 + $0x4c] sm:$0xf]
        %v3271 = vld [vmem:[%s5 + $0x50] sm:$0xf]
        %v3272 = vld [vmem:[%s5 + $0x54] sm:$0xf]
        %v3273 = vld [vmem:[%s5 + $0x58] sm:$0xf]
        %v3274 = vld [vmem:[%s5 + $0x5c] sm:$0xf]
        %v3275 = vld [vmem:[%s5 + $0x60] sm:$0xf]
        %v3276 = vld [vmem:[%s5 + $0x64] sm:$0xf]
        %v3277 = vld [vmem:[%s5 + $0x68] sm:$0xf]
        %v3278 = vld [vmem:[%s5 + $0x6c] sm:$0xf]
        %v3279 = vld [vmem:[%s5 + $0x70] sm:$0xf]
        %v3280 = vld [vmem:[%s5 + $0x74] sm:$0xf]
        %v3281 = vld [vmem:[%s5 + $0x78] sm:$0xf]
        %v3282 = vld [vmem:[%s5 + $0x7c] sm:$0xf]
        %v3283 = vld [vmem:[%s5 + $0x80] sm:$0xf]
        %v3284 = vld [vmem:[%s5 + $0x84] sm:$0xf]
        %v3285 = vld [vmem:[%s5 + $0x88] sm:$0xf]
        %v3286 = vld [vmem:[%s5 + $0x8c] sm:$0xf]
        %v3287 = vld [vmem:[%s5 + $0x90] sm:$0xf]
        %v3288 = vld [vmem:[%s5 + $0x94] sm:$0xf]
        %v3289 = vld [vmem:[%s5 + $0x98] sm:$0xf]
        %v3290 = vld [vmem:[%s5 + $0x9c] sm:$0xf]
        %v3291 = vld [vmem:[%s5 + $0xa0] sm:$0xf]
        %v3292 = vld [vmem:[%s5 + $0xa4] sm:$0xf]
        %v3293 = vld [vmem:[%s5 + $0xa8] sm:$0xf]
        %v3294 = vld [vmem:[%s5 + $0xac] sm:$0xf]
        %v3295 = vld [vmem:[%s5 + $0xb0] sm:$0xf]
        %v3296 = vld [vmem:[%s5 + $0xb4] sm:$0xf]
        %v3297 = vld [vmem:[%s5 + $0xb8] sm:$0xf]
        %v3298 = vld [vmem:[%s5 + $0xbc] sm:$0xf]
        %v3299 = vld [vmem:[%s5 + $0xc0] sm:$0xf]
        %v3300 = vld [vmem:[%s5 + $0xc4] sm:$0xf]
        %v3301 = vld [vmem:[%s5 + $0xc8] sm:$0xf]
        %v3302 = vld [vmem:[%s5 + $0xcc] sm:$0xf]
        %v3303 = vld [vmem:[%s5 + $0xd0] sm:$0xf]
        %v3304 = vld [vmem:[%s5 + $0xd4] sm:$0xf]
        %v3305 = vld [vmem:[%s5 + $0xd8] sm:$0xf]
        %v3306 = vld [vmem:[%s5 + $0xdc] sm:$0xf]
        %v3307 = vld [vmem:[%s5 + $0xe0] sm:$0xf]
        %v3308 = vld [vmem:[%s5 + $0xe4] sm:$0xf]
        %v3309 = vld [vmem:[%s5 + $0xe8] sm:$0xf]
        %v3310 = vld [vmem:[%s5 + $0xec] sm:$0xf]
        %v3311 = vld [vmem:[%s5 + $0xf0] sm:$0xf]
        %v3312 = vld [vmem:[%s5 + $0xf4] sm:$0xf]
        %v3313 = vld [vmem:[%s5 + $0xf8] sm:$0xf]
        %v3314 = vld [vmem:[%s5 + $0xfc] sm:$0xf]
        %v3315 = vld [vmem:[%s6] sm:$0x1]
        %v3317 = vlaneseq
        %v3318 = vshrl.u32 %v3317, 7
        %v3319 = vsub.s32 0, %v3318
        %v3320 = vrot.slane %v3315, %v3319
        %v3386 = vunpack.c.l.b16 %v3251
        %v3387 = vunpack.c.l.b16 %v3252
        %v3388 = vunpack.c.l.b16 %v3253
        %v3389 = vunpack.c.l.b16 %v3254
        %v3390 = vunpack.c.l.b16 %v3255
        %v3391 = vunpack.c.l.b16 %v3256
        %v3392 = vunpack.c.l.b16 %v3257
        %v3393 = vunpack.c.l.b16 %v3258
        %v3394 = vunpack.c.l.b16 %v3259
        %v3395 = vunpack.c.l.b16 %v3260
        %v3396 = vunpack.c.l.b16 %v3261
        %v3397 = vunpack.c.l.b16 %v3262
        %v3398 = vunpack.c.l.b16 %v3263
        %v3399 = vunpack.c.l.b16 %v3264
        %v3400 = vunpack.c.l.b16 %v3265
        %v3401 = vunpack.c.l.b16 %v3266
        %v3402 = vunpack.c.l.b16 %v3267
        %v3403 = vunpack.c.l.b16 %v3268
        %v3404 = vunpack.c.l.b16 %v3269
        %v3405 = vunpack.c.l.b16 %v3270
        %v3406 = vunpack.c.l.b16 %v3271
        %v3407 = vunpack.c.l.b16 %v3272
        %v3408 = vunpack.c.l.b16 %v3273
        %v3409 = vunpack.c.l.b16 %v3274
        %v3410 = vunpack.c.l.b16 %v3275
        %v3411 = vunpack.c.l.b16 %v3276
        %v3412 = vunpack.c.l.b16 %v3277
        %v3413 = vunpack.c.l.b16 %v3278
        %v3414 = vunpack.c.l.b16 %v3279
        %v3415 = vunpack.c.l.b16 %v3280
        %v3416 = vunpack.c.l.b16 %v3281
        %v3417 = vunpack.c.l.b16 %v3282
        %v3418 = vunpack.c.l.b16 %v3283
        %v3419 = vunpack.c.l.b16 %v3284
        %v3420 = vunpack.c.l.b16 %v3285
        %v3421 = vunpack.c.l.b16 %v3286
        %v3422 = vunpack.c.l.b16 %v3287
        %v3423 = vunpack.c.l.b16 %v3288
        %v3424 = vunpack.c.l.b16 %v3289
        %v3425 = vunpack.c.l.b16 %v3290
        %v3426 = vunpack.c.l.b16 %v3291
        %v3427 = vunpack.c.l.b16 %v3292
        %v3428 = vunpack.c.l.b16 %v3293
        %v3429 = vunpack.c.l.b16 %v3294
        %v3430 = vunpack.c.l.b16 %v3295
        %v3431 = vunpack.c.l.b16 %v3296
        %v3432 = vunpack.c.l.b16 %v3297
        %v3433 = vunpack.c.l.b16 %v3298
        %v3434 = vunpack.c.l.b16 %v3299
        %v3435 = vunpack.c.l.b16 %v3300
        %v3436 = vunpack.c.l.b16 %v3301
        %v3437 = vunpack.c.l.b16 %v3302
        %v3438 = vunpack.c.l.b16 %v3303
        %v3439 = vunpack.c.l.b16 %v3304
        %v3440 = vunpack.c.l.b16 %v3305
        %v3441 = vunpack.c.l.b16 %v3306
        %v3442 = vunpack.c.l.b16 %v3307
        %v3443 = vunpack.c.l.b16 %v3308
        %v3444 = vunpack.c.l.b16 %v3309
        %v3445 = vunpack.c.l.b16 %v3310
        %v3446 = vunpack.c.l.b16 %v3311
        %v3447 = vunpack.c.l.b16 %v3312
        %v3448 = vunpack.c.l.b16 %v3313
        %v3449 = vunpack.c.l.b16 %v3314
        %v3450 = vpack.c.b16 %v3387, %v3386
        %v3451 = vpack.c.b16 %v3389, %v3388
        %v3452 = vpack.c.b16 %v3391, %v3390
        %v3453 = vpack.c.b16 %v3393, %v3392
        %v3454 = vpack.c.b16 %v3395, %v3394
        %v3455 = vpack.c.b16 %v3397, %v3396
        %v3456 = vpack.c.b16 %v3399, %v3398
        %v3457 = vpack.c.b16 %v3401, %v3400
        %v3458 = vpack.c.b16 %v3403, %v3402
        %v3459 = vpack.c.b16 %v3405, %v3404
        %v3460 = vpack.c.b16 %v3407, %v3406
        %v3461 = vpack.c.b16 %v3409, %v3408
        %v3462 = vpack.c.b16 %v3411, %v3410
        %v3463 = vpack.c.b16 %v3413, %v3412
        %v3464 = vpack.c.b16 %v3415, %v3414
        %v3465 = vpack.c.b16 %v3417, %v3416
        %v3466 = vpack.c.b16 %v3419, %v3418
        %v3467 = vpack.c.b16 %v3421, %v3420
        %v3468 = vpack.c.b16 %v3423, %v3422
        %v3469 = vpack.c.b16 %v3425, %v3424
        %v3470 = vpack.c.b16 %v3427, %v3426
        %v3471 = vpack.c.b16 %v3429, %v3428
        %v3472 = vpack.c.b16 %v3431, %v3430
        %v3473 = vpack.c.b16 %v3433, %v3432
        %v3474 = vpack.c.b16 %v3435, %v3434
        %v3475 = vpack.c.b16 %v3437, %v3436
        %v3476 = vpack.c.b16 %v3439, %v3438
        %v3477 = vpack.c.b16 %v3441, %v3440
        %v3478 = vpack.c.b16 %v3443, %v3442
        %v3479 = vpack.c.b16 %v3445, %v3444
        %v3480 = vpack.c.b16 %v3447, %v3446
        %v3481 = vpack.c.b16 %v3449, %v3448
        %3514 = vmatprep.subr.bf16.mxu0 0
        %3515 = vmatpush1.bf16.msra.mxu0 %v3450
        %3516 = vmatprep.subr.bf16.mxu0 0
        %3517 = vmatpush1.bf16.msra.mxu0 %v3451
        %3518 = vmatprep.subr.bf16.mxu0 0
        %3519 = vmatpush1.bf16.msra.mxu0 %v3452
        %3520 = vmatprep.subr.bf16.mxu0 0
        %3521 = vmatpush1.bf16.msra.mxu0 %v3453
        %3522 = vmatprep.subr.bf16.mxu0 0
        %3523 = vmatpush1.bf16.msra.mxu0 %v3454
        %3524 = vmatprep.subr.bf16.mxu0 0
        %3525 = vmatpush1.bf16.msra.mxu0 %v3455
        %3526 = vmatprep.subr.bf16.mxu0 0
        %3527 = vmatpush1.bf16.msra.mxu0 %v3456
        %3528 = vmatprep.subr.bf16.mxu0 0
        %3529 = vmatpush1.bf16.msra.mxu0 %v3457
        %3530 = vmatprep.subr.bf16.mxu0 0
        %3531 = vmatpush1.bf16.msra.mxu0 %v3458
        %3532 = vmatprep.subr.bf16.mxu0 0
        %3533 = vmatpush1.bf16.msra.mxu0 %v3459
        %3534 = vmatprep.subr.bf16.mxu0 0
        %3535 = vmatpush1.bf16.msra.mxu0 %v3460
        %3536 = vmatprep.subr.bf16.mxu0 0
        %3537 = vmatpush1.bf16.msra.mxu0 %v3461
        %3538 = vmatprep.subr.bf16.mxu0 0
        %3539 = vmatpush1.bf16.msra.mxu0 %v3462
        %3540 = vmatprep.subr.bf16.mxu0 0
        %3541 = vmatpush1.bf16.msra.mxu0 %v3463
        %3542 = vmatprep.subr.bf16.mxu0 0
        %3543 = vmatpush1.bf16.msra.mxu0 %v3464
        %3544 = vmatprep.subr.bf16.mxu0 0
        %3545 = vmatpush1.bf16.msra.mxu0 %v3465
        %3546 = vmatprep.mubr.bf16.mxu0 %v3248
        %3547 = vmatmul.mubr.bf16.gmra.mrb[0].mxu0 %v3247
        %v3548 = vpop.f32.mrb[0].mxu0
        %v3549 = vadd.f32 %v3320, %v3548
        %v3550 = vpop.f32.mrb[0].mxu0
        %v3551 = vpop.f32.mrb[0].mxu0
        %v3552 = vadd.f32 %v3320, %v3551
        %v3553 = vpop.f32.mrb[0].mxu0
        %3554 = vdwg.mxu0
        %3555 = vmatprep.subr.bf16.mxu0 0
        %3556 = vmatpush1.bf16.msra.mxu0 %v3466
        %3557 = vmatprep.subr.bf16.mxu0 0
        %3558 = vmatpush1.bf16.msra.mxu0 %v3467
        %3559 = vmatprep.subr.bf16.mxu0 0
        %3560 = vmatpush1.bf16.msra.mxu0 %v3468
        %3561 = vmatprep.subr.bf16.mxu0 0
        %3562 = vmatpush1.bf16.msra.mxu0 %v3469
        %3563 = vmatprep.subr.bf16.mxu0 0
        %3564 = vmatpush1.bf16.msra.mxu0 %v3470
        %3565 = vmatprep.subr.bf16.mxu0 0
        %3566 = vmatpush1.bf16.msra.mxu0 %v3471
        %3567 = vmatprep.subr.bf16.mxu0 0
        %3568 = vmatpush1.bf16.msra.mxu0 %v3472
        %3569 = vmatprep.subr.bf16.mxu0 0
        %3570 = vmatpush1.bf16.msra.mxu0 %v3473
        %3571 = vmatprep.subr.bf16.mxu0 0
        %3572 = vmatpush1.bf16.msra.mxu0 %v3474
        %3573 = vmatprep.subr.bf16.mxu0 0
        %3574 = vmatpush1.bf16.msra.mxu0 %v3475
        %3575 = vmatprep.subr.bf16.mxu0 0
        %3576 = vmatpush1.bf16.msra.mxu0 %v3476
        %3577 = vmatprep.subr.bf16.mxu0 0
        %3578 = vmatpush1.bf16.msra.mxu0 %v3477
        %3579 = vmatprep.subr.bf16.mxu0 0
        %3580 = vmatpush1.bf16.msra.mxu0 %v3478
        %3581 = vmatprep.subr.bf16.mxu0 0
        %3582 = vmatpush1.bf16.msra.mxu0 %v3479
        %3583 = vmatprep.subr.bf16.mxu0 0
        %3584 = vmatpush1.bf16.msra.mxu0 %v3480
        %3585 = vmatprep.subr.bf16.mxu0 0
        %3586 = vmatpush1.bf16.msra.mxu0 %v3481
        %3587 = vmatprep.mubr.bf16.mxu0 %v3250
        %3588 = vmatmul.mubr.bf16.gmra.mrb[0].mxu0 %v3249
        %v3589 = vpop.f32.mrb[0].mxu0
        %v3590 = vadd.f32 %v3549, %v3589
        %v3591 = vpop.f32.mrb[0].mxu0
        %v3592 = vpop.f32.mrb[0].mxu0
        %v3593 = vadd.f32 %v3552, %v3592
        %v3594 = vpop.f32.mrb[0].mxu0
        %3595 = vdwg.mxu0
        %v3596 = vpack.c.bf16 %v3593, %v3590
        %v3598 = vunpack.c.l.b16 %v3596
        %v3599 = vunpack.c.h.b16 %v3596
        %v3600 = vpack.c.b16 %v3598, %v3598
        %v3601 = vpack.c.b16 %v3599, %v3599
        %3604 = vst [vmem:[%s315] sm:$0xf] %v3600
        %3605 = vst [vmem:[%s315 + $0x4] sm:$0xf] %v3601
        %s3606 = sand.u32 %s180, 1
        %s3607 = sand.u32 %s180, 1
        %s3608 = smul.addr %s3607, 8
        %s3609 = scalar_lea.vmem [#allocation6], %s3608
        // Predicated region
        $region57: #{_lambda_.1} parent=47 // pred_check
          %p3610 = pneg %p190
        $region58: #{_lambda_.1} parent=47 // pred_check_branch
          %3612 = sbr.rel (%p3610) target = $region60
        $region59: #{_lambda_.1} parent=47 // pred_region
          %s3613 = smul.u32 2, %s20
          %s3614 = ssub.s32 3, %s3613
          %p3615 = scmp.lt.s32.totalorder %s3614, 2
          %s3616 = scalar_select %p3615, %s3614, 2
          %s3617 = smul.u32 64, %s3616
          %p3618 = scmp.ne.s32.totalorder 0, %s3617
          %s3619 = smul.addr %s3613, 4
          %s3620 = scalar_lea.vmem %s7, %s3619
          // Predicated region
          $region61: #{_lambda_.1} parent=59 // pred_check
            %p3621 = pneg %p3618
          $region62: #{_lambda_.1} parent=59 // pred_check_branch
            %3623 = sbr.rel (%p3621) target = $region64
          $region63: #{_lambda_.1} parent=59 // pred_region
            // Predicated region
            $region65: #{_lambda_.1} parent=63 // pred_check
              _
            $region66: #{_lambda_.1} parent=63 // pred_check_branch
              %3625 = sbr.rel target = $region68
            $region67: #{_lambda_.1} parent=63 // pred_region
              // Predicated region
              $region87: #{_lambda_.1} parent=67 // pred_check
                _
              $region88: #{_lambda_.1} parent=67 // pred_check_branch
                %3676 = sbr.rel (0) target = $region90
              $region89: #{_lambda_.1} parent=67 // pred_region
                %s3678 = sshrl.u32 %s3616, 1
                // While loop
                $region91: #{_lambda_.1} parent=89 // loop_pre_header
                  _
                $region92: #{_lambda_.1} parent=89 // loop_header
                  %s3680 = sphi 0, %s3682
                  %p3681 = scmp.ge.s32.totalorder %s3680, %s3678
                  %s3685 = sphi 0, %s3694
                  %s3686 = sphi %s3609, %s3697
                  %s3687 = sphi %s3620, %s3698
                $region93: #{_lambda_.1} parent=89 // loop_header_branch
                  %3684 = sbr.rel (%p3681) target = $region97
                $region94: #{_lambda_.1} parent=89 // loop_body
                  %v3688 = vld [vmem:[%s3686] sm:$0xf]
                  %3689 = vst [vmem:[%s3687] sm:$0xf] %v3688
                  %v3690 = vld [vmem:[%s3686 + $0x4] sm:$0xf]
                  %3691 = vst [vmem:[%s3687 + $0x4] sm:$0xf] %v3690
                  %s3692 = sadd.s32 1, %s3685
                  %p3693 = scmp.ge.s32.totalorder %s3692, %s3678
                  %s3694 = scalar_select %p3693, 0, %s3692
                  %s3695 = smul.u32 %s3694, 8
                  %s3696 = smul.u32 %s3694, 8
                  %s3697 = scalar_lea.vmem %s3609, %s3695 [#allocation6]
                  %s3698 = scalar_lea.vmem %s3620, %s3696
                $region95: #{_lambda_.1} parent=89 // loop_footer
                  %s3682 = sadd.s32 %s3680, 1
                $region96: #{_lambda_.1} parent=89 // loop_footer_branch
                  %3679 = sbr.rel target = $region92
                $region97: #{_lambda_.1} parent=89 // loop_exit
                  _
                %s3699 = sshrl.u32 %s3616, 1
                %s3700 = sand.u32 %s3616, 1
                %s3701 = smul.u32 %s3699, 2
                %s3702 = smul.u32 4, %s3701
                %s3703 = scalar_lea.vmem %s3609, %s3702 [#allocation6]
                %s3704 = smul.u32 4, %s3701
                %s3705 = scalar_lea.vmem %s3620, %s3704
                // While loop
                $region98: #{_lambda_.1} parent=89 // loop_pre_header
                  _
                $region99: #{_lambda_.1} parent=89 // loop_header
                  %s3707 = sphi 0, %s3709
                  %p3708 = scmp.ge.s32.totalorder %s3707, %s3700
                  %s3712 = sphi 0, %s3719
                  %s3713 = sphi %s3703, %s3722
                  %s3714 = sphi %s3705, %s3723
                $region100: #{_lambda_.1} parent=89 // loop_header_branch
                  %3711 = sbr.rel (%p3708) target = $region104
                $region101: #{_lambda_.1} parent=89 // loop_body
                  %v3715 = vld [vmem:[%s3713] sm:$0xf]
                  %3716 = vst [vmem:[%s3714] sm:$0xf] %v3715
                  %s3717 = sadd.s32 1, %s3712
                  %p3718 = scmp.ge.s32.totalorder %s3717, %s3700
                  %s3719 = scalar_select %p3718, 0, %s3717
                  %s3720 = smul.u32 %s3719, 4
                  %s3721 = smul.u32 %s3719, 4
                  %s3722 = scalar_lea.vmem %s3703, %s3720 [#allocation6]
                  %s3723 = scalar_lea.vmem %s3705, %s3721
                $region102: #{_lambda_.1} parent=89 // loop_footer
                  %s3709 = sadd.s32 %s3707, 1
                $region103: #{_lambda_.1} parent=89 // loop_footer_branch
                  %3706 = sbr.rel target = $region99
                $region104: #{_lambda_.1} parent=89 // loop_exit
                  _
              $region90: #{_lambda_.1} parent=67 // pred_fallthru
                _
            $region68: #{_lambda_.1} parent=63 // pred_fallthru
              _
            // Predicated region
            $region69: #{_lambda_.1} parent=63 // pred_check
              _
            $region70: #{_lambda_.1} parent=63 // pred_check_branch
              %3627 = sbr.rel (0) target = $region72
            $region71: #{_lambda_.1} parent=63 // pred_region
              %s3629 = sshrl.u32 %s3616, 1
              // While loop
              $region73: #{_lambda_.1} parent=71 // loop_pre_header
                _
              $region74: #{_lambda_.1} parent=71 // loop_header
                %s3631 = sphi 0, %s3633
                %p3632 = scmp.ge.s32.totalorder %s3631, %s3629
                %s3636 = sphi 0, %s3645
                %s3637 = sphi %s3609, %s3648
                %s3638 = sphi %s3620, %s3649
              $region75: #{_lambda_.1} parent=71 // loop_header_branch
                %3635 = sbr.rel (%p3632) target = $region79
              $region76: #{_lambda_.1} parent=71 // loop_body
                %v3639 = vld [vmem:[%s3637] sm:$0xf]
                %3640 = vst [vmem:[%s3638] sm:$0xf] %v3639
                %v3641 = vld [vmem:[%s3637 + $0x4] sm:$0xf]
                %3642 = vst [vmem:[%s3638 + $0x4] sm:$0xf] %v3641
                %s3643 = sadd.s32 1, %s3636
                %p3644 = scmp.ge.s32.totalorder %s3643, %s3629
                %s3645 = scalar_select %p3644, 0, %s3643
                %s3646 = smul.u32 %s3645, 8
                %s3647 = smul.u32 %s3645, 8
                %s3648 = scalar_lea.vmem %s3609, %s3646 [#allocation6]
                %s3649 = scalar_lea.vmem %s3620, %s3647
              $region77: #{_lambda_.1} parent=71 // loop_footer
                %s3633 = sadd.s32 %s3631, 1
              $region78: #{_lambda_.1} parent=71 // loop_footer_branch
                %3630 = sbr.rel target = $region74
              $region79: #{_lambda_.1} parent=71 // loop_exit
                _
              %s3650 = sshrl.u32 %s3616, 1
              %s3651 = sand.u32 %s3616, 1
              %s3652 = smul.u32 %s3650, 2
              %s3653 = smul.u32 4, %s3652
              %s3654 = scalar_lea.vmem %s3609, %s3653 [#allocation6]
              %s3655 = smul.u32 4, %s3652
              %s3656 = scalar_lea.vmem %s3620, %s3655
              // While loop
              $region80: #{_lambda_.1} parent=71 // loop_pre_header
                _
              $region81: #{_lambda_.1} parent=71 // loop_header
                %s3658 = sphi 0, %s3660
                %p3659 = scmp.ge.s32.totalorder %s3658, %s3651
                %s3663 = sphi 0, %s3670
                %s3664 = sphi %s3654, %s3673
                %s3665 = sphi %s3656, %s3674
              $region82: #{_lambda_.1} parent=71 // loop_header_branch
                %3662 = sbr.rel (%p3659) target = $region86
              $region83: #{_lambda_.1} parent=71 // loop_body
                %v3666 = vld [vmem:[%s3664] sm:$0xf]
                %3667 = vst [vmem:[%s3665] sm:$0xf] %v3666
                %s3668 = sadd.s32 1, %s3663
                %p3669 = scmp.ge.s32.totalorder %s3668, %s3651
                %s3670 = scalar_select %p3669, 0, %s3668
                %s3671 = smul.u32 %s3670, 4
                %s3672 = smul.u32 %s3670, 4
                %s3673 = scalar_lea.vmem %s3654, %s3671 [#allocation6]
                %s3674 = scalar_lea.vmem %s3656, %s3672
              $region84: #{_lambda_.1} parent=71 // loop_footer
                %s3660 = sadd.s32 %s3658, 1
              $region85: #{_lambda_.1} parent=71 // loop_footer_branch
                %3657 = sbr.rel target = $region81
              $region86: #{_lambda_.1} parent=71 // loop_exit
                _
            $region72: #{_lambda_.1} parent=63 // pred_fallthru
              _
          $region64: #{_lambda_.1} parent=59 // pred_fallthru
            _
          %3724 = vnop
        $region60: #{_lambda_.1} parent=47 // pred_fallthru
          _
      $region48: #{_lambda_.1} parent=5 // pred_fallthru
        _
      %p3725 = scmp.le.s32.totalorder 2, %s15
      // Predicated region
      $region105: #{_lambda_.1} parent=5 // pred_check
        %p3726 = pneg %p3725
      $region106: #{_lambda_.1} parent=5 // pred_check_branch
        %3728 = sbr.rel (%p3726) target = $region108
      $region107: #{_lambda_.1} parent=5 // pred_region
        %s3729 = ssub.s32 %s15, 2
        // Predicated region
        $region109: #{_lambda_.1} parent=107 // pred_check
          %p3730 = pneg %p196
        $region110: #{_lambda_.1} parent=107 // pred_check_branch
          %3732 = sbr.rel (%p3730) target = $region112
        $region111: #{_lambda_.1} parent=107 // pred_region
          %s3733 = sand.u32 %s181, 1
          %s3734 = sand.u32 %s181, 1
          %s3735 = smul.addr %s3734, 8
          %s3736 = scalar_lea.vmem [#allocation6], %s3735
        $region112: #{_lambda_.1} parent=107 // pred_fallthru
          _
      $region108: #{_lambda_.1} parent=5 // pred_fallthru
        _
    $region6: #{_lambda_.1} parent=1 // loop_footer
      %s19 = sadd.s32 1, %s15
    $region7: #{_lambda_.1} parent=1 // loop_footer_branch
      %14 = sbr.rel target = $region3
    $region8: #{_lambda_.1} parent=1 // loop_exit
      _
    %3737 = vsyncpa [#allocation3], 1
    %s3738 = scalar_lea.sflag [#allocation3], 1
    %3739 = vsyncpa %s3738, 1
    %3740 = vsyncpa [#allocation5], 1

</llo_original>
